<compile_context>
chip_gen: v5e
topology: v5e:2x2
jax: 0.10.0
libtpu: 0.0.40
codegen_flags: <defaults>
</compile_context>

<pallas_src>
import functools

import jax
import jax.numpy as jnp
from jax.experimental import pallas as pl
from jax.experimental.pallas import tpu as pltpu

EPS = 1e-5


def _block_kernel(ext_ref, mask_ref, w1_ref, g1_ref, b1_ref,
                  w2_ref, g2_ref, b2_ref, out_ref, ext2_ref,
                  *, C, L, P, Wp, inv_m):
    """Fully fused residual block in channels-first, lane-dense layout.

    ext_ref  : (C, 2P+L)  zero-padded input, flattened to (C, N*Hp*Wp) and
                          embedded at lane offset P (guard band so every conv
                          tap is a static, in-bounds lane-window slice).
    mask_ref : (1, L)     1.0 at interior (real) pixels, 0.0 on the pad ring.
    w*_ref   : (9, C, C)  conv weights, tap-major, each tap as (C_out, C_in).
    g*/b*    : (C, 1)     BN gamma / beta.
    out_ref  : (C, L)     output in padded-flat layout (pad lanes are junk and
                          are sliced away by the wrapper).
    ext2_ref : (C, 2P+L)  VMEM scratch: padded stage-1 activation.
    """

    def conv3x3(src_ref, w_ref):
        # 3x3 conv as 9 shifted (C,C)@(C,L) matmuls; lane dim stays large.
        acc = jnp.zeros((C, L), jnp.float32)
        for k in range(9):
            dy, dx = k // 3, k % 3
            s = (dy - 1) * Wp + (dx - 1)              # static lane shift
            patch = src_ref[:, P + s: P + s + L]      # static, always in-bounds
            acc = acc + jnp.dot(w_ref[k], patch,
                                preferred_element_type=jnp.float32)
        return acc

    def batch_norm(acc, g, b, mask):
        # Training-mode BatchNorm2d: per-channel mean / biased variance over
        # the N*H*W interior pixels (mask excludes the padding lanes).
        # Conv bias is omitted: a per-channel constant added before BN is
        # exactly cancelled by the batch-mean subtraction.
        mean = jnp.sum(acc * mask, axis=-1, keepdims=True) * inv_m
        d = acc - mean
        var = jnp.sum(d * d * mask, axis=-1, keepdims=True) * inv_m
        return d * jax.lax.rsqrt(var + EPS) * g + b

    mask = mask_ref[...]                              # (1, L)

    # Stage 1: conv1 -> BN1 -> ReLU (kept entirely on-chip).
    acc1 = conv3x3(ext_ref, w1_ref)
    h1 = jnp.maximum(batch_norm(acc1, g1_ref[...], b1_ref[...], mask), 0.0)
    h1 = h1 * mask                                    # re-zero the padding ring

    # Stage-1 output becomes stage-2's zero-padded input, via VMEM scratch
    # (no HBM write/read of the intermediate, no separate XLA pad op).
    zeros_end = jnp.zeros((C, P), jnp.float32)
    ext2_ref[:, :P] = zeros_end
    ext2_ref[:, P + L:] = zeros_end
    ext2_ref[:, P:P + L] = h1

    # Stage 2: conv2 -> BN2 -> +x -> ReLU.
    acc2 = conv3x3(ext2_ref, w2_ref)
    res = ext_ref[:, P:P + L]                         # equals x at interior lanes
    y = batch_norm(acc2, g2_ref[...], b2_ref[...], mask) + res
    out_ref[...] = jnp.maximum(y, 0.0).astype(out_ref.dtype)


def block_forward(x_nchw, params):
    """Residual Block forward. Input / output are NCHW like the PyTorch module."""
    N, C, H, W = x_nchw.shape
    Hp, Wp = H + 2, W + 2
    L = N * Hp * Wp
    M = N * H * W
    # Lane-aligned guard band so every tap slice start is >= 0 and <= 2P+L-L.
    P = max(128, ((Wp + 1 + 127) // 128) * 128)

    # Channels-first, spatially zero-padded, flattened lane-dense, guard-banded.
    xc = jnp.transpose(x_nchw, (1, 0, 2, 3)).astype(jnp.float32)   # (C,N,H,W)
    xp = jnp.pad(xc, ((0, 0), (0, 0), (1, 1), (1, 1)))             # (C,N,Hp,Wp)
    ext = jnp.pad(xp.reshape(C, L), ((0, 0), (P, P)))              # (C,2P+L)

    # Interior mask: 1 at real pixels, 0 on the zero-padding ring.
    hh = jnp.arange(Hp)
    ww = jnp.arange(Wp)
    m2d = ((hh >= 1) & (hh <= H))[:, None] & ((ww >= 1) & (ww <= W))[None, :]
    mask = jnp.broadcast_to(m2d[None], (N, Hp, Wp)).reshape(1, L)
    mask = mask.astype(jnp.float32)

    def prep_w(w_hwio):  # HWIO (3,3,Cin,Cout) -> tap-major (9, Cout, Cin)
        return jnp.transpose(w_hwio, (0, 1, 3, 2)).reshape(9, C, C)

    col = lambda v: v.reshape(C, 1)

    # Whole-array-in-VMEM guard (single-shot kernel; BN needs global stats).
    vmem_bytes = 4 * (2 * C * (L + 2 * P) + C * L + L + 2 * 9 * C * C + 4 * C)
    if vmem_bytes > 24 * 1024 * 1024:
        # TODO(synk): band-tile over N/H with two-pass sum/sumsq BN stats.
        raise ValueError(f"Block too large for single-shot VMEM kernel: "
                         f"{vmem_bytes} bytes")

    kernel = functools.partial(_block_kernel, C=C, L=L, P=P, Wp=Wp, inv_m=1.0 / M)
    vmem = pl.BlockSpec(memory_space=pltpu.MemorySpace.VMEM)
    out_flat = pl.pallas_call(
        kernel,
        out_shape=jax.ShapeDtypeStruct((C, L), jnp.float32),
        in_specs=[vmem] * 8,
        out_specs=vmem,
        scratch_shapes=[pltpu.VMEM((C, L + 2 * P), jnp.float32)],
        compiler_params=pltpu.CompilerParams(vmem_limit_bytes=32 * 1024 * 1024),
    )(ext, mask,
      prep_w(params["w1"]), col(params["g1"]), col(params["beta1"]),
      prep_w(params["w2"]), col(params["g2"]), col(params["beta2"]))

    out = out_flat.reshape(C, N, Hp, Wp)[:, :, 1:H + 1, 1:W + 1]
    return jnp.transpose(out, (1, 0, 2, 3))                        # -> NCHW


def init_params(key, C):
    """Deterministic synthetic parameters (shapes match nn.Conv2d / BatchNorm2d).
    Conv weights are kept in HWIO; the PyTorch OIHW tensor would be
    w_oihw.transpose(2, 3, 1, 0). Conv biases are kept for the reference but
    are mathematically cancelled by training-mode BN, so the kernel skips them."""
    k0, k1, k2, k3 = jax.random.split(key, 4)
    fan_in = C * 3 * 3
    bound = (1.0 / fan_in) ** 0.5
    return dict(
        w1=jax.random.uniform(k0, (3, 3, C, C), jnp.float32, -bound, bound),
        b1=jax.random.uniform(k1, (C,), jnp.float32, -bound, bound),
        g1=jnp.ones((C,), jnp.float32),
        beta1=jnp.zeros((C,), jnp.float32),
        w2=jax.random.uniform(k2, (3, 3, C, C), jnp.float32, -bound, bound),
        b2=jax.random.uniform(k3, (C,), jnp.float32, -bound, bound),
        g2=jnp.ones((C,), jnp.float32),
        beta2=jnp.zeros((C,), jnp.float32),
    )


def _reference(x_nchw, p):
    """Pure-JAX reference with identical semantics (includes the conv biases)."""
    x = jnp.transpose(x_nchw, (0, 2, 3, 1)).astype(jnp.float32)

    def cbr(xin, res, w, b, g, be):
        y = jax.lax.conv_general_dilated(
            xin, w, window_strides=(1, 1), padding=((1, 1), (1, 1)),
            dimension_numbers=("NHWC", "HWIO", "NHWC")) + b
        mean = y.mean(axis=(0, 1, 2), keepdims=True)
        var = jnp.mean((y - mean) ** 2, axis=(0, 1, 2), keepdims=True)
        y = (y - mean) * jax.lax.rsqrt(var + EPS) * g + be
        return jnp.maximum(y + res, 0.0)

    h = cbr(x, jnp.zeros_like(x), p["w1"], p["b1"], p["g1"], p["beta1"])
    o = cbr(h, x, p["w2"], p["b2"], p["g2"], p["beta2"])
    return jnp.transpose(o, (0, 3, 1, 2))


if __name__ == "__main__":
    key = jax.random.PRNGKey(0)
    kx, kp = jax.random.split(key)

    N, C, H, W = 2, 4, 16, 16            # NCHW, like the PyTorch module
    x = jax.random.normal(kx, (N, C, H, W), jnp.float32)
    params = init_params(kp, C)

    out = jax.jit(block_forward)(x, params)
    out = jax.block_until_ready(out)

    ref = _reference(x, params)
    assert out.shape == (N, C, H, W), out.shape
    assert jnp.allclose(out, ref, atol=1e-3, rtol=1e-3), \
        float(jnp.max(jnp.abs(out - ref)))

    print("KERNEL_OK")
</pallas_src>

<mosaic_0001>
module attributes {stable_mosaic.version = 11 : i64} {
  func.func @_block_kernel(%arg0: memref<4x904xf32, #tpu.memory_space<vmem>>, %arg1: memref<1x648xf32, #tpu.memory_space<vmem>>, %arg2: memref<9x4x4xf32, #tpu.memory_space<vmem>>, %arg3: memref<4x1xf32, #tpu.memory_space<vmem>>, %arg4: memref<4x1xf32, #tpu.memory_space<vmem>>, %arg5: memref<9x4x4xf32, #tpu.memory_space<vmem>>, %arg6: memref<4x1xf32, #tpu.memory_space<vmem>>, %arg7: memref<4x1xf32, #tpu.memory_space<vmem>>, %arg8: memref<4x648xf32, #tpu.memory_space<vmem>>, %arg9: memref<4x904xf32, #tpu.memory_space<vmem>>) attributes {dimension_semantics = [], scalar_prefetch = 0 : i64, scratch_operands = 1 : i64, tpu.core_type = #tpu.core_type<tc>} {
    %c0 = arith.constant 0 : index
    %c0_0 = arith.constant 0 : index
    %0 = vector.load %arg1[%c0, %c0_0] : memref<1x648xf32, #tpu.memory_space<vmem>>, vector<1x648xf32>
    %cst = arith.constant 0.000000e+00 : f32
    %1 = vector.broadcast %cst : f32 to vector<4x648xf32>
    %c0_1 = arith.constant 0 : index
    %c109 = arith.constant 109 : index
    %2 = vector.load %arg0[%c0_1, %c109] : memref<4x904xf32, #tpu.memory_space<vmem>>, vector<4x648xf32>
    %c0_2 = arith.constant 0 : index
    %c0_3 = arith.constant 0 : index
    %c0_4 = arith.constant 0 : index
    %3 = vector.load %arg2[%c0_2, %c0_3, %c0_4] : memref<9x4x4xf32, #tpu.memory_space<vmem>>, vector<1x4x4xf32>
    %4 = vector.shape_cast %3 : vector<1x4x4xf32> to vector<4x4xf32>
    %cst_5 = arith.constant dense<0.000000e+00> : vector<4x648xf32>
    %5 = tpu.matmul %4, %2, %cst_5 {dimension_numbers = #tpu.dot_dimension_numbers<[1], [0], [0], [1], [0, 0, 1, 1], [], []>} : vector<4x4xf32>, vector<4x648xf32>, vector<4x648xf32> -> vector<4x648xf32>
    %6 = arith.addf %1, %5 : vector<4x648xf32>
    %c0_6 = arith.constant 0 : index
    %c110 = arith.constant 110 : index
    %7 = vector.load %arg0[%c0_6, %c110] : memref<4x904xf32, #tpu.memory_space<vmem>>, vector<4x648xf32>
    %c1 = arith.constant 1 : index
    %c0_7 = arith.constant 0 : index
    %c0_8 = arith.constant 0 : index
    %8 = vector.load %arg2[%c1, %c0_7, %c0_8] : memref<9x4x4xf32, #tpu.memory_space<vmem>>, vector<1x4x4xf32>
    %9 = vector.shape_cast %8 : vector<1x4x4xf32> to vector<4x4xf32>
    %cst_9 = arith.constant dense<0.000000e+00> : vector<4x648xf32>
    %10 = tpu.matmul %9, %7, %cst_9 {dimension_numbers = #tpu.dot_dimension_numbers<[1], [0], [0], [1], [0, 0, 1, 1], [], []>} : vector<4x4xf32>, vector<4x648xf32>, vector<4x648xf32> -> vector<4x648xf32>
    %11 = arith.addf %6, %10 : vector<4x648xf32>
    %c0_10 = arith.constant 0 : index
    %c111 = arith.constant 111 : index
    %12 = vector.load %arg0[%c0_10, %c111] : memref<4x904xf32, #tpu.memory_space<vmem>>, vector<4x648xf32>
    %c2 = arith.constant 2 : index
    %c0_11 = arith.constant 0 : index
    %c0_12 = arith.constant 0 : index
    %13 = vector.load %arg2[%c2, %c0_11, %c0_12] : memref<9x4x4xf32, #tpu.memory_space<vmem>>, vector<1x4x4xf32>
    %14 = vector.shape_cast %13 : vector<1x4x4xf32> to vector<4x4xf32>
    %cst_13 = arith.constant dense<0.000000e+00> : vector<4x648xf32>
    %15 = tpu.matmul %14, %12, %cst_13 {dimension_numbers = #tpu.dot_dimension_numbers<[1], [0], [0], [1], [0, 0, 1, 1], [], []>} : vector<4x4xf32>, vector<4x648xf32>, vector<4x648xf32> -> vector<4x648xf32>
    %16 = arith.addf %11, %15 : vector<4x648xf32>
    %c0_14 = arith.constant 0 : index
    %c127 = arith.constant 127 : index
    %17 = vector.load %arg0[%c0_14, %c127] : memref<4x904xf32, #tpu.memory_space<vmem>>, vector<4x648xf32>
    %c3 = arith.constant 3 : index
    %c0_15 = arith.constant 0 : index
    %c0_16 = arith.constant 0 : index
    %18 = vector.load %arg2[%c3, %c0_15, %c0_16] : memref<9x4x4xf32, #tpu.memory_space<vmem>>, vector<1x4x4xf32>
    %19 = vector.shape_cast %18 : vector<1x4x4xf32> to vector<4x4xf32>
    %cst_17 = arith.constant dense<0.000000e+00> : vector<4x648xf32>
    %20 = tpu.matmul %19, %17, %cst_17 {dimension_numbers = #tpu.dot_dimension_numbers<[1], [0], [0], [1], [0, 0, 1, 1], [], []>} : vector<4x4xf32>, vector<4x648xf32>, vector<4x648xf32> -> vector<4x648xf32>
    %21 = arith.addf %16, %20 : vector<4x648xf32>
    %c0_18 = arith.constant 0 : index
    %c128 = arith.constant 128 : index
    %22 = vector.load %arg0[%c0_18, %c128] : memref<4x904xf32, #tpu.memory_space<vmem>>, vector<4x648xf32>
    %c4 = arith.constant 4 : index
    %c0_19 = arith.constant 0 : index
    %c0_20 = arith.constant 0 : index
    %23 = vector.load %arg2[%c4, %c0_19, %c0_20] : memref<9x4x4xf32, #tpu.memory_space<vmem>>, vector<1x4x4xf32>
    %24 = vector.shape_cast %23 : vector<1x4x4xf32> to vector<4x4xf32>
    %cst_21 = arith.constant dense<0.000000e+00> : vector<4x648xf32>
    %25 = tpu.matmul %24, %22, %cst_21 {dimension_numbers = #tpu.dot_dimension_numbers<[1], [0], [0], [1], [0, 0, 1, 1], [], []>} : vector<4x4xf32>, vector<4x648xf32>, vector<4x648xf32> -> vector<4x648xf32>
    %26 = arith.addf %21, %25 : vector<4x648xf32>
    %c0_22 = arith.constant 0 : index
    %c129 = arith.constant 129 : index
    %27 = vector.load %arg0[%c0_22, %c129] : memref<4x904xf32, #tpu.memory_space<vmem>>, vector<4x648xf32>
    %c5 = arith.constant 5 : index
    %c0_23 = arith.constant 0 : index
    %c0_24 = arith.constant 0 : index
    %28 = vector.load %arg2[%c5, %c0_23, %c0_24] : memref<9x4x4xf32, #tpu.memory_space<vmem>>, vector<1x4x4xf32>
    %29 = vector.shape_cast %28 : vector<1x4x4xf32> to vector<4x4xf32>
    %cst_25 = arith.constant dense<0.000000e+00> : vector<4x648xf32>
    %30 = tpu.matmul %29, %27, %cst_25 {dimension_numbers = #tpu.dot_dimension_numbers<[1], [0], [0], [1], [0, 0, 1, 1], [], []>} : vector<4x4xf32>, vector<4x648xf32>, vector<4x648xf32> -> vector<4x648xf32>
    %31 = arith.addf %26, %30 : vector<4x648xf32>
    %c0_26 = arith.constant 0 : index
    %c145 = arith.constant 145 : index
    %32 = vector.load %arg0[%c0_26, %c145] : memref<4x904xf32, #tpu.memory_space<vmem>>, vector<4x648xf32>
    %c6 = arith.constant 6 : index
    %c0_27 = arith.constant 0 : index
    %c0_28 = arith.constant 0 : index
    %33 = vector.load %arg2[%c6, %c0_27, %c0_28] : memref<9x4x4xf32, #tpu.memory_space<vmem>>, vector<1x4x4xf32>
    %34 = vector.shape_cast %33 : vector<1x4x4xf32> to vector<4x4xf32>
    %cst_29 = arith.constant dense<0.000000e+00> : vector<4x648xf32>
    %35 = tpu.matmul %34, %32, %cst_29 {dimension_numbers = #tpu.dot_dimension_numbers<[1], [0], [0], [1], [0, 0, 1, 1], [], []>} : vector<4x4xf32>, vector<4x648xf32>, vector<4x648xf32> -> vector<4x648xf32>
    %36 = arith.addf %31, %35 : vector<4x648xf32>
    %c0_30 = arith.constant 0 : index
    %c146 = arith.constant 146 : index
    %37 = vector.load %arg0[%c0_30, %c146] : memref<4x904xf32, #tpu.memory_space<vmem>>, vector<4x648xf32>
    %c7 = arith.constant 7 : index
    %c0_31 = arith.constant 0 : index
    %c0_32 = arith.constant 0 : index
    %38 = vector.load %arg2[%c7, %c0_31, %c0_32] : memref<9x4x4xf32, #tpu.memory_space<vmem>>, vector<1x4x4xf32>
    %39 = vector.shape_cast %38 : vector<1x4x4xf32> to vector<4x4xf32>
    %cst_33 = arith.constant dense<0.000000e+00> : vector<4x648xf32>
    %40 = tpu.matmul %39, %37, %cst_33 {dimension_numbers = #tpu.dot_dimension_numbers<[1], [0], [0], [1], [0, 0, 1, 1], [], []>} : vector<4x4xf32>, vector<4x648xf32>, vector<4x648xf32> -> vector<4x648xf32>
    %41 = arith.addf %36, %40 : vector<4x648xf32>
    %c0_34 = arith.constant 0 : index
    %c147 = arith.constant 147 : index
    %42 = vector.load %arg0[%c0_34, %c147] : memref<4x904xf32, #tpu.memory_space<vmem>>, vector<4x648xf32>
    %c8 = arith.constant 8 : index
    %c0_35 = arith.constant 0 : index
    %c0_36 = arith.constant 0 : index
    %43 = vector.load %arg2[%c8, %c0_35, %c0_36] : memref<9x4x4xf32, #tpu.memory_space<vmem>>, vector<1x4x4xf32>
    %44 = vector.shape_cast %43 : vector<1x4x4xf32> to vector<4x4xf32>
    %cst_37 = arith.constant dense<0.000000e+00> : vector<4x648xf32>
    %45 = tpu.matmul %44, %42, %cst_37 {dimension_numbers = #tpu.dot_dimension_numbers<[1], [0], [0], [1], [0, 0, 1, 1], [], []>} : vector<4x4xf32>, vector<4x648xf32>, vector<4x648xf32> -> vector<4x648xf32>
    %46 = arith.addf %41, %45 : vector<4x648xf32>
    %c0_38 = arith.constant 0 : index
    %c0_39 = arith.constant 0 : index
    %47 = vector.load %arg3[%c0_38, %c0_39] : memref<4x1xf32, #tpu.memory_space<vmem>>, vector<4x1xf32>
    %c0_40 = arith.constant 0 : index
    %c0_41 = arith.constant 0 : index
    %48 = vector.load %arg4[%c0_40, %c0_41] : memref<4x1xf32, #tpu.memory_space<vmem>>, vector<4x1xf32>
    %49 = vector.broadcast %0 : vector<1x648xf32> to vector<4x648xf32>
    %50 = arith.mulf %46, %49 : vector<4x648xf32>
    %cst_42 = arith.constant dense<0.000000e+00> : vector<4xf32>
    %51 = vector.multi_reduction <add>, %50, %cst_42 [1] : vector<4x648xf32> to vector<4xf32>
    %52 = vector.shape_cast %51 : vector<4xf32> to vector<4x1xf32>
    %cst_43 = arith.constant 0.001953125 : f32
    %53 = vector.broadcast %cst_43 : f32 to vector<4x1xf32>
    %54 = arith.mulf %52, %53 : vector<4x1xf32>
    %55 = vector.broadcast %54 : vector<4x1xf32> to vector<4x648xf32>
    %56 = arith.subf %46, %55 : vector<4x648xf32>
    %57 = arith.mulf %56, %56 : vector<4x648xf32>
    %58 = vector.broadcast %0 : vector<1x648xf32> to vector<4x648xf32>
    %59 = arith.mulf %57, %58 : vector<4x648xf32>
    %cst_44 = arith.constant dense<0.000000e+00> : vector<4xf32>
    %60 = vector.multi_reduction <add>, %59, %cst_44 [1] : vector<4x648xf32> to vector<4xf32>
    %61 = vector.shape_cast %60 : vector<4xf32> to vector<4x1xf32>
    %cst_45 = arith.constant 0.001953125 : f32
    %62 = vector.broadcast %cst_45 : f32 to vector<4x1xf32>
    %63 = arith.mulf %61, %62 : vector<4x1xf32>
    %cst_46 = arith.constant 9.99999974E-6 : f32
    %64 = vector.broadcast %cst_46 : f32 to vector<4x1xf32>
    %65 = arith.addf %63, %64 : vector<4x1xf32>
    %66 = math.rsqrt %65 : vector<4x1xf32>
    %67 = vector.broadcast %66 : vector<4x1xf32> to vector<4x648xf32>
    %68 = arith.mulf %56, %67 : vector<4x648xf32>
    %69 = vector.broadcast %47 : vector<4x1xf32> to vector<4x648xf32>
    %70 = arith.mulf %68, %69 : vector<4x648xf32>
    %71 = vector.broadcast %48 : vector<4x1xf32> to vector<4x648xf32>
    %72 = arith.addf %70, %71 : vector<4x648xf32>
    %cst_47 = arith.constant 0.000000e+00 : f32
    %73 = vector.broadcast %cst_47 : f32 to vector<4x648xf32>
    %74 = arith.maximumf %72, %73 : vector<4x648xf32>
    %75 = vector.broadcast %0 : vector<1x648xf32> to vector<4x648xf32>
    %76 = arith.mulf %74, %75 : vector<4x648xf32>
    %cst_48 = arith.constant 0.000000e+00 : f32
    %77 = vector.broadcast %cst_48 : f32 to vector<4x128xf32>
    %c0_49 = arith.constant 0 : index
    %c0_50 = arith.constant 0 : index
    %78 = vector.load %arg9[%c0_49, %c0_50] : memref<4x904xf32, #tpu.memory_space<vmem>>, vector<4x128xf32>
    tpu.vector_store %arg9[%c0_49, %c0_50], %77 {strides = array<i32>} : memref<4x904xf32, #tpu.memory_space<vmem>>, vector<4x128xf32>,
    %c0_51 = arith.constant 0 : index
    %c776 = arith.constant 776 : index
    %79 = vector.load %arg9[%c0_51, %c776] : memref<4x904xf32, #tpu.memory_space<vmem>>, vector<4x128xf32>
    tpu.vector_store %arg9[%c0_51, %c776], %77 {strides = array<i32>} : memref<4x904xf32, #tpu.memory_space<vmem>>, vector<4x128xf32>,
    %c0_52 = arith.constant 0 : index
    %c128_53 = arith.constant 128 : index
    %80 = vector.load %arg9[%c0_52, %c128_53] : memref<4x904xf32, #tpu.memory_space<vmem>>, vector<4x648xf32>
    tpu.vector_store %arg9[%c0_52, %c128_53], %76 {strides = array<i32>} : memref<4x904xf32, #tpu.memory_space<vmem>>, vector<4x648xf32>,
    %cst_54 = arith.constant 0.000000e+00 : f32
    %81 = vector.broadcast %cst_54 : f32 to vector<4x648xf32>
    %c0_55 = arith.constant 0 : index
    %c109_56 = arith.constant 109 : index
    %82 = vector.load %arg9[%c0_55, %c109_56] : memref<4x904xf32, #tpu.memory_space<vmem>>, vector<4x648xf32>
    %c0_57 = arith.constant 0 : index
    %c0_58 = arith.constant 0 : index
    %c0_59 = arith.constant 0 : index
    %83 = vector.load %arg5[%c0_57, %c0_58, %c0_59] : memref<9x4x4xf32, #tpu.memory_space<vmem>>, vector<1x4x4xf32>
    %84 = vector.shape_cast %83 : vector<1x4x4xf32> to vector<4x4xf32>
    %cst_60 = arith.constant dense<0.000000e+00> : vector<4x648xf32>
    %85 = tpu.matmul %84, %82, %cst_60 {dimension_numbers = #tpu.dot_dimension_numbers<[1], [0], [0], [1], [0, 0, 1, 1], [], []>} : vector<4x4xf32>, vector<4x648xf32>, vector<4x648xf32> -> vector<4x648xf32>
    %86 = arith.addf %81, %85 : vector<4x648xf32>
    %c0_61 = arith.constant 0 : index
    %c110_62 = arith.constant 110 : index
    %87 = vector.load %arg9[%c0_61, %c110_62] : memref<4x904xf32, #tpu.memory_space<vmem>>, vector<4x648xf32>
    %c1_63 = arith.constant 1 : index
    %c0_64 = arith.constant 0 : index
    %c0_65 = arith.constant 0 : index
    %88 = vector.load %arg5[%c1_63, %c0_64, %c0_65] : memref<9x4x4xf32, #tpu.memory_space<vmem>>, vector<1x4x4xf32>
    %89 = vector.shape_cast %88 : vector<1x4x4xf32> to vector<4x4xf32>
    %cst_66 = arith.constant dense<0.000000e+00> : vector<4x648xf32>
    %90 = tpu.matmul %89, %87, %cst_66 {dimension_numbers = #tpu.dot_dimension_numbers<[1], [0], [0], [1], [0, 0, 1, 1], [], []>} : vector<4x4xf32>, vector<4x648xf32>, vector<4x648xf32> -> vector<4x648xf32>
    %91 = arith.addf %86, %90 : vector<4x648xf32>
    %c0_67 = arith.constant 0 : index
    %c111_68 = arith.constant 111 : index
    %92 = vector.load %arg9[%c0_67, %c111_68] : memref<4x904xf32, #tpu.memory_space<vmem>>, vector<4x648xf32>
    %c2_69 = arith.constant 2 : index
    %c0_70 = arith.constant 0 : index
    %c0_71 = arith.constant 0 : index
    %93 = vector.load %arg5[%c2_69, %c0_70, %c0_71] : memref<9x4x4xf32, #tpu.memory_space<vmem>>, vector<1x4x4xf32>
    %94 = vector.shape_cast %93 : vector<1x4x4xf32> to vector<4x4xf32>
    %cst_72 = arith.constant dense<0.000000e+00> : vector<4x648xf32>
    %95 = tpu.matmul %94, %92, %cst_72 {dimension_numbers = #tpu.dot_dimension_numbers<[1], [0], [0], [1], [0, 0, 1, 1], [], []>} : vector<4x4xf32>, vector<4x648xf32>, vector<4x648xf32> -> vector<4x648xf32>
    %96 = arith.addf %91, %95 : vector<4x648xf32>
    %c0_73 = arith.constant 0 : index
    %c127_74 = arith.constant 127 : index
    %97 = vector.load %arg9[%c0_73, %c127_74] : memref<4x904xf32, #tpu.memory_space<vmem>>, vector<4x648xf32>
    %c3_75 = arith.constant 3 : index
    %c0_76 = arith.constant 0 : index
    %c0_77 = arith.constant 0 : index
    %98 = vector.load %arg5[%c3_75, %c0_76, %c0_77] : memref<9x4x4xf32, #tpu.memory_space<vmem>>, vector<1x4x4xf32>
    %99 = vector.shape_cast %98 : vector<1x4x4xf32> to vector<4x4xf32>
    %cst_78 = arith.constant dense<0.000000e+00> : vector<4x648xf32>
    %100 = tpu.matmul %99, %97, %cst_78 {dimension_numbers = #tpu.dot_dimension_numbers<[1], [0], [0], [1], [0, 0, 1, 1], [], []>} : vector<4x4xf32>, vector<4x648xf32>, vector<4x648xf32> -> vector<4x648xf32>
    %101 = arith.addf %96, %100 : vector<4x648xf32>
    %c0_79 = arith.constant 0 : index
    %c128_80 = arith.constant 128 : index
    %102 = vector.load %arg9[%c0_79, %c128_80] : memref<4x904xf32, #tpu.memory_space<vmem>>, vector<4x648xf32>
    %c4_81 = arith.constant 4 : index
    %c0_82 = arith.constant 0 : index
    %c0_83 = arith.constant 0 : index
    %103 = vector.load %arg5[%c4_81, %c0_82, %c0_83] : memref<9x4x4xf32, #tpu.memory_space<vmem>>, vector<1x4x4xf32>
    %104 = vector.shape_cast %103 : vector<1x4x4xf32> to vector<4x4xf32>
    %cst_84 = arith.constant dense<0.000000e+00> : vector<4x648xf32>
    %105 = tpu.matmul %104, %102, %cst_84 {dimension_numbers = #tpu.dot_dimension_numbers<[1], [0], [0], [1], [0, 0, 1, 1], [], []>} : vector<4x4xf32>, vector<4x648xf32>, vector<4x648xf32> -> vector<4x648xf32>
    %106 = arith.addf %101, %105 : vector<4x648xf32>
    %c0_85 = arith.constant 0 : index
    %c129_86 = arith.constant 129 : index
    %107 = vector.load %arg9[%c0_85, %c129_86] : memref<4x904xf32, #tpu.memory_space<vmem>>, vector<4x648xf32>
    %c5_87 = arith.constant 5 : index
    %c0_88 = arith.constant 0 : index
    %c0_89 = arith.constant 0 : index
    %108 = vector.load %arg5[%c5_87, %c0_88, %c0_89] : memref<9x4x4xf32, #tpu.memory_space<vmem>>, vector<1x4x4xf32>
    %109 = vector.shape_cast %108 : vector<1x4x4xf32> to vector<4x4xf32>
    %cst_90 = arith.constant dense<0.000000e+00> : vector<4x648xf32>
    %110 = tpu.matmul %109, %107, %cst_90 {dimension_numbers = #tpu.dot_dimension_numbers<[1], [0], [0], [1], [0, 0, 1, 1], [], []>} : vector<4x4xf32>, vector<4x648xf32>, vector<4x648xf32> -> vector<4x648xf32>
    %111 = arith.addf %106, %110 : vector<4x648xf32>
    %c0_91 = arith.constant 0 : index
    %c145_92 = arith.constant 145 : index
    %112 = vector.load %arg9[%c0_91, %c145_92] : memref<4x904xf32, #tpu.memory_space<vmem>>, vector<4x648xf32>
    %c6_93 = arith.constant 6 : index
    %c0_94 = arith.constant 0 : index
    %c0_95 = arith.constant 0 : index
    %113 = vector.load %arg5[%c6_93, %c0_94, %c0_95] : memref<9x4x4xf32, #tpu.memory_space<vmem>>, vector<1x4x4xf32>
    %114 = vector.shape_cast %113 : vector<1x4x4xf32> to vector<4x4xf32>
    %cst_96 = arith.constant dense<0.000000e+00> : vector<4x648xf32>
    %115 = tpu.matmul %114, %112, %cst_96 {dimension_numbers = #tpu.dot_dimension_numbers<[1], [0], [0], [1], [0, 0, 1, 1], [], []>} : vector<4x4xf32>, vector<4x648xf32>, vector<4x648xf32> -> vector<4x648xf32>
    %116 = arith.addf %111, %115 : vector<4x648xf32>
    %c0_97 = arith.constant 0 : index
    %c146_98 = arith.constant 146 : index
    %117 = vector.load %arg9[%c0_97, %c146_98] : memref<4x904xf32, #tpu.memory_space<vmem>>, vector<4x648xf32>
    %c7_99 = arith.constant 7 : index
    %c0_100 = arith.constant 0 : index
    %c0_101 = arith.constant 0 : index
    %118 = vector.load %arg5[%c7_99, %c0_100, %c0_101] : memref<9x4x4xf32, #tpu.memory_space<vmem>>, vector<1x4x4xf32>
    %119 = vector.shape_cast %118 : vector<1x4x4xf32> to vector<4x4xf32>
    %cst_102 = arith.constant dense<0.000000e+00> : vector<4x648xf32>
    %120 = tpu.matmul %119, %117, %cst_102 {dimension_numbers = #tpu.dot_dimension_numbers<[1], [0], [0], [1], [0, 0, 1, 1], [], []>} : vector<4x4xf32>, vector<4x648xf32>, vector<4x648xf32> -> vector<4x648xf32>
    %121 = arith.addf %116, %120 : vector<4x648xf32>
    %c0_103 = arith.constant 0 : index
    %c147_104 = arith.constant 147 : index
    %122 = vector.load %arg9[%c0_103, %c147_104] : memref<4x904xf32, #tpu.memory_space<vmem>>, vector<4x648xf32>
    %c8_105 = arith.constant 8 : index
    %c0_106 = arith.constant 0 : index
    %c0_107 = arith.constant 0 : index
    %123 = vector.load %arg5[%c8_105, %c0_106, %c0_107] : memref<9x4x4xf32, #tpu.memory_space<vmem>>, vector<1x4x4xf32>
    %124 = vector.shape_cast %123 : vector<1x4x4xf32> to vector<4x4xf32>
    %cst_108 = arith.constant dense<0.000000e+00> : vector<4x648xf32>
    %125 = tpu.matmul %124, %122, %cst_108 {dimension_numbers = #tpu.dot_dimension_numbers<[1], [0], [0], [1], [0, 0, 1, 1], [], []>} : vector<4x4xf32>, vector<4x648xf32>, vector<4x648xf32> -> vector<4x648xf32>
    %126 = arith.addf %121, %125 : vector<4x648xf32>
    %c0_109 = arith.constant 0 : index
    %c128_110 = arith.constant 128 : index
    %127 = vector.load %arg0[%c0_109, %c128_110] : memref<4x904xf32, #tpu.memory_space<vmem>>, vector<4x648xf32>
    %c0_111 = arith.constant 0 : index
    %c0_112 = arith.constant 0 : index
    %128 = vector.load %arg6[%c0_111, %c0_112] : memref<4x1xf32, #tpu.memory_space<vmem>>, vector<4x1xf32>
    %c0_113 = arith.constant 0 : index
    %c0_114 = arith.constant 0 : index
    %129 = vector.load %arg7[%c0_113, %c0_114] : memref<4x1xf32, #tpu.memory_space<vmem>>, vector<4x1xf32>
    %130 = vector.broadcast %0 : vector<1x648xf32> to vector<4x648xf32>
    %131 = arith.mulf %126, %130 : vector<4x648xf32>
    %cst_115 = arith.constant dense<0.000000e+00> : vector<4xf32>
    %132 = vector.multi_reduction <add>, %131, %cst_115 [1] : vector<4x648xf32> to vector<4xf32>
    %133 = vector.shape_cast %132 : vector<4xf32> to vector<4x1xf32>
    %cst_116 = arith.constant 0.001953125 : f32
    %134 = vector.broadcast %cst_116 : f32 to vector<4x1xf32>
    %135 = arith.mulf %133, %134 : vector<4x1xf32>
    %136 = vector.broadcast %135 : vector<4x1xf32> to vector<4x648xf32>
    %137 = arith.subf %126, %136 : vector<4x648xf32>
    %138 = arith.mulf %137, %137 : vector<4x648xf32>
    %139 = vector.broadcast %0 : vector<1x648xf32> to vector<4x648xf32>
    %140 = arith.mulf %138, %139 : vector<4x648xf32>
    %cst_117 = arith.constant dense<0.000000e+00> : vector<4xf32>
    %141 = vector.multi_reduction <add>, %140, %cst_117 [1] : vector<4x648xf32> to vector<4xf32>
    %142 = vector.shape_cast %141 : vector<4xf32> to vector<4x1xf32>
    %cst_118 = arith.constant 0.001953125 : f32
    %143 = vector.broadcast %cst_118 : f32 to vector<4x1xf32>
    %144 = arith.mulf %142, %143 : vector<4x1xf32>
    %cst_119 = arith.constant 9.99999974E-6 : f32
    %145 = vector.broadcast %cst_119 : f32 to vector<4x1xf32>
    %146 = arith.addf %144, %145 : vector<4x1xf32>
    %147 = math.rsqrt %146 : vector<4x1xf32>
    %148 = vector.broadcast %147 : vector<4x1xf32> to vector<4x648xf32>
    %149 = arith.mulf %137, %148 : vector<4x648xf32>
    %150 = vector.broadcast %128 : vector<4x1xf32> to vector<4x648xf32>
    %151 = arith.mulf %149, %150 : vector<4x648xf32>
    %152 = vector.broadcast %129 : vector<4x1xf32> to vector<4x648xf32>
    %153 = arith.addf %151, %152 : vector<4x648xf32>
    %154 = arith.addf %153, %127 : vector<4x648xf32>
    %cst_120 = arith.constant 0.000000e+00 : f32
    %155 = vector.broadcast %cst_120 : f32 to vector<4x648xf32>
    %156 = arith.maximumf %154, %155 : vector<4x648xf32>
    %c0_121 = arith.constant 0 : index
    %c0_122 = arith.constant 0 : index
    %157 = vector.load %arg8[%c0_121, %c0_122] : memref<4x648xf32, #tpu.memory_space<vmem>>, vector<4x648xf32>
    tpu.vector_store %arg8[%c0_121, %c0_122], %156 {strides = array<i32>} : memref<4x648xf32, #tpu.memory_space<vmem>>, vector<4x648xf32>,
    return
  }
}

</mosaic_0001>

<llo_original>
// kernel: block_forward.1
$region0: #{block_forward.1}
  #allocation0 [shape = 'u32[]', space=smem, size = 0x4, offset = 0x4, fixed_abs, tag = 'smem constant byte address 0x4 - core index']
  #allocation1 [shape = 'u32[72,128]{1,0:T(1,128)}', space=vmem, size = 0x9000, scoped, tag = 'internal scratch']
  #allocation2 [shape = 'f32[4,904]{1,0:T(4,128)}', space=vmem, size = 0x4000, scoped, tag = 'scratch operand']
  %s0 = inlined_call_operand.vmem [shape: f32[4,904], index: 0, kind: input, shape index: {}]
  %s1 = inlined_call_operand.vmem [shape: f32[1,648], index: 1, kind: input, shape index: {}]
  %s2 = inlined_call_operand.vmem [shape: f32[9,4,4], index: 2, kind: input, shape index: {}]
  %s3 = inlined_call_operand.vmem [shape: f32[4,1], index: 3, kind: input, shape index: {}]
  %s4 = inlined_call_operand.vmem [shape: f32[4,1], index: 4, kind: input, shape index: {}]
  %s5 = inlined_call_operand.vmem [shape: f32[9,4,4], index: 5, kind: input, shape index: {}]
  %s6 = inlined_call_operand.vmem [shape: f32[4,1], index: 6, kind: input, shape index: {}]
  %s7 = inlined_call_operand.vmem [shape: f32[4,1], index: 7, kind: input, shape index: {}]
  %s8 = inlined_call_operand.vmem [shape: f32[4,648], index: 8, kind: output, shape index: {}]
  %s9 = sld [smem:[#allocation0]]
  $region42: #{block_forward.1} parent=0
    _
  %s11 = ssub.s32 1, %s9
  %s12 = scalar_select 0, %s11, %s9
  // Predicated region
  $region2: #{block_forward.1} parent=0 // pred_check
    _
  $region3: #{block_forward.1} parent=0 // pred_check_branch
    %14 = sbr.rel (0) target = $region5
  $region4: #{block_forward.1} parent=0 // pred_region
    _
  $region5: #{block_forward.1} parent=0 // pred_fallthru
    _
  // Predicated region
  $region6: #{block_forward.1} parent=0 // pred_check
    _
  $region7: #{block_forward.1} parent=0 // pred_check_branch
    %16 = sbr.rel (0) target = $region9
  $region8: #{block_forward.1} parent=0 // pred_region
    _
  $region9: #{block_forward.1} parent=0 // pred_fallthru
    _
  // Predicated region
  $region10: #{block_forward.1} parent=0 // pred_check
    _
  $region11: #{block_forward.1} parent=0 // pred_check_branch
    %18 = sbr.rel (0) target = $region13
  $region12: #{block_forward.1} parent=0 // pred_region
    _
  $region13: #{block_forward.1} parent=0 // pred_fallthru
    _
  // Predicated region
  $region14: #{block_forward.1} parent=0 // pred_check
    _
  $region15: #{block_forward.1} parent=0 // pred_check_branch
    %20 = sbr.rel (0) target = $region17
  $region16: #{block_forward.1} parent=0 // pred_region
    _
  $region17: #{block_forward.1} parent=0 // pred_fallthru
    _
  // Predicated region
  $region18: #{block_forward.1} parent=0 // pred_check
    _
  $region19: #{block_forward.1} parent=0 // pred_check_branch
    %22 = sbr.rel (0) target = $region21
  $region20: #{block_forward.1} parent=0 // pred_region
    _
  $region21: #{block_forward.1} parent=0 // pred_fallthru
    _
  // Predicated region
  $region22: #{block_forward.1} parent=0 // pred_check
    _
  $region23: #{block_forward.1} parent=0 // pred_check_branch
    %24 = sbr.rel (0) target = $region25
  $region24: #{block_forward.1} parent=0 // pred_region
    _
  $region25: #{block_forward.1} parent=0 // pred_fallthru
    _
  // Predicated region
  $region26: #{block_forward.1} parent=0 // pred_check
    _
  $region27: #{block_forward.1} parent=0 // pred_check_branch
    %26 = sbr.rel (0) target = $region29
  $region28: #{block_forward.1} parent=0 // pred_region
    _
  $region29: #{block_forward.1} parent=0 // pred_fallthru
    _
  // Predicated region
  $region30: #{block_forward.1} parent=0 // pred_check
    _
  $region31: #{block_forward.1} parent=0 // pred_check_branch
    %28 = sbr.rel (0) target = $region33
  $region32: #{block_forward.1} parent=0 // pred_region
    _
  $region33: #{block_forward.1} parent=0 // pred_fallthru
    _
  %v29 = vld [vmem:[%s1] sm:$0x3f]
  %v30 = vld [vmem:[%s0] sm:$0xff]
  %v31 = vld [vmem:[%s0 + $0x8] sm:$0xff]
  %v32 = vld [vmem:[%s0 + $0x10] sm:$0xff]
  %v33 = vld [vmem:[%s2] sm:$0xf]
  %s34 = scalar_lea.vmem %s2, 4
  %v35 = vld [vmem:[%s34] sm:$0xf]
  %39 = vst [vmem:[#allocation1] ss:$2 sm:$0xff] %v30
  %s40 = scalar_lea.vmem [#allocation1], 16
  %41 = vst [vmem:[%s40] ss:$2 sm:$0xff] %v31
  %s42 = scalar_lea.vmem [#allocation1], 32
  %43 = vst [vmem:[%s42] ss:$2 sm:$0xff] %v32
  %v44 = vld.sshfl [vmem:[#allocation1] sm:$0xff pattern:$0x75316420]
  %v45 = vld.sshfl [vmem:[#allocation1 + $0x8] sm:$0xff pattern:$0x75316420]
  %v46 = vld.sshfl [vmem:[#allocation1 + $0x10] sm:$0xff pattern:$0x75316420]
  %v47 = vld.sshfl [vmem:[#allocation1 + $0x18] sm:$0xff pattern:$0x75316420]
  %v48 = vld.sshfl [vmem:[#allocation1 + $0x20] sm:$0xff pattern:$0x75316420]
  %v49 = vld.sshfl [vmem:[#allocation1 + $0x28] sm:$0xff pattern:$0x75316420]
  %50 = vrot.lane.b32.xlu0 %v44, 18
  %v51 = vpop.permute.xlu0 %50
  %52 = vrot.lane.b32.xlu0 %v45, 18
  %v53 = vpop.permute.xlu0 %52
  %54 = vrot.lane.b32.xlu0 %v46, 18
  %v55 = vpop.permute.xlu0 %54
  %56 = vrot.lane.b32.xlu0 %v47, 18
  %v57 = vpop.permute.xlu0 %56
  %58 = vrot.lane.b32.xlu0 %v48, 18
  %v59 = vpop.permute.xlu0 %58
  %60 = vrot.lane.b32.xlu0 %v49, 18
  %v61 = vpop.permute.xlu0 %60
  %vm62 = vcmask 146432
  %v63 = vsel %vm62, %v51, %v53
  %v64 = vsel %vm62, %v53, %v55
  %v65 = vsel %vm62, %v55, %v57
  %v66 = vsel %vm62, %v57, %v59
  %v67 = vsel %vm62, %v59, %v61
  %vm68 = vcmask 31744
  %v70 = vsel %vm68, %v35, 0
  %vm72 = vcmask 1043456
  %v73 = vsel %vm72, %v63, 0
  %v75 = vsel %vm72, %v64, 0
  %v77 = vsel %vm72, %v65, 0
  %v79 = vsel %vm72, %v66, 0
  %v81 = vsel %vm72, %v67, 0
  %v83 = vsel %vm72, %v61, 0
  %85 = vmatpush.msra.mxu0 0.0
  %86 = vmatpush.msra.mxu0 0.0
  %87 = vmatpush.msra.mxu0 0.0
  %88 = vmatpush.msra.mxu0 0.0
  %89 = vmatpush.msra.mxu0 0.0
  %90 = vmatpush.msra.mxu0 0.0
  %91 = vmatpush.msra.mxu0 0.0
  %92 = vmatpush.msra.mxu0 0.0
  %93 = vmatpush.msra.mxu0 0.0
  %94 = vmatpush.msra.mxu0 0.0
  %95 = vmatpush.msra.mxu0 0.0
  %96 = vmatpush.msra.mxu0 0.0
  %97 = vmatpush.msra.mxu0 0.0
  %98 = vmatpush.msra.mxu0 0.0
  %99 = vmatpush.msra.mxu0 0.0
  %100 = vmatpush.msra.mxu0 %v73
  %101 = vmatmul.f32.gmra.mxu0 %v70
  %v102 = vpop.f32.mrf.mxu0
  %v103 = vadd.f32 0.0, %v102
  %104 = vdwg.mxu0
  %105 = vmatpush.msra.mxu0 0.0
  %106 = vmatpush.msra.mxu0 0.0
  %107 = vmatpush.msra.mxu0 0.0
  %108 = vmatpush.msra.mxu0 0.0
  %109 = vmatpush.msra.mxu0 0.0
  %110 = vmatpush.msra.mxu0 0.0
  %111 = vmatpush.msra.mxu0 0.0
  %112 = vmatpush.msra.mxu0 0.0
  %113 = vmatpush.msra.mxu0 0.0
  %114 = vmatpush.msra.mxu0 0.0
  %115 = vmatpush.msra.mxu0 0.0
  %116 = vmatpush.msra.mxu0 0.0
  %117 = vmatpush.msra.mxu0 0.0
  %118 = vmatpush.msra.mxu0 0.0
  %119 = vmatpush.msra.mxu0 0.0
  %120 = vmatpush.msra.mxu0 %v75
  %121 = vmatmul.f32.gmra.mxu0 %v70
  %v122 = vpop.f32.mrf.mxu0
  %v123 = vadd.f32 0.0, %v122
  %124 = vdwg.mxu0
  %125 = vmatpush.msra.mxu0 0.0
  %126 = vmatpush.msra.mxu0 0.0
  %127 = vmatpush.msra.mxu0 0.0
  %128 = vmatpush.msra.mxu0 0.0
  %129 = vmatpush.msra.mxu0 0.0
  %130 = vmatpush.msra.mxu0 0.0
  %131 = vmatpush.msra.mxu0 0.0
  %132 = vmatpush.msra.mxu0 0.0
  %133 = vmatpush.msra.mxu0 0.0
  %134 = vmatpush.msra.mxu0 0.0
  %135 = vmatpush.msra.mxu0 0.0
  %136 = vmatpush.msra.mxu0 0.0
  %137 = vmatpush.msra.mxu0 0.0
  %138 = vmatpush.msra.mxu0 0.0
  %139 = vmatpush.msra.mxu0 0.0
  %140 = vmatpush.msra.mxu0 %v77
  %141 = vmatmul.f32.gmra.mxu0 %v70
  %v142 = vpop.f32.mrf.mxu0
  %v143 = vadd.f32 0.0, %v142
  %144 = vdwg.mxu0
  %145 = vmatpush.msra.mxu0 0.0
  %146 = vmatpush.msra.mxu0 0.0
  %147 = vmatpush.msra.mxu0 0.0
  %148 = vmatpush.msra.mxu0 0.0
  %149 = vmatpush.msra.mxu0 0.0
  %150 = vmatpush.msra.mxu0 0.0
  %151 = vmatpush.msra.mxu0 0.0
  %152 = vmatpush.msra.mxu0 0.0
  %153 = vmatpush.msra.mxu0 0.0
  %154 = vmatpush.msra.mxu0 0.0
  %155 = vmatpush.msra.mxu0 0.0
  %156 = vmatpush.msra.mxu0 0.0
  %157 = vmatpush.msra.mxu0 0.0
  %158 = vmatpush.msra.mxu0 0.0
  %159 = vmatpush.msra.mxu0 0.0
  %160 = vmatpush.msra.mxu0 %v79
  %161 = vmatmul.f32.gmra.mxu0 %v70
  %v162 = vpop.f32.mrf.mxu0
  %v163 = vadd.f32 0.0, %v162
  %164 = vdwg.mxu0
  %165 = vmatpush.msra.mxu0 0.0
  %166 = vmatpush.msra.mxu0 0.0
  %167 = vmatpush.msra.mxu0 0.0
  %168 = vmatpush.msra.mxu0 0.0
  %169 = vmatpush.msra.mxu0 0.0
  %170 = vmatpush.msra.mxu0 0.0
  %171 = vmatpush.msra.mxu0 0.0
  %172 = vmatpush.msra.mxu0 0.0
  %173 = vmatpush.msra.mxu0 0.0
  %174 = vmatpush.msra.mxu0 0.0
  %175 = vmatpush.msra.mxu0 0.0
  %176 = vmatpush.msra.mxu0 0.0
  %177 = vmatpush.msra.mxu0 0.0
  %178 = vmatpush.msra.mxu0 0.0
  %179 = vmatpush.msra.mxu0 0.0
  %180 = vmatpush.msra.mxu0 %v81
  %181 = vmatmul.f32.gmra.mxu0 %v70
  %v182 = vpop.f32.mrf.mxu0
  %v183 = vadd.f32 0.0, %v182
  %184 = vdwg.mxu0
  %185 = vmatpush.msra.mxu0 0.0
  %186 = vmatpush.msra.mxu0 0.0
  %187 = vmatpush.msra.mxu0 0.0
  %188 = vmatpush.msra.mxu0 0.0
  %189 = vmatpush.msra.mxu0 0.0
  %190 = vmatpush.msra.mxu0 0.0
  %191 = vmatpush.msra.mxu0 0.0
  %192 = vmatpush.msra.mxu0 0.0
  %193 = vmatpush.msra.mxu0 0.0
  %194 = vmatpush.msra.mxu0 0.0
  %195 = vmatpush.msra.mxu0 0.0
  %196 = vmatpush.msra.mxu0 0.0
  %197 = vmatpush.msra.mxu0 0.0
  %198 = vmatpush.msra.mxu0 0.0
  %199 = vmatpush.msra.mxu0 0.0
  %200 = vmatpush.msra.mxu0 %v83
  %201 = vmatmul.f32.gmra.mxu0 %v70
  %v202 = vpop.f32.mrf.mxu0
  %v203 = vadd.f32 0.0, %v202
  %204 = vdwg.mxu0
  %205 = vst [vmem:[#allocation1] ss:$2 sm:$0xff] %v30
  %s206 = scalar_lea.vmem [#allocation1], 16
  %207 = vst [vmem:[%s206] ss:$2 sm:$0xff] %v31
  %s208 = scalar_lea.vmem [#allocation1], 32
  %209 = vst [vmem:[%s208] ss:$2 sm:$0xff] %v32
  %v210 = vld.sshfl [vmem:[#allocation1] sm:$0xff pattern:$0x75316420]
  %v211 = vld.sshfl [vmem:[#allocation1 + $0x8] sm:$0xff pattern:$0x75316420]
  %v212 = vld.sshfl [vmem:[#allocation1 + $0x10] sm:$0xff pattern:$0x75316420]
  %v213 = vld.sshfl [vmem:[#allocation1 + $0x18] sm:$0xff pattern:$0x75316420]
  %v214 = vld.sshfl [vmem:[#allocation1 + $0x20] sm:$0xff pattern:$0x75316420]
  %v215 = vld.sshfl [vmem:[#allocation1 + $0x28] sm:$0xff pattern:$0x75316420]
  %216 = vrot.lane.b32.xlu0 %v210, 19
  %v217 = vpop.permute.xlu0 %216
  %218 = vrot.lane.b32.xlu0 %v211, 19
  %v219 = vpop.permute.xlu0 %218
  %220 = vrot.lane.b32.xlu0 %v212, 19
  %v221 = vpop.permute.xlu0 %220
  %222 = vrot.lane.b32.xlu0 %v213, 19
  %v223 = vpop.permute.xlu0 %222
  %224 = vrot.lane.b32.xlu0 %v214, 19
  %v225 = vpop.permute.xlu0 %224
  %226 = vrot.lane.b32.xlu0 %v215, 19
  %v227 = vpop.permute.xlu0 %226
  %vm228 = vcmask 154624
  %v229 = vsel %vm228, %v217, %v219
  %v230 = vsel %vm228, %v219, %v221
  %v231 = vsel %vm228, %v221, %v223
  %v232 = vsel %vm228, %v223, %v225
  %v233 = vsel %vm228, %v225, %v227
  %v235 = vsel %vm68, %v33, 0
  %v237 = vsel %vm72, %v229, 0
  %v239 = vsel %vm72, %v230, 0
  %v241 = vsel %vm72, %v231, 0
  %v243 = vsel %vm72, %v232, 0
  %v245 = vsel %vm72, %v233, 0
  %v247 = vsel %vm72, %v227, 0
  %249 = vmatpush.msra.mxu0 0.0
  %250 = vmatpush.msra.mxu0 0.0
  %251 = vmatpush.msra.mxu0 0.0
  %252 = vmatpush.msra.mxu0 0.0
  %253 = vmatpush.msra.mxu0 0.0
  %254 = vmatpush.msra.mxu0 0.0
  %255 = vmatpush.msra.mxu0 0.0
  %256 = vmatpush.msra.mxu0 0.0
  %257 = vmatpush.msra.mxu0 0.0
  %258 = vmatpush.msra.mxu0 0.0
  %259 = vmatpush.msra.mxu0 0.0
  %260 = vmatpush.msra.mxu0 0.0
  %261 = vmatpush.msra.mxu0 0.0
  %262 = vmatpush.msra.mxu0 0.0
  %263 = vmatpush.msra.mxu0 0.0
  %264 = vmatpush.msra.mxu0 %v237
  %265 = vmatmul.f32.gmra.mxu0 %v235
  %v266 = vpop.f32.mrf.mxu0
  %v267 = vadd.f32 %v103, %v266
  %268 = vdwg.mxu0
  %269 = vmatpush.msra.mxu0 0.0
  %270 = vmatpush.msra.mxu0 0.0
  %271 = vmatpush.msra.mxu0 0.0
  %272 = vmatpush.msra.mxu0 0.0
  %273 = vmatpush.msra.mxu0 0.0
  %274 = vmatpush.msra.mxu0 0.0
  %275 = vmatpush.msra.mxu0 0.0
  %276 = vmatpush.msra.mxu0 0.0
  %277 = vmatpush.msra.mxu0 0.0
  %278 = vmatpush.msra.mxu0 0.0
  %279 = vmatpush.msra.mxu0 0.0
  %280 = vmatpush.msra.mxu0 0.0
  %281 = vmatpush.msra.mxu0 0.0
  %282 = vmatpush.msra.mxu0 0.0
  %283 = vmatpush.msra.mxu0 0.0
  %284 = vmatpush.msra.mxu0 %v239
  %285 = vmatmul.f32.gmra.mxu0 %v235
  %v286 = vpop.f32.mrf.mxu0
  %v287 = vadd.f32 %v123, %v286
  %288 = vdwg.mxu0
  %289 = vmatpush.msra.mxu0 0.0
  %290 = vmatpush.msra.mxu0 0.0
  %291 = vmatpush.msra.mxu0 0.0
  %292 = vmatpush.msra.mxu0 0.0
  %293 = vmatpush.msra.mxu0 0.0
  %294 = vmatpush.msra.mxu0 0.0
  %295 = vmatpush.msra.mxu0 0.0
  %296 = vmatpush.msra.mxu0 0.0
  %297 = vmatpush.msra.mxu0 0.0
  %298 = vmatpush.msra.mxu0 0.0
  %299 = vmatpush.msra.mxu0 0.0
  %300 = vmatpush.msra.mxu0 0.0
  %301 = vmatpush.msra.mxu0 0.0
  %302 = vmatpush.msra.mxu0 0.0
  %303 = vmatpush.msra.mxu0 0.0
  %304 = vmatpush.msra.mxu0 %v241
  %305 = vmatmul.f32.gmra.mxu0 %v235
  %v306 = vpop.f32.mrf.mxu0
  %v307 = vadd.f32 %v143, %v306
  %308 = vdwg.mxu0
  %309 = vmatpush.msra.mxu0 0.0
  %310 = vmatpush.msra.mxu0 0.0
  %311 = vmatpush.msra.mxu0 0.0
  %312 = vmatpush.msra.mxu0 0.0
  %313 = vmatpush.msra.mxu0 0.0
  %314 = vmatpush.msra.mxu0 0.0
  %315 = vmatpush.msra.mxu0 0.0
  %316 = vmatpush.msra.mxu0 0.0
  %317 = vmatpush.msra.mxu0 0.0
  %318 = vmatpush.msra.mxu0 0.0
  %319 = vmatpush.msra.mxu0 0.0
  %320 = vmatpush.msra.mxu0 0.0
  %321 = vmatpush.msra.mxu0 0.0
  %322 = vmatpush.msra.mxu0 0.0
  %323 = vmatpush.msra.mxu0 0.0
  %324 = vmatpush.msra.mxu0 %v243
  %325 = vmatmul.f32.gmra.mxu0 %v235
  %v326 = vpop.f32.mrf.mxu0
  %v327 = vadd.f32 %v163, %v326
  %328 = vdwg.mxu0
  %329 = vmatpush.msra.mxu0 0.0
  %330 = vmatpush.msra.mxu0 0.0
  %331 = vmatpush.msra.mxu0 0.0
  %332 = vmatpush.msra.mxu0 0.0
  %333 = vmatpush.msra.mxu0 0.0
  %334 = vmatpush.msra.mxu0 0.0
  %335 = vmatpush.msra.mxu0 0.0
  %336 = vmatpush.msra.mxu0 0.0
  %337 = vmatpush.msra.mxu0 0.0
  %338 = vmatpush.msra.mxu0 0.0
  %339 = vmatpush.msra.mxu0 0.0
  %340 = vmatpush.msra.mxu0 0.0
  %341 = vmatpush.msra.mxu0 0.0
  %342 = vmatpush.msra.mxu0 0.0
  %343 = vmatpush.msra.mxu0 0.0
  %344 = vmatpush.msra.mxu0 %v245
  %345 = vmatmul.f32.gmra.mxu0 %v235
  %v346 = vpop.f32.mrf.mxu0
  %v347 = vadd.f32 %v183, %v346
  %348 = vdwg.mxu0
  %349 = vmatpush.msra.mxu0 0.0
  %350 = vmatpush.msra.mxu0 0.0
  %351 = vmatpush.msra.mxu0 0.0
  %352 = vmatpush.msra.mxu0 0.0
  %353 = vmatpush.msra.mxu0 0.0
  %354 = vmatpush.msra.mxu0 0.0
  %355 = vmatpush.msra.mxu0 0.0
  %356 = vmatpush.msra.mxu0 0.0
  %357 = vmatpush.msra.mxu0 0.0
  %358 = vmatpush.msra.mxu0 0.0
  %359 = vmatpush.msra.mxu0 0.0
  %360 = vmatpush.msra.mxu0 0.0
  %361 = vmatpush.msra.mxu0 0.0
  %362 = vmatpush.msra.mxu0 0.0
  %363 = vmatpush.msra.mxu0 0.0
  %364 = vmatpush.msra.mxu0 %v247
  %365 = vmatmul.f32.gmra.mxu0 %v235
  %v366 = vpop.f32.mrf.mxu0
  %v367 = vadd.f32 %v203, %v366
  %368 = vdwg.mxu0
  %v369 = vld [vmem:[%s0] sm:$0xff]
  %v370 = vld [vmem:[%s0 + $0x8] sm:$0xff]
  %v371 = vld [vmem:[%s0 + $0x10] sm:$0xff]
  %s372 = scalar_lea.vmem %s2, 8
  %v373 = vld [vmem:[%s372] sm:$0xf]
  %377 = vst [vmem:[#allocation1] ss:$2 sm:$0xff] %v369
  %s378 = scalar_lea.vmem [#allocation1], 16
  %379 = vst [vmem:[%s378] ss:$2 sm:$0xff] %v370
  %s380 = scalar_lea.vmem [#allocation1], 32
  %381 = vst [vmem:[%s380] ss:$2 sm:$0xff] %v371
  %v382 = vld.sshfl [vmem:[#allocation1] sm:$0xff pattern:$0x75316420]
  %v383 = vld.sshfl [vmem:[#allocation1 + $0x8] sm:$0xff pattern:$0x75316420]
  %v384 = vld.sshfl [vmem:[#allocation1 + $0x10] sm:$0xff pattern:$0x75316420]
  %v385 = vld.sshfl [vmem:[#allocation1 + $0x18] sm:$0xff pattern:$0x75316420]
  %v386 = vld.sshfl [vmem:[#allocation1 + $0x20] sm:$0xff pattern:$0x75316420]
  %v387 = vld.sshfl [vmem:[#allocation1 + $0x28] sm:$0xff pattern:$0x75316420]
  %388 = vrot.lane.b32.xlu0 %v382, 17
  %v389 = vpop.permute.xlu0 %388
  %390 = vrot.lane.b32.xlu0 %v383, 17
  %v391 = vpop.permute.xlu0 %390
  %392 = vrot.lane.b32.xlu0 %v384, 17
  %v393 = vpop.permute.xlu0 %392
  %394 = vrot.lane.b32.xlu0 %v385, 17
  %v395 = vpop.permute.xlu0 %394
  %396 = vrot.lane.b32.xlu0 %v386, 17
  %v397 = vpop.permute.xlu0 %396
  %398 = vrot.lane.b32.xlu0 %v387, 17
  %v399 = vpop.permute.xlu0 %398
  %vm400 = vcmask 138240
  %v401 = vsel %vm400, %v389, %v391
  %v402 = vsel %vm400, %v391, %v393
  %v403 = vsel %vm400, %v393, %v395
  %v404 = vsel %vm400, %v395, %v397
  %v405 = vsel %vm400, %v397, %v399
  %v407 = vsel %vm68, %v373, 0
  %v409 = vsel %vm72, %v401, 0
  %v411 = vsel %vm72, %v402, 0
  %v413 = vsel %vm72, %v403, 0
  %v415 = vsel %vm72, %v404, 0
  %v417 = vsel %vm72, %v405, 0
  %v419 = vsel %vm72, %v399, 0
  %421 = vmatpush.msra.mxu0 0.0
  %422 = vmatpush.msra.mxu0 0.0
  %423 = vmatpush.msra.mxu0 0.0
  %424 = vmatpush.msra.mxu0 0.0
  %425 = vmatpush.msra.mxu0 0.0
  %426 = vmatpush.msra.mxu0 0.0
  %427 = vmatpush.msra.mxu0 0.0
  %428 = vmatpush.msra.mxu0 0.0
  %429 = vmatpush.msra.mxu0 0.0
  %430 = vmatpush.msra.mxu0 0.0
  %431 = vmatpush.msra.mxu0 0.0
  %432 = vmatpush.msra.mxu0 0.0
  %433 = vmatpush.msra.mxu0 0.0
  %434 = vmatpush.msra.mxu0 0.0
  %435 = vmatpush.msra.mxu0 0.0
  %436 = vmatpush.msra.mxu0 %v409
  %437 = vmatmul.f32.gmra.mxu0 %v407
  %v438 = vpop.f32.mrf.mxu0
  %v439 = vadd.f32 0.0, %v438
  %440 = vdwg.mxu0
  %441 = vmatpush.msra.mxu0 0.0
  %442 = vmatpush.msra.mxu0 0.0
  %443 = vmatpush.msra.mxu0 0.0
  %444 = vmatpush.msra.mxu0 0.0
  %445 = vmatpush.msra.mxu0 0.0
  %446 = vmatpush.msra.mxu0 0.0
  %447 = vmatpush.msra.mxu0 0.0
  %448 = vmatpush.msra.mxu0 0.0
  %449 = vmatpush.msra.mxu0 0.0
  %450 = vmatpush.msra.mxu0 0.0
  %451 = vmatpush.msra.mxu0 0.0
  %452 = vmatpush.msra.mxu0 0.0
  %453 = vmatpush.msra.mxu0 0.0
  %454 = vmatpush.msra.mxu0 0.0
  %455 = vmatpush.msra.mxu0 0.0
  %456 = vmatpush.msra.mxu0 %v411
  %457 = vmatmul.f32.gmra.mxu0 %v407
  %v458 = vpop.f32.mrf.mxu0
  %v459 = vadd.f32 0.0, %v458
  %460 = vdwg.mxu0
  %461 = vmatpush.msra.mxu0 0.0
  %462 = vmatpush.msra.mxu0 0.0
  %463 = vmatpush.msra.mxu0 0.0
  %464 = vmatpush.msra.mxu0 0.0
  %465 = vmatpush.msra.mxu0 0.0
  %466 = vmatpush.msra.mxu0 0.0
  %467 = vmatpush.msra.mxu0 0.0
  %468 = vmatpush.msra.mxu0 0.0
  %469 = vmatpush.msra.mxu0 0.0
  %470 = vmatpush.msra.mxu0 0.0
  %471 = vmatpush.msra.mxu0 0.0
  %472 = vmatpush.msra.mxu0 0.0
  %473 = vmatpush.msra.mxu0 0.0
  %474 = vmatpush.msra.mxu0 0.0
  %475 = vmatpush.msra.mxu0 0.0
  %476 = vmatpush.msra.mxu0 %v413
  %477 = vmatmul.f32.gmra.mxu0 %v407
  %v478 = vpop.f32.mrf.mxu0
  %v479 = vadd.f32 0.0, %v478
  %480 = vdwg.mxu0
  %481 = vmatpush.msra.mxu0 0.0
  %482 = vmatpush.msra.mxu0 0.0
  %483 = vmatpush.msra.mxu0 0.0
  %484 = vmatpush.msra.mxu0 0.0
  %485 = vmatpush.msra.mxu0 0.0
  %486 = vmatpush.msra.mxu0 0.0
  %487 = vmatpush.msra.mxu0 0.0
  %488 = vmatpush.msra.mxu0 0.0
  %489 = vmatpush.msra.mxu0 0.0
  %490 = vmatpush.msra.mxu0 0.0
  %491 = vmatpush.msra.mxu0 0.0
  %492 = vmatpush.msra.mxu0 0.0
  %493 = vmatpush.msra.mxu0 0.0
  %494 = vmatpush.msra.mxu0 0.0
  %495 = vmatpush.msra.mxu0 0.0
  %496 = vmatpush.msra.mxu0 %v415
  %497 = vmatmul.f32.gmra.mxu0 %v407
  %v498 = vpop.f32.mrf.mxu0
  %v499 = vadd.f32 0.0, %v498
  %500 = vdwg.mxu0
  %501 = vmatpush.msra.mxu0 0.0
  %502 = vmatpush.msra.mxu0 0.0
  %503 = vmatpush.msra.mxu0 0.0
  %504 = vmatpush.msra.mxu0 0.0
  %505 = vmatpush.msra.mxu0 0.0
  %506 = vmatpush.msra.mxu0 0.0
  %507 = vmatpush.msra.mxu0 0.0
  %508 = vmatpush.msra.mxu0 0.0
  %509 = vmatpush.msra.mxu0 0.0
  %510 = vmatpush.msra.mxu0 0.0
  %511 = vmatpush.msra.mxu0 0.0
  %512 = vmatpush.msra.mxu0 0.0
  %513 = vmatpush.msra.mxu0 0.0
  %514 = vmatpush.msra.mxu0 0.0
  %515 = vmatpush.msra.mxu0 0.0
  %516 = vmatpush.msra.mxu0 %v417
  %517 = vmatmul.f32.gmra.mxu0 %v407
  %v518 = vpop.f32.mrf.mxu0
  %v519 = vadd.f32 0.0, %v518
  %520 = vdwg.mxu0
  %521 = vmatpush.msra.mxu0 0.0
  %522 = vmatpush.msra.mxu0 0.0
  %523 = vmatpush.msra.mxu0 0.0
  %524 = vmatpush.msra.mxu0 0.0
  %525 = vmatpush.msra.mxu0 0.0
  %526 = vmatpush.msra.mxu0 0.0
  %527 = vmatpush.msra.mxu0 0.0
  %528 = vmatpush.msra.mxu0 0.0
  %529 = vmatpush.msra.mxu0 0.0
  %530 = vmatpush.msra.mxu0 0.0
  %531 = vmatpush.msra.mxu0 0.0
  %532 = vmatpush.msra.mxu0 0.0
  %533 = vmatpush.msra.mxu0 0.0
  %534 = vmatpush.msra.mxu0 0.0
  %535 = vmatpush.msra.mxu0 0.0
  %536 = vmatpush.msra.mxu0 %v419
  %537 = vmatmul.f32.gmra.mxu0 %v407
  %v538 = vpop.f32.mrf.mxu0
  %v539 = vadd.f32 0.0, %v538
  %540 = vdwg.mxu0
  %v541 = vadd.f32 %v267, %v439
  %v542 = vadd.f32 %v287, %v459
  %v543 = vadd.f32 %v307, %v479
  %v544 = vadd.f32 %v327, %v499
  %v545 = vadd.f32 %v347, %v519
  %v546 = vadd.f32 %v367, %v539
  %v547 = vld [vmem:[%s0] sm:$0xff]
  %v548 = vld [vmem:[%s0 + $0x8] sm:$0xff]
  %v549 = vld [vmem:[%s0 + $0x10] sm:$0xff]
  %v550 = vld [vmem:[%s0 + $0x18] sm:$0xf]
  %s551 = scalar_lea.vmem %s2, 12
  %v552 = vld [vmem:[%s551] sm:$0xf]
  %557 = vst [vmem:[#allocation1] ss:$2 sm:$0xff] %v547
  %s558 = scalar_lea.vmem [#allocation1], 16
  %559 = vst [vmem:[%s558] ss:$2 sm:$0xff] %v548
  %s560 = scalar_lea.vmem [#allocation1], 32
  %561 = vst [vmem:[%s560] ss:$2 sm:$0xff] %v549
  %s562 = scalar_lea.vmem [#allocation1], 48
  %563 = vst [vmem:[%s562] ss:$2 sm:$0xff] %v550
  %v564 = vld.sshfl [vmem:[#allocation1] sm:$0xff pattern:$0x75316420]
  %v565 = vld.sshfl [vmem:[#allocation1 + $0x8] sm:$0xff pattern:$0x75316420]
  %v566 = vld.sshfl [vmem:[#allocation1 + $0x10] sm:$0xff pattern:$0x75316420]
  %v567 = vld.sshfl [vmem:[#allocation1 + $0x18] sm:$0xff pattern:$0x75316420]
  %v568 = vld.sshfl [vmem:[#allocation1 + $0x20] sm:$0xff pattern:$0x75316420]
  %v569 = vld.sshfl [vmem:[#allocation1 + $0x28] sm:$0xff pattern:$0x75316420]
  %v570 = vld.sshfl [vmem:[#allocation1 + $0x30] sm:$0xff pattern:$0x75316420]
  %571 = vrot.lane.b32.xlu0 %v564, 1
  %v572 = vpop.permute.xlu0 %571
  %573 = vrot.lane.b32.xlu0 %v565, 1
  %v574 = vpop.permute.xlu0 %573
  %575 = vrot.lane.b32.xlu0 %v566, 1
  %v576 = vpop.permute.xlu0 %575
  %577 = vrot.lane.b32.xlu0 %v567, 1
  %v578 = vpop.permute.xlu0 %577
  %579 = vrot.lane.b32.xlu0 %v568, 1
  %v580 = vpop.permute.xlu0 %579
  %581 = vrot.lane.b32.xlu0 %v569, 1
  %v582 = vpop.permute.xlu0 %581
  %583 = vrot.lane.b32.xlu0 %v570, 1
  %v584 = vpop.permute.xlu0 %583
  %vm585 = vcmask 7168
  %v586 = vsel %vm585, %v572, %v574
  %v587 = vsel %vm585, %v574, %v576
  %v588 = vsel %vm585, %v576, %v578
  %v589 = vsel %vm585, %v578, %v580
  %v590 = vsel %vm585, %v580, %v582
  %v591 = vsel %vm585, %v582, %v584
  %v593 = vsel %vm68, %v552, 0
  %v595 = vsel %vm72, %v586, 0
  %v597 = vsel %vm72, %v587, 0
  %v599 = vsel %vm72, %v588, 0
  %v601 = vsel %vm72, %v589, 0
  %v603 = vsel %vm72, %v590, 0
  %v605 = vsel %vm72, %v591, 0
  %607 = vmatpush.msra.mxu0 0.0
  %608 = vmatpush.msra.mxu0 0.0
  %609 = vmatpush.msra.mxu0 0.0
  %610 = vmatpush.msra.mxu0 0.0
  %611 = vmatpush.msra.mxu0 0.0
  %612 = vmatpush.msra.mxu0 0.0
  %613 = vmatpush.msra.mxu0 0.0
  %614 = vmatpush.msra.mxu0 0.0
  %615 = vmatpush.msra.mxu0 0.0
  %616 = vmatpush.msra.mxu0 0.0
  %617 = vmatpush.msra.mxu0 0.0
  %618 = vmatpush.msra.mxu0 0.0
  %619 = vmatpush.msra.mxu0 0.0
  %620 = vmatpush.msra.mxu0 0.0
  %621 = vmatpush.msra.mxu0 0.0
  %622 = vmatpush.msra.mxu0 %v595
  %623 = vmatmul.f32.gmra.mxu0 %v593
  %v624 = vpop.f32.mrf.mxu0
  %v625 = vadd.f32 0.0, %v624
  %626 = vdwg.mxu0
  %627 = vmatpush.msra.mxu0 0.0
  %628 = vmatpush.msra.mxu0 0.0
  %629 = vmatpush.msra.mxu0 0.0
  %630 = vmatpush.msra.mxu0 0.0
  %631 = vmatpush.msra.mxu0 0.0
  %632 = vmatpush.msra.mxu0 0.0
  %633 = vmatpush.msra.mxu0 0.0
  %634 = vmatpush.msra.mxu0 0.0
  %635 = vmatpush.msra.mxu0 0.0
  %636 = vmatpush.msra.mxu0 0.0
  %637 = vmatpush.msra.mxu0 0.0
  %638 = vmatpush.msra.mxu0 0.0
  %639 = vmatpush.msra.mxu0 0.0
  %640 = vmatpush.msra.mxu0 0.0
  %641 = vmatpush.msra.mxu0 0.0
  %642 = vmatpush.msra.mxu0 %v597
  %643 = vmatmul.f32.gmra.mxu0 %v593
  %v644 = vpop.f32.mrf.mxu0
  %v645 = vadd.f32 0.0, %v644
  %646 = vdwg.mxu0
  %647 = vmatpush.msra.mxu0 0.0
  %648 = vmatpush.msra.mxu0 0.0
  %649 = vmatpush.msra.mxu0 0.0
  %650 = vmatpush.msra.mxu0 0.0
  %651 = vmatpush.msra.mxu0 0.0
  %652 = vmatpush.msra.mxu0 0.0
  %653 = vmatpush.msra.mxu0 0.0
  %654 = vmatpush.msra.mxu0 0.0
  %655 = vmatpush.msra.mxu0 0.0
  %656 = vmatpush.msra.mxu0 0.0
  %657 = vmatpush.msra.mxu0 0.0
  %658 = vmatpush.msra.mxu0 0.0
  %659 = vmatpush.msra.mxu0 0.0
  %660 = vmatpush.msra.mxu0 0.0
  %661 = vmatpush.msra.mxu0 0.0
  %662 = vmatpush.msra.mxu0 %v599
  %663 = vmatmul.f32.gmra.mxu0 %v593
  %v664 = vpop.f32.mrf.mxu0
  %v665 = vadd.f32 0.0, %v664
  %666 = vdwg.mxu0
  %667 = vmatpush.msra.mxu0 0.0
  %668 = vmatpush.msra.mxu0 0.0
  %669 = vmatpush.msra.mxu0 0.0
  %670 = vmatpush.msra.mxu0 0.0
  %671 = vmatpush.msra.mxu0 0.0
  %672 = vmatpush.msra.mxu0 0.0
  %673 = vmatpush.msra.mxu0 0.0
  %674 = vmatpush.msra.mxu0 0.0
  %675 = vmatpush.msra.mxu0 0.0
  %676 = vmatpush.msra.mxu0 0.0
  %677 = vmatpush.msra.mxu0 0.0
  %678 = vmatpush.msra.mxu0 0.0
  %679 = vmatpush.msra.mxu0 0.0
  %680 = vmatpush.msra.mxu0 0.0
  %681 = vmatpush.msra.mxu0 0.0
  %682 = vmatpush.msra.mxu0 %v601
  %683 = vmatmul.f32.gmra.mxu0 %v593
  %v684 = vpop.f32.mrf.mxu0
  %v685 = vadd.f32 0.0, %v684
  %686 = vdwg.mxu0
  %687 = vmatpush.msra.mxu0 0.0
  %688 = vmatpush.msra.mxu0 0.0
  %689 = vmatpush.msra.mxu0 0.0
  %690 = vmatpush.msra.mxu0 0.0
  %691 = vmatpush.msra.mxu0 0.0
  %692 = vmatpush.msra.mxu0 0.0
  %693 = vmatpush.msra.mxu0 0.0
  %694 = vmatpush.msra.mxu0 0.0
  %695 = vmatpush.msra.mxu0 0.0
  %696 = vmatpush.msra.mxu0 0.0
  %697 = vmatpush.msra.mxu0 0.0
  %698 = vmatpush.msra.mxu0 0.0
  %699 = vmatpush.msra.mxu0 0.0
  %700 = vmatpush.msra.mxu0 0.0
  %701 = vmatpush.msra.mxu0 0.0
  %702 = vmatpush.msra.mxu0 %v603
  %703 = vmatmul.f32.gmra.mxu0 %v593
  %v704 = vpop.f32.mrf.mxu0
  %v705 = vadd.f32 0.0, %v704
  %706 = vdwg.mxu0
  %707 = vmatpush.msra.mxu0 0.0
  %708 = vmatpush.msra.mxu0 0.0
  %709 = vmatpush.msra.mxu0 0.0
  %710 = vmatpush.msra.mxu0 0.0
  %711 = vmatpush.msra.mxu0 0.0
  %712 = vmatpush.msra.mxu0 0.0
  %713 = vmatpush.msra.mxu0 0.0
  %714 = vmatpush.msra.mxu0 0.0
  %715 = vmatpush.msra.mxu0 0.0
  %716 = vmatpush.msra.mxu0 0.0
  %717 = vmatpush.msra.mxu0 0.0
  %718 = vmatpush.msra.mxu0 0.0
  %719 = vmatpush.msra.mxu0 0.0
  %720 = vmatpush.msra.mxu0 0.0
  %721 = vmatpush.msra.mxu0 0.0
  %722 = vmatpush.msra.mxu0 %v605
  %723 = vmatmul.f32.gmra.mxu0 %v593
  %v724 = vpop.f32.mrf.mxu0
  %v725 = vadd.f32 0.0, %v724
  %726 = vdwg.mxu0
  %v727 = vadd.f32 %v541, %v625
  %v728 = vadd.f32 %v542, %v645
  %v729 = vadd.f32 %v543, %v665
  %v730 = vadd.f32 %v544, %v685
  %v731 = vadd.f32 %v545, %v705
  %v732 = vadd.f32 %v546, %v725
  %v733 = vld [vmem:[%s0 + $0x4] sm:$0xff]
  %v734 = vld [vmem:[%s0 + $0xc] sm:$0xff]
  %v735 = vld [vmem:[%s0 + $0x14] sm:$0xff]
  %s736 = scalar_lea.vmem %s2, 16
  %v737 = vld [vmem:[%s736] sm:$0xf]
  %741 = vst [vmem:[#allocation1] ss:$2 sm:$0xff] %v733
  %s742 = scalar_lea.vmem [#allocation1], 16
  %743 = vst [vmem:[%s742] ss:$2 sm:$0xff] %v734
  %s744 = scalar_lea.vmem [#allocation1], 32
  %745 = vst [vmem:[%s744] ss:$2 sm:$0xff] %v735
  %v746 = vld.sshfl [vmem:[#allocation1] sm:$0xff pattern:$0x75316420]
  %v747 = vld.sshfl [vmem:[#allocation1 + $0x8] sm:$0xff pattern:$0x75316420]
  %v748 = vld.sshfl [vmem:[#allocation1 + $0x10] sm:$0xff pattern:$0x75316420]
  %v749 = vld.sshfl [vmem:[#allocation1 + $0x18] sm:$0xff pattern:$0x75316420]
  %v750 = vld.sshfl [vmem:[#allocation1 + $0x20] sm:$0xff pattern:$0x75316420]
  %v751 = vld.sshfl [vmem:[#allocation1 + $0x28] sm:$0xff pattern:$0x75316420]
  %v753 = vsel %vm68, %v737, 0
  %v755 = vsel %vm72, %v746, 0
  %v757 = vsel %vm72, %v747, 0
  %v759 = vsel %vm72, %v748, 0
  %v761 = vsel %vm72, %v749, 0
  %v763 = vsel %vm72, %v750, 0
  %v765 = vsel %vm72, %v751, 0
  %767 = vmatpush.msra.mxu0 0.0
  %768 = vmatpush.msra.mxu0 0.0
  %769 = vmatpush.msra.mxu0 0.0
  %770 = vmatpush.msra.mxu0 0.0
  %771 = vmatpush.msra.mxu0 0.0
  %772 = vmatpush.msra.mxu0 0.0
  %773 = vmatpush.msra.mxu0 0.0
  %774 = vmatpush.msra.mxu0 0.0
  %775 = vmatpush.msra.mxu0 0.0
  %776 = vmatpush.msra.mxu0 0.0
  %777 = vmatpush.msra.mxu0 0.0
  %778 = vmatpush.msra.mxu0 0.0
  %779 = vmatpush.msra.mxu0 0.0
  %780 = vmatpush.msra.mxu0 0.0
  %781 = vmatpush.msra.mxu0 0.0
  %782 = vmatpush.msra.mxu0 %v755
  %783 = vmatmul.f32.gmra.mxu0 %v753
  %v784 = vpop.f32.mrf.mxu0
  %v785 = vadd.f32 0.0, %v784
  %786 = vdwg.mxu0
  %787 = vmatpush.msra.mxu0 0.0
  %788 = vmatpush.msra.mxu0 0.0
  %789 = vmatpush.msra.mxu0 0.0
  %790 = vmatpush.msra.mxu0 0.0
  %791 = vmatpush.msra.mxu0 0.0
  %792 = vmatpush.msra.mxu0 0.0
  %793 = vmatpush.msra.mxu0 0.0
  %794 = vmatpush.msra.mxu0 0.0
  %795 = vmatpush.msra.mxu0 0.0
  %796 = vmatpush.msra.mxu0 0.0
  %797 = vmatpush.msra.mxu0 0.0
  %798 = vmatpush.msra.mxu0 0.0
  %799 = vmatpush.msra.mxu0 0.0
  %800 = vmatpush.msra.mxu0 0.0
  %801 = vmatpush.msra.mxu0 0.0
  %802 = vmatpush.msra.mxu0 %v757
  %803 = vmatmul.f32.gmra.mxu0 %v753
  %v804 = vpop.f32.mrf.mxu0
  %v805 = vadd.f32 0.0, %v804
  %806 = vdwg.mxu0
  %807 = vmatpush.msra.mxu0 0.0
  %808 = vmatpush.msra.mxu0 0.0
  %809 = vmatpush.msra.mxu0 0.0
  %810 = vmatpush.msra.mxu0 0.0
  %811 = vmatpush.msra.mxu0 0.0
  %812 = vmatpush.msra.mxu0 0.0
  %813 = vmatpush.msra.mxu0 0.0
  %814 = vmatpush.msra.mxu0 0.0
  %815 = vmatpush.msra.mxu0 0.0
  %816 = vmatpush.msra.mxu0 0.0
  %817 = vmatpush.msra.mxu0 0.0
  %818 = vmatpush.msra.mxu0 0.0
  %819 = vmatpush.msra.mxu0 0.0
  %820 = vmatpush.msra.mxu0 0.0
  %821 = vmatpush.msra.mxu0 0.0
  %822 = vmatpush.msra.mxu0 %v759
  %823 = vmatmul.f32.gmra.mxu0 %v753
  %v824 = vpop.f32.mrf.mxu0
  %v825 = vadd.f32 0.0, %v824
  %826 = vdwg.mxu0
  %827 = vmatpush.msra.mxu0 0.0
  %828 = vmatpush.msra.mxu0 0.0
  %829 = vmatpush.msra.mxu0 0.0
  %830 = vmatpush.msra.mxu0 0.0
  %831 = vmatpush.msra.mxu0 0.0
  %832 = vmatpush.msra.mxu0 0.0
  %833 = vmatpush.msra.mxu0 0.0
  %834 = vmatpush.msra.mxu0 0.0
  %835 = vmatpush.msra.mxu0 0.0
  %836 = vmatpush.msra.mxu0 0.0
  %837 = vmatpush.msra.mxu0 0.0
  %838 = vmatpush.msra.mxu0 0.0
  %839 = vmatpush.msra.mxu0 0.0
  %840 = vmatpush.msra.mxu0 0.0
  %841 = vmatpush.msra.mxu0 0.0
  %842 = vmatpush.msra.mxu0 %v761
  %843 = vmatmul.f32.gmra.mxu0 %v753
  %v844 = vpop.f32.mrf.mxu0
  %v845 = vadd.f32 0.0, %v844
  %846 = vdwg.mxu0
  %847 = vmatpush.msra.mxu0 0.0
  %848 = vmatpush.msra.mxu0 0.0
  %849 = vmatpush.msra.mxu0 0.0
  %850 = vmatpush.msra.mxu0 0.0
  %851 = vmatpush.msra.mxu0 0.0
  %852 = vmatpush.msra.mxu0 0.0
  %853 = vmatpush.msra.mxu0 0.0
  %854 = vmatpush.msra.mxu0 0.0
  %855 = vmatpush.msra.mxu0 0.0
  %856 = vmatpush.msra.mxu0 0.0
  %857 = vmatpush.msra.mxu0 0.0
  %858 = vmatpush.msra.mxu0 0.0
  %859 = vmatpush.msra.mxu0 0.0
  %860 = vmatpush.msra.mxu0 0.0
  %861 = vmatpush.msra.mxu0 0.0
  %862 = vmatpush.msra.mxu0 %v763
  %863 = vmatmul.f32.gmra.mxu0 %v753
  %v864 = vpop.f32.mrf.mxu0
  %v865 = vadd.f32 0.0, %v864
  %866 = vdwg.mxu0
  %867 = vmatpush.msra.mxu0 0.0
  %868 = vmatpush.msra.mxu0 0.0
  %869 = vmatpush.msra.mxu0 0.0
  %870 = vmatpush.msra.mxu0 0.0
  %871 = vmatpush.msra.mxu0 0.0
  %872 = vmatpush.msra.mxu0 0.0
  %873 = vmatpush.msra.mxu0 0.0
  %874 = vmatpush.msra.mxu0 0.0
  %875 = vmatpush.msra.mxu0 0.0
  %876 = vmatpush.msra.mxu0 0.0
  %877 = vmatpush.msra.mxu0 0.0
  %878 = vmatpush.msra.mxu0 0.0
  %879 = vmatpush.msra.mxu0 0.0
  %880 = vmatpush.msra.mxu0 0.0
  %881 = vmatpush.msra.mxu0 0.0
  %882 = vmatpush.msra.mxu0 %v765
  %883 = vmatmul.f32.gmra.mxu0 %v753
  %v884 = vpop.f32.mrf.mxu0
  %v885 = vadd.f32 0.0, %v884
  %886 = vdwg.mxu0
  %v887 = vadd.f32 %v727, %v785
  %v888 = vadd.f32 %v728, %v805
  %v889 = vadd.f32 %v729, %v825
  %v890 = vadd.f32 %v730, %v845
  %v891 = vadd.f32 %v731, %v865
  %v892 = vadd.f32 %v732, %v885
  %v893 = vld [vmem:[%s0 + $0x4] sm:$0xff]
  %v894 = vld [vmem:[%s0 + $0xc] sm:$0xff]
  %v895 = vld [vmem:[%s0 + $0x14] sm:$0xff]
  %s896 = scalar_lea.vmem %s2, 20
  %v897 = vld [vmem:[%s896] sm:$0xf]
  %901 = vst [vmem:[#allocation1] ss:$2 sm:$0xff] %v893
  %s902 = scalar_lea.vmem [#allocation1], 16
  %903 = vst [vmem:[%s902] ss:$2 sm:$0xff] %v894
  %s904 = scalar_lea.vmem [#allocation1], 32
  %905 = vst [vmem:[%s904] ss:$2 sm:$0xff] %v895
  %v906 = vld.sshfl [vmem:[#allocation1] sm:$0xff pattern:$0x75316420]
  %v907 = vld.sshfl [vmem:[#allocation1 + $0x8] sm:$0xff pattern:$0x75316420]
  %v908 = vld.sshfl [vmem:[#allocation1 + $0x10] sm:$0xff pattern:$0x75316420]
  %v909 = vld.sshfl [vmem:[#allocation1 + $0x18] sm:$0xff pattern:$0x75316420]
  %v910 = vld.sshfl [vmem:[#allocation1 + $0x20] sm:$0xff pattern:$0x75316420]
  %v911 = vld.sshfl [vmem:[#allocation1 + $0x28] sm:$0xff pattern:$0x75316420]
  %912 = vrot.lane.b32.xlu0 %v906, 127
  %v913 = vpop.permute.xlu0 %912
  %914 = vrot.lane.b32.xlu0 %v907, 127
  %v915 = vpop.permute.xlu0 %914
  %916 = vrot.lane.b32.xlu0 %v908, 127
  %v917 = vpop.permute.xlu0 %916
  %918 = vrot.lane.b32.xlu0 %v909, 127
  %v919 = vpop.permute.xlu0 %918
  %920 = vrot.lane.b32.xlu0 %v910, 127
  %v921 = vpop.permute.xlu0 %920
  %922 = vrot.lane.b32.xlu0 %v911, 127
  %v923 = vpop.permute.xlu0 %922
  %vm924 = vcmask 1039360
  %v925 = vsel %vm924, %v913, %v915
  %v926 = vsel %vm924, %v915, %v917
  %v927 = vsel %vm924, %v917, %v919
  %v928 = vsel %vm924, %v919, %v921
  %v929 = vsel %vm924, %v921, %v923
  %v931 = vsel %vm68, %v897, 0
  %v933 = vsel %vm72, %v925, 0
  %v935 = vsel %vm72, %v926, 0
  %v937 = vsel %vm72, %v927, 0
  %v939 = vsel %vm72, %v928, 0
  %v941 = vsel %vm72, %v929, 0
  %v943 = vsel %vm72, %v923, 0
  %945 = vmatpush.msra.mxu0 0.0
  %946 = vmatpush.msra.mxu0 0.0
  %947 = vmatpush.msra.mxu0 0.0
  %948 = vmatpush.msra.mxu0 0.0
  %949 = vmatpush.msra.mxu0 0.0
  %950 = vmatpush.msra.mxu0 0.0
  %951 = vmatpush.msra.mxu0 0.0
  %952 = vmatpush.msra.mxu0 0.0
  %953 = vmatpush.msra.mxu0 0.0
  %954 = vmatpush.msra.mxu0 0.0
  %955 = vmatpush.msra.mxu0 0.0
  %956 = vmatpush.msra.mxu0 0.0
  %957 = vmatpush.msra.mxu0 0.0
  %958 = vmatpush.msra.mxu0 0.0
  %959 = vmatpush.msra.mxu0 0.0
  %960 = vmatpush.msra.mxu0 %v933
  %961 = vmatmul.f32.gmra.mxu0 %v931
  %v962 = vpop.f32.mrf.mxu0
  %v963 = vadd.f32 0.0, %v962
  %964 = vdwg.mxu0
  %965 = vmatpush.msra.mxu0 0.0
  %966 = vmatpush.msra.mxu0 0.0
  %967 = vmatpush.msra.mxu0 0.0
  %968 = vmatpush.msra.mxu0 0.0
  %969 = vmatpush.msra.mxu0 0.0
  %970 = vmatpush.msra.mxu0 0.0
  %971 = vmatpush.msra.mxu0 0.0
  %972 = vmatpush.msra.mxu0 0.0
  %973 = vmatpush.msra.mxu0 0.0
  %974 = vmatpush.msra.mxu0 0.0
  %975 = vmatpush.msra.mxu0 0.0
  %976 = vmatpush.msra.mxu0 0.0
  %977 = vmatpush.msra.mxu0 0.0
  %978 = vmatpush.msra.mxu0 0.0
  %979 = vmatpush.msra.mxu0 0.0
  %980 = vmatpush.msra.mxu0 %v935
  %981 = vmatmul.f32.gmra.mxu0 %v931
  %v982 = vpop.f32.mrf.mxu0
  %v983 = vadd.f32 0.0, %v982
  %984 = vdwg.mxu0
  %985 = vmatpush.msra.mxu0 0.0
  %986 = vmatpush.msra.mxu0 0.0
  %987 = vmatpush.msra.mxu0 0.0
  %988 = vmatpush.msra.mxu0 0.0
  %989 = vmatpush.msra.mxu0 0.0
  %990 = vmatpush.msra.mxu0 0.0
  %991 = vmatpush.msra.mxu0 0.0
  %992 = vmatpush.msra.mxu0 0.0
  %993 = vmatpush.msra.mxu0 0.0
  %994 = vmatpush.msra.mxu0 0.0
  %995 = vmatpush.msra.mxu0 0.0
  %996 = vmatpush.msra.mxu0 0.0
  %997 = vmatpush.msra.mxu0 0.0
  %998 = vmatpush.msra.mxu0 0.0
  %999 = vmatpush.msra.mxu0 0.0
  %1000 = vmatpush.msra.mxu0 %v937
  %1001 = vmatmul.f32.gmra.mxu0 %v931
  %v1002 = vpop.f32.mrf.mxu0
  %v1003 = vadd.f32 0.0, %v1002
  %1004 = vdwg.mxu0
  %1005 = vmatpush.msra.mxu0 0.0
  %1006 = vmatpush.msra.mxu0 0.0
  %1007 = vmatpush.msra.mxu0 0.0
  %1008 = vmatpush.msra.mxu0 0.0
  %1009 = vmatpush.msra.mxu0 0.0
  %1010 = vmatpush.msra.mxu0 0.0
  %1011 = vmatpush.msra.mxu0 0.0
  %1012 = vmatpush.msra.mxu0 0.0
  %1013 = vmatpush.msra.mxu0 0.0
  %1014 = vmatpush.msra.mxu0 0.0
  %1015 = vmatpush.msra.mxu0 0.0
  %1016 = vmatpush.msra.mxu0 0.0
  %1017 = vmatpush.msra.mxu0 0.0
  %1018 = vmatpush.msra.mxu0 0.0
  %1019 = vmatpush.msra.mxu0 0.0
  %1020 = vmatpush.msra.mxu0 %v939
  %1021 = vmatmul.f32.gmra.mxu0 %v931
  %v1022 = vpop.f32.mrf.mxu0
  %v1023 = vadd.f32 0.0, %v1022
  %1024 = vdwg.mxu0
  %1025 = vmatpush.msra.mxu0 0.0
  %1026 = vmatpush.msra.mxu0 0.0
  %1027 = vmatpush.msra.mxu0 0.0
  %1028 = vmatpush.msra.mxu0 0.0
  %1029 = vmatpush.msra.mxu0 0.0
  %1030 = vmatpush.msra.mxu0 0.0
  %1031 = vmatpush.msra.mxu0 0.0
  %1032 = vmatpush.msra.mxu0 0.0
  %1033 = vmatpush.msra.mxu0 0.0
  %1034 = vmatpush.msra.mxu0 0.0
  %1035 = vmatpush.msra.mxu0 0.0
  %1036 = vmatpush.msra.mxu0 0.0
  %1037 = vmatpush.msra.mxu0 0.0
  %1038 = vmatpush.msra.mxu0 0.0
  %1039 = vmatpush.msra.mxu0 0.0
  %1040 = vmatpush.msra.mxu0 %v941
  %1041 = vmatmul.f32.gmra.mxu0 %v931
  %v1042 = vpop.f32.mrf.mxu0
  %v1043 = vadd.f32 0.0, %v1042
  %1044 = vdwg.mxu0
  %1045 = vmatpush.msra.mxu0 0.0
  %1046 = vmatpush.msra.mxu0 0.0
  %1047 = vmatpush.msra.mxu0 0.0
  %1048 = vmatpush.msra.mxu0 0.0
  %1049 = vmatpush.msra.mxu0 0.0
  %1050 = vmatpush.msra.mxu0 0.0
  %1051 = vmatpush.msra.mxu0 0.0
  %1052 = vmatpush.msra.mxu0 0.0
  %1053 = vmatpush.msra.mxu0 0.0
  %1054 = vmatpush.msra.mxu0 0.0
  %1055 = vmatpush.msra.mxu0 0.0
  %1056 = vmatpush.msra.mxu0 0.0
  %1057 = vmatpush.msra.mxu0 0.0
  %1058 = vmatpush.msra.mxu0 0.0
  %1059 = vmatpush.msra.mxu0 0.0
  %1060 = vmatpush.msra.mxu0 %v943
  %1061 = vmatmul.f32.gmra.mxu0 %v931
  %v1062 = vpop.f32.mrf.mxu0
  %v1063 = vadd.f32 0.0, %v1062
  %1064 = vdwg.mxu0
  %v1065 = vadd.f32 %v887, %v963
  %v1066 = vadd.f32 %v888, %v983
  %v1067 = vadd.f32 %v889, %v1003
  %v1068 = vadd.f32 %v890, %v1023
  %v1069 = vadd.f32 %v891, %v1043
  %v1070 = vadd.f32 %v892, %v1063
  %v1071 = vld [vmem:[%s0 + $0x4] sm:$0xff]
  %v1072 = vld [vmem:[%s0 + $0xc] sm:$0xff]
  %v1073 = vld [vmem:[%s0 + $0x14] sm:$0xff]
  %s1074 = scalar_lea.vmem %s2, 24
  %v1075 = vld [vmem:[%s1074] sm:$0xf]
  %1079 = vst [vmem:[#allocation1] ss:$2 sm:$0xff] %v1071
  %s1080 = scalar_lea.vmem [#allocation1], 16
  %1081 = vst [vmem:[%s1080] ss:$2 sm:$0xff] %v1072
  %s1082 = scalar_lea.vmem [#allocation1], 32
  %1083 = vst [vmem:[%s1082] ss:$2 sm:$0xff] %v1073
  %v1084 = vld.sshfl [vmem:[#allocation1] sm:$0xff pattern:$0x75316420]
  %v1085 = vld.sshfl [vmem:[#allocation1 + $0x8] sm:$0xff pattern:$0x75316420]
  %v1086 = vld.sshfl [vmem:[#allocation1 + $0x10] sm:$0xff pattern:$0x75316420]
  %v1087 = vld.sshfl [vmem:[#allocation1 + $0x18] sm:$0xff pattern:$0x75316420]
  %v1088 = vld.sshfl [vmem:[#allocation1 + $0x20] sm:$0xff pattern:$0x75316420]
  %v1089 = vld.sshfl [vmem:[#allocation1 + $0x28] sm:$0xff pattern:$0x75316420]
  %1090 = vrot.lane.b32.xlu0 %v1084, 111
  %v1091 = vpop.permute.xlu0 %1090
  %1092 = vrot.lane.b32.xlu0 %v1085, 111
  %v1093 = vpop.permute.xlu0 %1092
  %1094 = vrot.lane.b32.xlu0 %v1086, 111
  %v1095 = vpop.permute.xlu0 %1094
  %1096 = vrot.lane.b32.xlu0 %v1087, 111
  %v1097 = vpop.permute.xlu0 %1096
  %1098 = vrot.lane.b32.xlu0 %v1088, 111
  %v1099 = vpop.permute.xlu0 %1098
  %1100 = vrot.lane.b32.xlu0 %v1089, 111
  %v1101 = vpop.permute.xlu0 %1100
  %vm1102 = vcmask 908288
  %v1103 = vsel %vm1102, %v1091, %v1093
  %v1104 = vsel %vm1102, %v1093, %v1095
  %v1105 = vsel %vm1102, %v1095, %v1097
  %v1106 = vsel %vm1102, %v1097, %v1099
  %v1107 = vsel %vm1102, %v1099, %v1101
  %v1109 = vsel %vm68, %v1075, 0
  %v1111 = vsel %vm72, %v1103, 0
  %v1113 = vsel %vm72, %v1104, 0
  %v1115 = vsel %vm72, %v1105, 0
  %v1117 = vsel %vm72, %v1106, 0
  %v1119 = vsel %vm72, %v1107, 0
  %v1121 = vsel %vm72, %v1101, 0
  %1123 = vmatpush.msra.mxu0 0.0
  %1124 = vmatpush.msra.mxu0 0.0
  %1125 = vmatpush.msra.mxu0 0.0
  %1126 = vmatpush.msra.mxu0 0.0
  %1127 = vmatpush.msra.mxu0 0.0
  %1128 = vmatpush.msra.mxu0 0.0
  %1129 = vmatpush.msra.mxu0 0.0
  %1130 = vmatpush.msra.mxu0 0.0
  %1131 = vmatpush.msra.mxu0 0.0
  %1132 = vmatpush.msra.mxu0 0.0
  %1133 = vmatpush.msra.mxu0 0.0
  %1134 = vmatpush.msra.mxu0 0.0
  %1135 = vmatpush.msra.mxu0 0.0
  %1136 = vmatpush.msra.mxu0 0.0
  %1137 = vmatpush.msra.mxu0 0.0
  %1138 = vmatpush.msra.mxu0 %v1111
  %1139 = vmatmul.f32.gmra.mxu0 %v1109
  %v1140 = vpop.f32.mrf.mxu0
  %v1141 = vadd.f32 0.0, %v1140
  %1142 = vdwg.mxu0
  %1143 = vmatpush.msra.mxu0 0.0
  %1144 = vmatpush.msra.mxu0 0.0
  %1145 = vmatpush.msra.mxu0 0.0
  %1146 = vmatpush.msra.mxu0 0.0
  %1147 = vmatpush.msra.mxu0 0.0
  %1148 = vmatpush.msra.mxu0 0.0
  %1149 = vmatpush.msra.mxu0 0.0
  %1150 = vmatpush.msra.mxu0 0.0
  %1151 = vmatpush.msra.mxu0 0.0
  %1152 = vmatpush.msra.mxu0 0.0
  %1153 = vmatpush.msra.mxu0 0.0
  %1154 = vmatpush.msra.mxu0 0.0
  %1155 = vmatpush.msra.mxu0 0.0
  %1156 = vmatpush.msra.mxu0 0.0
  %1157 = vmatpush.msra.mxu0 0.0
  %1158 = vmatpush.msra.mxu0 %v1113
  %1159 = vmatmul.f32.gmra.mxu0 %v1109
  %v1160 = vpop.f32.mrf.mxu0
  %v1161 = vadd.f32 0.0, %v1160
  %1162 = vdwg.mxu0
  %1163 = vmatpush.msra.mxu0 0.0
  %1164 = vmatpush.msra.mxu0 0.0
  %1165 = vmatpush.msra.mxu0 0.0
  %1166 = vmatpush.msra.mxu0 0.0
  %1167 = vmatpush.msra.mxu0 0.0
  %1168 = vmatpush.msra.mxu0 0.0
  %1169 = vmatpush.msra.mxu0 0.0
  %1170 = vmatpush.msra.mxu0 0.0
  %1171 = vmatpush.msra.mxu0 0.0
  %1172 = vmatpush.msra.mxu0 0.0
  %1173 = vmatpush.msra.mxu0 0.0
  %1174 = vmatpush.msra.mxu0 0.0
  %1175 = vmatpush.msra.mxu0 0.0
  %1176 = vmatpush.msra.mxu0 0.0
  %1177 = vmatpush.msra.mxu0 0.0
  %1178 = vmatpush.msra.mxu0 %v1115
  %1179 = vmatmul.f32.gmra.mxu0 %v1109
  %v1180 = vpop.f32.mrf.mxu0
  %v1181 = vadd.f32 0.0, %v1180
  %1182 = vdwg.mxu0
  %1183 = vmatpush.msra.mxu0 0.0
  %1184 = vmatpush.msra.mxu0 0.0
  %1185 = vmatpush.msra.mxu0 0.0
  %1186 = vmatpush.msra.mxu0 0.0
  %1187 = vmatpush.msra.mxu0 0.0
  %1188 = vmatpush.msra.mxu0 0.0
  %1189 = vmatpush.msra.mxu0 0.0
  %1190 = vmatpush.msra.mxu0 0.0
  %1191 = vmatpush.msra.mxu0 0.0
  %1192 = vmatpush.msra.mxu0 0.0
  %1193 = vmatpush.msra.mxu0 0.0
  %1194 = vmatpush.msra.mxu0 0.0
  %1195 = vmatpush.msra.mxu0 0.0
  %1196 = vmatpush.msra.mxu0 0.0
  %1197 = vmatpush.msra.mxu0 0.0
  %1198 = vmatpush.msra.mxu0 %v1117
  %1199 = vmatmul.f32.gmra.mxu0 %v1109
  %v1200 = vpop.f32.mrf.mxu0
  %v1201 = vadd.f32 0.0, %v1200
  %1202 = vdwg.mxu0
  %1203 = vmatpush.msra.mxu0 0.0
  %1204 = vmatpush.msra.mxu0 0.0
  %1205 = vmatpush.msra.mxu0 0.0
  %1206 = vmatpush.msra.mxu0 0.0
  %1207 = vmatpush.msra.mxu0 0.0
  %1208 = vmatpush.msra.mxu0 0.0
  %1209 = vmatpush.msra.mxu0 0.0
  %1210 = vmatpush.msra.mxu0 0.0
  %1211 = vmatpush.msra.mxu0 0.0
  %1212 = vmatpush.msra.mxu0 0.0
  %1213 = vmatpush.msra.mxu0 0.0
  %1214 = vmatpush.msra.mxu0 0.0
  %1215 = vmatpush.msra.mxu0 0.0
  %1216 = vmatpush.msra.mxu0 0.0
  %1217 = vmatpush.msra.mxu0 0.0
  %1218 = vmatpush.msra.mxu0 %v1119
  %1219 = vmatmul.f32.gmra.mxu0 %v1109
  %v1220 = vpop.f32.mrf.mxu0
  %v1221 = vadd.f32 0.0, %v1220
  %1222 = vdwg.mxu0
  %1223 = vmatpush.msra.mxu0 0.0
  %1224 = vmatpush.msra.mxu0 0.0
  %1225 = vmatpush.msra.mxu0 0.0
  %1226 = vmatpush.msra.mxu0 0.0
  %1227 = vmatpush.msra.mxu0 0.0
  %1228 = vmatpush.msra.mxu0 0.0
  %1229 = vmatpush.msra.mxu0 0.0
  %1230 = vmatpush.msra.mxu0 0.0
  %1231 = vmatpush.msra.mxu0 0.0
  %1232 = vmatpush.msra.mxu0 0.0
  %1233 = vmatpush.msra.mxu0 0.0
  %1234 = vmatpush.msra.mxu0 0.0
  %1235 = vmatpush.msra.mxu0 0.0
  %1236 = vmatpush.msra.mxu0 0.0
  %1237 = vmatpush.msra.mxu0 0.0
  %1238 = vmatpush.msra.mxu0 %v1121
  %1239 = vmatmul.f32.gmra.mxu0 %v1109
  %v1240 = vpop.f32.mrf.mxu0
  %v1241 = vadd.f32 0.0, %v1240
  %1242 = vdwg.mxu0
  %v1243 = vadd.f32 %v1065, %v1141
  %v1244 = vadd.f32 %v1066, %v1161
  %v1245 = vadd.f32 %v1067, %v1181
  %v1246 = vadd.f32 %v1068, %v1201
  %v1247 = vadd.f32 %v1069, %v1221
  %v1248 = vadd.f32 %v1070, %v1241
  %v1249 = vld [vmem:[%s0 + $0x4] sm:$0xff]
  %v1250 = vld [vmem:[%s0 + $0xc] sm:$0xff]
  %v1251 = vld [vmem:[%s0 + $0x14] sm:$0xff]
  %s1252 = scalar_lea.vmem %s2, 28
  %v1253 = vld [vmem:[%s1252] sm:$0xf]
  %1257 = vst [vmem:[#allocation1] ss:$2 sm:$0xff] %v1249
  %s1258 = scalar_lea.vmem [#allocation1], 16
  %1259 = vst [vmem:[%s1258] ss:$2 sm:$0xff] %v1250
  %s1260 = scalar_lea.vmem [#allocation1], 32
  %1261 = vst [vmem:[%s1260] ss:$2 sm:$0xff] %v1251
  %v1262 = vld.sshfl [vmem:[#allocation1] sm:$0xff pattern:$0x75316420]
  %v1263 = vld.sshfl [vmem:[#allocation1 + $0x8] sm:$0xff pattern:$0x75316420]
  %v1264 = vld.sshfl [vmem:[#allocation1 + $0x10] sm:$0xff pattern:$0x75316420]
  %v1265 = vld.sshfl [vmem:[#allocation1 + $0x18] sm:$0xff pattern:$0x75316420]
  %v1266 = vld.sshfl [vmem:[#allocation1 + $0x20] sm:$0xff pattern:$0x75316420]
  %v1267 = vld.sshfl [vmem:[#allocation1 + $0x28] sm:$0xff pattern:$0x75316420]
  %1268 = vrot.lane.b32.xlu0 %v1262, 110
  %v1269 = vpop.permute.xlu0 %1268
  %1270 = vrot.lane.b32.xlu0 %v1263, 110
  %v1271 = vpop.permute.xlu0 %1270
  %1272 = vrot.lane.b32.xlu0 %v1264, 110
  %v1273 = vpop.permute.xlu0 %1272
  %1274 = vrot.lane.b32.xlu0 %v1265, 110
  %v1275 = vpop.permute.xlu0 %1274
  %1276 = vrot.lane.b32.xlu0 %v1266, 110
  %v1277 = vpop.permute.xlu0 %1276
  %1278 = vrot.lane.b32.xlu0 %v1267, 110
  %v1279 = vpop.permute.xlu0 %1278
  %vm1280 = vcmask 900096
  %v1281 = vsel %vm1280, %v1269, %v1271
  %v1282 = vsel %vm1280, %v1271, %v1273
  %v1283 = vsel %vm1280, %v1273, %v1275
  %v1284 = vsel %vm1280, %v1275, %v1277
  %v1285 = vsel %vm1280, %v1277, %v1279
  %v1287 = vsel %vm68, %v1253, 0
  %v1289 = vsel %vm72, %v1281, 0
  %v1291 = vsel %vm72, %v1282, 0
  %v1293 = vsel %vm72, %v1283, 0
  %v1295 = vsel %vm72, %v1284, 0
  %v1297 = vsel %vm72, %v1285, 0
  %v1299 = vsel %vm72, %v1279, 0
  %1301 = vmatpush.msra.mxu0 0.0
  %1302 = vmatpush.msra.mxu0 0.0
  %1303 = vmatpush.msra.mxu0 0.0
  %1304 = vmatpush.msra.mxu0 0.0
  %1305 = vmatpush.msra.mxu0 0.0
  %1306 = vmatpush.msra.mxu0 0.0
  %1307 = vmatpush.msra.mxu0 0.0
  %1308 = vmatpush.msra.mxu0 0.0
  %1309 = vmatpush.msra.mxu0 0.0
  %1310 = vmatpush.msra.mxu0 0.0
  %1311 = vmatpush.msra.mxu0 0.0
  %1312 = vmatpush.msra.mxu0 0.0
  %1313 = vmatpush.msra.mxu0 0.0
  %1314 = vmatpush.msra.mxu0 0.0
  %1315 = vmatpush.msra.mxu0 0.0
  %1316 = vmatpush.msra.mxu0 %v1289
  %1317 = vmatmul.f32.gmra.mxu0 %v1287
  %v1318 = vpop.f32.mrf.mxu0
  %v1319 = vadd.f32 0.0, %v1318
  %1320 = vdwg.mxu0
  %1321 = vmatpush.msra.mxu0 0.0
  %1322 = vmatpush.msra.mxu0 0.0
  %1323 = vmatpush.msra.mxu0 0.0
  %1324 = vmatpush.msra.mxu0 0.0
  %1325 = vmatpush.msra.mxu0 0.0
  %1326 = vmatpush.msra.mxu0 0.0
  %1327 = vmatpush.msra.mxu0 0.0
  %1328 = vmatpush.msra.mxu0 0.0
  %1329 = vmatpush.msra.mxu0 0.0
  %1330 = vmatpush.msra.mxu0 0.0
  %1331 = vmatpush.msra.mxu0 0.0
  %1332 = vmatpush.msra.mxu0 0.0
  %1333 = vmatpush.msra.mxu0 0.0
  %1334 = vmatpush.msra.mxu0 0.0
  %1335 = vmatpush.msra.mxu0 0.0
  %1336 = vmatpush.msra.mxu0 %v1291
  %1337 = vmatmul.f32.gmra.mxu0 %v1287
  %v1338 = vpop.f32.mrf.mxu0
  %v1339 = vadd.f32 0.0, %v1338
  %1340 = vdwg.mxu0
  %1341 = vmatpush.msra.mxu0 0.0
  %1342 = vmatpush.msra.mxu0 0.0
  %1343 = vmatpush.msra.mxu0 0.0
  %1344 = vmatpush.msra.mxu0 0.0
  %1345 = vmatpush.msra.mxu0 0.0
  %1346 = vmatpush.msra.mxu0 0.0
  %1347 = vmatpush.msra.mxu0 0.0
  %1348 = vmatpush.msra.mxu0 0.0
  %1349 = vmatpush.msra.mxu0 0.0
  %1350 = vmatpush.msra.mxu0 0.0
  %1351 = vmatpush.msra.mxu0 0.0
  %1352 = vmatpush.msra.mxu0 0.0
  %1353 = vmatpush.msra.mxu0 0.0
  %1354 = vmatpush.msra.mxu0 0.0
  %1355 = vmatpush.msra.mxu0 0.0
  %1356 = vmatpush.msra.mxu0 %v1293
  %1357 = vmatmul.f32.gmra.mxu0 %v1287
  %v1358 = vpop.f32.mrf.mxu0
  %v1359 = vadd.f32 0.0, %v1358
  %1360 = vdwg.mxu0
  %1361 = vmatpush.msra.mxu0 0.0
  %1362 = vmatpush.msra.mxu0 0.0
  %1363 = vmatpush.msra.mxu0 0.0
  %1364 = vmatpush.msra.mxu0 0.0
  %1365 = vmatpush.msra.mxu0 0.0
  %1366 = vmatpush.msra.mxu0 0.0
  %1367 = vmatpush.msra.mxu0 0.0
  %1368 = vmatpush.msra.mxu0 0.0
  %1369 = vmatpush.msra.mxu0 0.0
  %1370 = vmatpush.msra.mxu0 0.0
  %1371 = vmatpush.msra.mxu0 0.0
  %1372 = vmatpush.msra.mxu0 0.0
  %1373 = vmatpush.msra.mxu0 0.0
  %1374 = vmatpush.msra.mxu0 0.0
  %1375 = vmatpush.msra.mxu0 0.0
  %1376 = vmatpush.msra.mxu0 %v1295
  %1377 = vmatmul.f32.gmra.mxu0 %v1287
  %v1378 = vpop.f32.mrf.mxu0
  %v1379 = vadd.f32 0.0, %v1378
  %1380 = vdwg.mxu0
  %1381 = vmatpush.msra.mxu0 0.0
  %1382 = vmatpush.msra.mxu0 0.0
  %1383 = vmatpush.msra.mxu0 0.0
  %1384 = vmatpush.msra.mxu0 0.0
  %1385 = vmatpush.msra.mxu0 0.0
  %1386 = vmatpush.msra.mxu0 0.0
  %1387 = vmatpush.msra.mxu0 0.0
  %1388 = vmatpush.msra.mxu0 0.0
  %1389 = vmatpush.msra.mxu0 0.0
  %1390 = vmatpush.msra.mxu0 0.0
  %1391 = vmatpush.msra.mxu0 0.0
  %1392 = vmatpush.msra.mxu0 0.0
  %1393 = vmatpush.msra.mxu0 0.0
  %1394 = vmatpush.msra.mxu0 0.0
  %1395 = vmatpush.msra.mxu0 0.0
  %1396 = vmatpush.msra.mxu0 %v1297
  %1397 = vmatmul.f32.gmra.mxu0 %v1287
  %v1398 = vpop.f32.mrf.mxu0
  %v1399 = vadd.f32 0.0, %v1398
  %1400 = vdwg.mxu0
  %1401 = vmatpush.msra.mxu0 0.0
  %1402 = vmatpush.msra.mxu0 0.0
  %1403 = vmatpush.msra.mxu0 0.0
  %1404 = vmatpush.msra.mxu0 0.0
  %1405 = vmatpush.msra.mxu0 0.0
  %1406 = vmatpush.msra.mxu0 0.0
  %1407 = vmatpush.msra.mxu0 0.0
  %1408 = vmatpush.msra.mxu0 0.0
  %1409 = vmatpush.msra.mxu0 0.0
  %1410 = vmatpush.msra.mxu0 0.0
  %1411 = vmatpush.msra.mxu0 0.0
  %1412 = vmatpush.msra.mxu0 0.0
  %1413 = vmatpush.msra.mxu0 0.0
  %1414 = vmatpush.msra.mxu0 0.0
  %1415 = vmatpush.msra.mxu0 0.0
  %1416 = vmatpush.msra.mxu0 %v1299
  %1417 = vmatmul.f32.gmra.mxu0 %v1287
  %v1418 = vpop.f32.mrf.mxu0
  %v1419 = vadd.f32 0.0, %v1418
  %1420 = vdwg.mxu0
  %v1421 = vadd.f32 %v1243, %v1319
  %v1422 = vadd.f32 %v1244, %v1339
  %v1423 = vadd.f32 %v1245, %v1359
  %v1424 = vadd.f32 %v1246, %v1379
  %v1425 = vadd.f32 %v1247, %v1399
  %v1426 = vadd.f32 %v1248, %v1419
  %v1427 = vld [vmem:[%s0 + $0x4] sm:$0xff]
  %v1428 = vld [vmem:[%s0 + $0xc] sm:$0xff]
  %v1429 = vld [vmem:[%s0 + $0x14] sm:$0xff]
  %s1430 = scalar_lea.vmem %s2, 32
  %v1431 = vld [vmem:[%s1430] sm:$0xf]
  %1435 = vst [vmem:[#allocation1] ss:$2 sm:$0xff] %v1427
  %s1436 = scalar_lea.vmem [#allocation1], 16
  %1437 = vst [vmem:[%s1436] ss:$2 sm:$0xff] %v1428
  %s1438 = scalar_lea.vmem [#allocation1], 32
  %1439 = vst [vmem:[%s1438] ss:$2 sm:$0xff] %v1429
  %v1440 = vld.sshfl [vmem:[#allocation1] sm:$0xff pattern:$0x75316420]
  %v1441 = vld.sshfl [vmem:[#allocation1 + $0x8] sm:$0xff pattern:$0x75316420]
  %v1442 = vld.sshfl [vmem:[#allocation1 + $0x10] sm:$0xff pattern:$0x75316420]
  %v1443 = vld.sshfl [vmem:[#allocation1 + $0x18] sm:$0xff pattern:$0x75316420]
  %v1444 = vld.sshfl [vmem:[#allocation1 + $0x20] sm:$0xff pattern:$0x75316420]
  %v1445 = vld.sshfl [vmem:[#allocation1 + $0x28] sm:$0xff pattern:$0x75316420]
  %1446 = vrot.lane.b32.xlu0 %v1440, 109
  %v1447 = vpop.permute.xlu0 %1446
  %1448 = vrot.lane.b32.xlu0 %v1441, 109
  %v1449 = vpop.permute.xlu0 %1448
  %1450 = vrot.lane.b32.xlu0 %v1442, 109
  %v1451 = vpop.permute.xlu0 %1450
  %1452 = vrot.lane.b32.xlu0 %v1443, 109
  %v1453 = vpop.permute.xlu0 %1452
  %1454 = vrot.lane.b32.xlu0 %v1444, 109
  %v1455 = vpop.permute.xlu0 %1454
  %1456 = vrot.lane.b32.xlu0 %v1445, 109
  %v1457 = vpop.permute.xlu0 %1456
  %vm1458 = vcmask 891904
  %v1459 = vsel %vm1458, %v1447, %v1449
  %v1460 = vsel %vm1458, %v1449, %v1451
  %v1461 = vsel %vm1458, %v1451, %v1453
  %v1462 = vsel %vm1458, %v1453, %v1455
  %v1463 = vsel %vm1458, %v1455, %v1457
  %v1465 = vsel %vm68, %v1431, 0
  %v1467 = vsel %vm72, %v1459, 0
  %v1469 = vsel %vm72, %v1460, 0
  %v1471 = vsel %vm72, %v1461, 0
  %v1473 = vsel %vm72, %v1462, 0
  %v1475 = vsel %vm72, %v1463, 0
  %v1477 = vsel %vm72, %v1457, 0
  %1479 = vmatpush.msra.mxu0 0.0
  %1480 = vmatpush.msra.mxu0 0.0
  %1481 = vmatpush.msra.mxu0 0.0
  %1482 = vmatpush.msra.mxu0 0.0
  %1483 = vmatpush.msra.mxu0 0.0
  %1484 = vmatpush.msra.mxu0 0.0
  %1485 = vmatpush.msra.mxu0 0.0
  %1486 = vmatpush.msra.mxu0 0.0
  %1487 = vmatpush.msra.mxu0 0.0
  %1488 = vmatpush.msra.mxu0 0.0
  %1489 = vmatpush.msra.mxu0 0.0
  %1490 = vmatpush.msra.mxu0 0.0
  %1491 = vmatpush.msra.mxu0 0.0
  %1492 = vmatpush.msra.mxu0 0.0
  %1493 = vmatpush.msra.mxu0 0.0
  %1494 = vmatpush.msra.mxu0 %v1467
  %1495 = vmatmul.f32.gmra.mxu0 %v1465
  %v1496 = vpop.f32.mrf.mxu0
  %v1497 = vadd.f32 0.0, %v1496
  %1498 = vdwg.mxu0
  %1499 = vmatpush.msra.mxu0 0.0
  %1500 = vmatpush.msra.mxu0 0.0
  %1501 = vmatpush.msra.mxu0 0.0
  %1502 = vmatpush.msra.mxu0 0.0
  %1503 = vmatpush.msra.mxu0 0.0
  %1504 = vmatpush.msra.mxu0 0.0
  %1505 = vmatpush.msra.mxu0 0.0
  %1506 = vmatpush.msra.mxu0 0.0
  %1507 = vmatpush.msra.mxu0 0.0
  %1508 = vmatpush.msra.mxu0 0.0
  %1509 = vmatpush.msra.mxu0 0.0
  %1510 = vmatpush.msra.mxu0 0.0
  %1511 = vmatpush.msra.mxu0 0.0
  %1512 = vmatpush.msra.mxu0 0.0
  %1513 = vmatpush.msra.mxu0 0.0
  %1514 = vmatpush.msra.mxu0 %v1469
  %1515 = vmatmul.f32.gmra.mxu0 %v1465
  %v1516 = vpop.f32.mrf.mxu0
  %v1517 = vadd.f32 0.0, %v1516
  %1518 = vdwg.mxu0
  %1519 = vmatpush.msra.mxu0 0.0
  %1520 = vmatpush.msra.mxu0 0.0
  %1521 = vmatpush.msra.mxu0 0.0
  %1522 = vmatpush.msra.mxu0 0.0
  %1523 = vmatpush.msra.mxu0 0.0
  %1524 = vmatpush.msra.mxu0 0.0
  %1525 = vmatpush.msra.mxu0 0.0
  %1526 = vmatpush.msra.mxu0 0.0
  %1527 = vmatpush.msra.mxu0 0.0
  %1528 = vmatpush.msra.mxu0 0.0
  %1529 = vmatpush.msra.mxu0 0.0
  %1530 = vmatpush.msra.mxu0 0.0
  %1531 = vmatpush.msra.mxu0 0.0
  %1532 = vmatpush.msra.mxu0 0.0
  %1533 = vmatpush.msra.mxu0 0.0
  %1534 = vmatpush.msra.mxu0 %v1471
  %1535 = vmatmul.f32.gmra.mxu0 %v1465
  %v1536 = vpop.f32.mrf.mxu0
  %v1537 = vadd.f32 0.0, %v1536
  %1538 = vdwg.mxu0
  %1539 = vmatpush.msra.mxu0 0.0
  %1540 = vmatpush.msra.mxu0 0.0
  %1541 = vmatpush.msra.mxu0 0.0
  %1542 = vmatpush.msra.mxu0 0.0
  %1543 = vmatpush.msra.mxu0 0.0
  %1544 = vmatpush.msra.mxu0 0.0
  %1545 = vmatpush.msra.mxu0 0.0
  %1546 = vmatpush.msra.mxu0 0.0
  %1547 = vmatpush.msra.mxu0 0.0
  %1548 = vmatpush.msra.mxu0 0.0
  %1549 = vmatpush.msra.mxu0 0.0
  %1550 = vmatpush.msra.mxu0 0.0
  %1551 = vmatpush.msra.mxu0 0.0
  %1552 = vmatpush.msra.mxu0 0.0
  %1553 = vmatpush.msra.mxu0 0.0
  %1554 = vmatpush.msra.mxu0 %v1473
  %1555 = vmatmul.f32.gmra.mxu0 %v1465
  %v1556 = vpop.f32.mrf.mxu0
  %v1557 = vadd.f32 0.0, %v1556
  %1558 = vdwg.mxu0
  %1559 = vmatpush.msra.mxu0 0.0
  %1560 = vmatpush.msra.mxu0 0.0
  %1561 = vmatpush.msra.mxu0 0.0
  %1562 = vmatpush.msra.mxu0 0.0
  %1563 = vmatpush.msra.mxu0 0.0
  %1564 = vmatpush.msra.mxu0 0.0
  %1565 = vmatpush.msra.mxu0 0.0
  %1566 = vmatpush.msra.mxu0 0.0
  %1567 = vmatpush.msra.mxu0 0.0
  %1568 = vmatpush.msra.mxu0 0.0
  %1569 = vmatpush.msra.mxu0 0.0
  %1570 = vmatpush.msra.mxu0 0.0
  %1571 = vmatpush.msra.mxu0 0.0
  %1572 = vmatpush.msra.mxu0 0.0
  %1573 = vmatpush.msra.mxu0 0.0
  %1574 = vmatpush.msra.mxu0 %v1475
  %1575 = vmatmul.f32.gmra.mxu0 %v1465
  %v1576 = vpop.f32.mrf.mxu0
  %v1577 = vadd.f32 0.0, %v1576
  %1578 = vdwg.mxu0
  %1579 = vmatpush.msra.mxu0 0.0
  %1580 = vmatpush.msra.mxu0 0.0
  %1581 = vmatpush.msra.mxu0 0.0
  %1582 = vmatpush.msra.mxu0 0.0
  %1583 = vmatpush.msra.mxu0 0.0
  %1584 = vmatpush.msra.mxu0 0.0
  %1585 = vmatpush.msra.mxu0 0.0
  %1586 = vmatpush.msra.mxu0 0.0
  %1587 = vmatpush.msra.mxu0 0.0
  %1588 = vmatpush.msra.mxu0 0.0
  %1589 = vmatpush.msra.mxu0 0.0
  %1590 = vmatpush.msra.mxu0 0.0
  %1591 = vmatpush.msra.mxu0 0.0
  %1592 = vmatpush.msra.mxu0 0.0
  %1593 = vmatpush.msra.mxu0 0.0
  %1594 = vmatpush.msra.mxu0 %v1477
  %1595 = vmatmul.f32.gmra.mxu0 %v1465
  %v1596 = vpop.f32.mrf.mxu0
  %v1597 = vadd.f32 0.0, %v1596
  %1598 = vdwg.mxu0
  %v1599 = vadd.f32 %v1421, %v1497
  %v1600 = vadd.f32 %v1422, %v1517
  %v1601 = vadd.f32 %v1423, %v1537
  %v1602 = vadd.f32 %v1424, %v1557
  %v1603 = vadd.f32 %v1425, %v1577
  %v1604 = vadd.f32 %v1426, %v1597
  %v1605 = vld [vmem:[%s3] sm:$0xf]
  %v1606 = vld [vmem:[%s4] sm:$0xf]
  %v1608 = vperm.slane %v29, 0
  %v1609 = vperm.slane %v29, 1
  %v1610 = vperm.slane %v29, 2
  %v1611 = vperm.slane %v29, 3
  %v1612 = vperm.slane %v29, 4
  %v1613 = vperm.slane %v29, 5
  %v1620 = vmul.f32 %v1599, %v1608
  %v1621 = vmul.f32 %v1600, %v1609
  %v1622 = vmul.f32 %v1601, %v1610
  %v1623 = vmul.f32 %v1602, %v1611
  %v1624 = vmul.f32 %v1603, %v1612
  %v1625 = vmul.f32 %v1604, %v1613
  %v1626 = vsel %vm72, %v1620, 0.0
  %v1627 = vsel %vm72, %v1621, 0.0
  %v1628 = vadd.f32 %v1626, %v1627
  %v1629 = vsel %vm72, %v1622, 0.0
  %v1630 = vadd.f32 %v1628, %v1629
  %v1631 = vsel %vm72, %v1623, 0.0
  %v1632 = vadd.f32 %v1630, %v1631
  %v1633 = vsel %vm72, %v1624, 0.0
  %v1634 = vadd.f32 %v1632, %v1633
  %vm1635 = vcmask 60416
  %v1636 = vsel %vm1635, %v1625, 0.0
  %v1637 = vadd.f32 %v1634, %v1636
  %1638 = vadd.xlane.f32.xlu0 %v1637
  %v1639 = vpop.xlane.xlu0 %1638
  %v1640 = vmul.f32 %v1639, 0.001953125
  %v1641 = vsub.f32 %v1599, %v1640
  %v1642 = vsub.f32 %v1600, %v1640
  %v1643 = vsub.f32 %v1601, %v1640
  %v1644 = vsub.f32 %v1602, %v1640
  %v1645 = vsub.f32 %v1603, %v1640
  %v1646 = vsub.f32 %v1604, %v1640
  %v1647 = vmul.f32 %v1641, %v1641
  %v1648 = vmul.f32 %v1642, %v1642
  %v1649 = vmul.f32 %v1643, %v1643
  %v1650 = vmul.f32 %v1644, %v1644
  %v1651 = vmul.f32 %v1645, %v1645
  %v1652 = vmul.f32 %v1646, %v1646
  %v1653 = vmul.f32 %v1647, %v1608
  %v1654 = vmul.f32 %v1648, %v1609
  %v1655 = vmul.f32 %v1649, %v1610
  %v1656 = vmul.f32 %v1650, %v1611
  %v1657 = vmul.f32 %v1651, %v1612
  %v1658 = vmul.f32 %v1652, %v1613
  %v1659 = vsel %vm72, %v1653, 0.0
  %v1660 = vsel %vm72, %v1654, 0.0
  %v1661 = vadd.f32 %v1659, %v1660
  %v1662 = vsel %vm72, %v1655, 0.0
  %v1663 = vadd.f32 %v1661, %v1662
  %v1664 = vsel %vm72, %v1656, 0.0
  %v1665 = vadd.f32 %v1663, %v1664
  %v1666 = vsel %vm72, %v1657, 0.0
  %v1667 = vadd.f32 %v1665, %v1666
  %v1668 = vsel %vm1635, %v1658, 0.0
  %v1669 = vadd.f32 %v1667, %v1668
  %1670 = vadd.xlane.f32.xlu0 %v1669
  %v1671 = vpop.xlane.xlu0 %1670
  %v1672 = vmul.f32 %v1671, 0.001953125
  %v1673 = vadd.f32 %v1672, 1e-05
  %v1674 = vrsqrt.pop %v1673
  %v1675 = vmul.f32 %v1674, %v1673
  %v1676 = vmul.f32 %v1675, %v1674
  %v1677 = vmul.f32 0.5, %v1676
  %v1678 = vsub.f32 1.5, %v1677
  %v1679 = vmul.f32 %v1674, %v1678
  %vm1680 = vweird.f32 %v1673
  %vm1681 = vweird.f32 %v1674
  %vm1682 = vmor %vm1680, %vm1681
  %v1683 = vsel %vm1682, %v1674, %v1679
  %v1684 = vmul.f32 %v1641, %v1683
  %v1685 = vmul.f32 %v1642, %v1683
  %v1686 = vmul.f32 %v1643, %v1683
  %v1687 = vmul.f32 %v1644, %v1683
  %v1688 = vmul.f32 %v1645, %v1683
  %v1689 = vmul.f32 %v1646, %v1683
  %1691 = vset.pattern.permute.xlu0 0
  %1692 = vperm.xlu0 %1691, %v1605
  %v1693 = vpop.permute.xlu0 %1692
  %v1695 = vmul.f32 %v1684, %v1693
  %v1696 = vmul.f32 %v1685, %v1693
  %v1697 = vmul.f32 %v1686, %v1693
  %v1698 = vmul.f32 %v1687, %v1693
  %v1699 = vmul.f32 %v1688, %v1693
  %v1700 = vmul.f32 %v1689, %v1693
  %1702 = vset.pattern.permute.xlu0 0
  %1703 = vperm.xlu0 %1702, %v1606
  %v1704 = vpop.permute.xlu0 %1703
  %v1706 = vadd.f32 %v1695, %v1704
  %v1707 = vadd.f32 %v1696, %v1704
  %v1708 = vadd.f32 %v1697, %v1704
  %v1709 = vadd.f32 %v1698, %v1704
  %v1710 = vadd.f32 %v1699, %v1704
  %v1711 = vadd.f32 %v1700, %v1704
  %v1712 = vmax.f32 %v1706, 0.0
  %v1713 = vmax.f32 %v1707, 0.0
  %v1714 = vmax.f32 %v1708, 0.0
  %v1715 = vmax.f32 %v1709, 0.0
  %v1716 = vmax.f32 %v1710, 0.0
  %v1717 = vmax.f32 %v1711, 0.0
  %v1718 = vmul.f32 %v1712, %v1608
  %v1719 = vmul.f32 %v1713, %v1609
  %v1720 = vmul.f32 %v1714, %v1610
  %v1721 = vmul.f32 %v1715, %v1611
  %v1722 = vmul.f32 %v1716, %v1612
  %v1723 = vmul.f32 %v1717, %v1613
  %1724 = vst [vmem:[#allocation2] sm:$0xf] 0.0
  %vm1725 = vcmask 1043520
  %vm1726 = vcmask 64516
  %vm1727 = vmor %vm1726, %vm1725
  %1728 = vst.msk [vmem:[#allocation2 + $0x18] sm:$0xff] %vm1727, 0.0
  %v1735 = vrot.slane %v1719, 4
  %v1736 = vrot.slane %v1721, 4
  %v1737 = vrot.slane %v1723, 4
  %v1738 = vsel %vm72, %v1718, %v1735
  %v1739 = vsel %vm72, %v1720, %v1736
  %v1740 = vsel %vm72, %v1722, %v1737
  %1744 = vst [vmem:[#allocation2 + $0x4] sm:$0xff] %v1738
  %1745 = vst [vmem:[#allocation2 + $0xc] sm:$0xff] %v1739
  %vm1746 = vmor %vm1726, %vm72
  %1747 = vst.msk [vmem:[#allocation2 + $0x14] sm:$0xff] %vm1746, %v1740
  %v1748 = vld [vmem:[#allocation2] sm:$0xff]
  %v1749 = vld [vmem:[#allocation2 + $0x8] sm:$0xff]
  %v1750 = vld [vmem:[#allocation2 + $0x10] sm:$0xff]
  %v1751 = vld [vmem:[%s5] sm:$0xf]
  %s1752 = scalar_lea.vmem %s5, 4
  %v1753 = vld [vmem:[%s1752] sm:$0xf]
  %1757 = vst [vmem:[#allocation1] ss:$2 sm:$0xff] %v1748
  %s1758 = scalar_lea.vmem [#allocation1], 16
  %1759 = vst [vmem:[%s1758] ss:$2 sm:$0xff] %v1749
  %s1760 = scalar_lea.vmem [#allocation1], 32
  %1761 = vst [vmem:[%s1760] ss:$2 sm:$0xff] %v1750
  %v1762 = vld.sshfl [vmem:[#allocation1] sm:$0xff pattern:$0x75316420]
  %v1763 = vld.sshfl [vmem:[#allocation1 + $0x8] sm:$0xff pattern:$0x75316420]
  %v1764 = vld.sshfl [vmem:[#allocation1 + $0x10] sm:$0xff pattern:$0x75316420]
  %v1765 = vld.sshfl [vmem:[#allocation1 + $0x18] sm:$0xff pattern:$0x75316420]
  %v1766 = vld.sshfl [vmem:[#allocation1 + $0x20] sm:$0xff pattern:$0x75316420]
  %v1767 = vld.sshfl [vmem:[#allocation1 + $0x28] sm:$0xff pattern:$0x75316420]
  %1768 = vrot.lane.b32.xlu0 %v1762, 18
  %v1769 = vpop.permute.xlu0 %1768
  %1770 = vrot.lane.b32.xlu0 %v1763, 18
  %v1771 = vpop.permute.xlu0 %1770
  %1772 = vrot.lane.b32.xlu0 %v1764, 18
  %v1773 = vpop.permute.xlu0 %1772
  %1774 = vrot.lane.b32.xlu0 %v1765, 18
  %v1775 = vpop.permute.xlu0 %1774
  %1776 = vrot.lane.b32.xlu0 %v1766, 18
  %v1777 = vpop.permute.xlu0 %1776
  %1778 = vrot.lane.b32.xlu0 %v1767, 18
  %v1779 = vpop.permute.xlu0 %1778
  %v1780 = vsel %vm62, %v1769, %v1771
  %v1781 = vsel %vm62, %v1771, %v1773
  %v1782 = vsel %vm62, %v1773, %v1775
  %v1783 = vsel %vm62, %v1775, %v1777
  %v1784 = vsel %vm62, %v1777, %v1779
  %v1786 = vsel %vm68, %v1753, 0
  %v1788 = vsel %vm72, %v1780, 0
  %v1790 = vsel %vm72, %v1781, 0
  %v1792 = vsel %vm72, %v1782, 0
  %v1794 = vsel %vm72, %v1783, 0
  %v1796 = vsel %vm72, %v1784, 0
  %v1798 = vsel %vm72, %v1779, 0
  %1800 = vmatpush.msra.mxu0 0.0
  %1801 = vmatpush.msra.mxu0 0.0
  %1802 = vmatpush.msra.mxu0 0.0
  %1803 = vmatpush.msra.mxu0 0.0
  %1804 = vmatpush.msra.mxu0 0.0
  %1805 = vmatpush.msra.mxu0 0.0
  %1806 = vmatpush.msra.mxu0 0.0
  %1807 = vmatpush.msra.mxu0 0.0
  %1808 = vmatpush.msra.mxu0 0.0
  %1809 = vmatpush.msra.mxu0 0.0
  %1810 = vmatpush.msra.mxu0 0.0
  %1811 = vmatpush.msra.mxu0 0.0
  %1812 = vmatpush.msra.mxu0 0.0
  %1813 = vmatpush.msra.mxu0 0.0
  %1814 = vmatpush.msra.mxu0 0.0
  %1815 = vmatpush.msra.mxu0 %v1788
  %1816 = vmatmul.f32.gmra.mxu0 %v1786
  %v1817 = vpop.f32.mrf.mxu0
  %v1818 = vadd.f32 0.0, %v1817
  %1819 = vdwg.mxu0
  %1820 = vmatpush.msra.mxu0 0.0
  %1821 = vmatpush.msra.mxu0 0.0
  %1822 = vmatpush.msra.mxu0 0.0
  %1823 = vmatpush.msra.mxu0 0.0
  %1824 = vmatpush.msra.mxu0 0.0
  %1825 = vmatpush.msra.mxu0 0.0
  %1826 = vmatpush.msra.mxu0 0.0
  %1827 = vmatpush.msra.mxu0 0.0
  %1828 = vmatpush.msra.mxu0 0.0
  %1829 = vmatpush.msra.mxu0 0.0
  %1830 = vmatpush.msra.mxu0 0.0
  %1831 = vmatpush.msra.mxu0 0.0
  %1832 = vmatpush.msra.mxu0 0.0
  %1833 = vmatpush.msra.mxu0 0.0
  %1834 = vmatpush.msra.mxu0 0.0
  %1835 = vmatpush.msra.mxu0 %v1790
  %1836 = vmatmul.f32.gmra.mxu0 %v1786
  %v1837 = vpop.f32.mrf.mxu0
  %v1838 = vadd.f32 0.0, %v1837
  %1839 = vdwg.mxu0
  %1840 = vmatpush.msra.mxu0 0.0
  %1841 = vmatpush.msra.mxu0 0.0
  %1842 = vmatpush.msra.mxu0 0.0
  %1843 = vmatpush.msra.mxu0 0.0
  %1844 = vmatpush.msra.mxu0 0.0
  %1845 = vmatpush.msra.mxu0 0.0
  %1846 = vmatpush.msra.mxu0 0.0
  %1847 = vmatpush.msra.mxu0 0.0
  %1848 = vmatpush.msra.mxu0 0.0
  %1849 = vmatpush.msra.mxu0 0.0
  %1850 = vmatpush.msra.mxu0 0.0
  %1851 = vmatpush.msra.mxu0 0.0
  %1852 = vmatpush.msra.mxu0 0.0
  %1853 = vmatpush.msra.mxu0 0.0
  %1854 = vmatpush.msra.mxu0 0.0
  %1855 = vmatpush.msra.mxu0 %v1792
  %1856 = vmatmul.f32.gmra.mxu0 %v1786
  %v1857 = vpop.f32.mrf.mxu0
  %v1858 = vadd.f32 0.0, %v1857
  %1859 = vdwg.mxu0
  %1860 = vmatpush.msra.mxu0 0.0
  %1861 = vmatpush.msra.mxu0 0.0
  %1862 = vmatpush.msra.mxu0 0.0
  %1863 = vmatpush.msra.mxu0 0.0
  %1864 = vmatpush.msra.mxu0 0.0
  %1865 = vmatpush.msra.mxu0 0.0
  %1866 = vmatpush.msra.mxu0 0.0
  %1867 = vmatpush.msra.mxu0 0.0
  %1868 = vmatpush.msra.mxu0 0.0
  %1869 = vmatpush.msra.mxu0 0.0
  %1870 = vmatpush.msra.mxu0 0.0
  %1871 = vmatpush.msra.mxu0 0.0
  %1872 = vmatpush.msra.mxu0 0.0
  %1873 = vmatpush.msra.mxu0 0.0
  %1874 = vmatpush.msra.mxu0 0.0
  %1875 = vmatpush.msra.mxu0 %v1794
  %1876 = vmatmul.f32.gmra.mxu0 %v1786
  %v1877 = vpop.f32.mrf.mxu0
  %v1878 = vadd.f32 0.0, %v1877
  %1879 = vdwg.mxu0
  %1880 = vmatpush.msra.mxu0 0.0
  %1881 = vmatpush.msra.mxu0 0.0
  %1882 = vmatpush.msra.mxu0 0.0
  %1883 = vmatpush.msra.mxu0 0.0
  %1884 = vmatpush.msra.mxu0 0.0
  %1885 = vmatpush.msra.mxu0 0.0
  %1886 = vmatpush.msra.mxu0 0.0
  %1887 = vmatpush.msra.mxu0 0.0
  %1888 = vmatpush.msra.mxu0 0.0
  %1889 = vmatpush.msra.mxu0 0.0
  %1890 = vmatpush.msra.mxu0 0.0
  %1891 = vmatpush.msra.mxu0 0.0
  %1892 = vmatpush.msra.mxu0 0.0
  %1893 = vmatpush.msra.mxu0 0.0
  %1894 = vmatpush.msra.mxu0 0.0
  %1895 = vmatpush.msra.mxu0 %v1796
  %1896 = vmatmul.f32.gmra.mxu0 %v1786
  %v1897 = vpop.f32.mrf.mxu0
  %v1898 = vadd.f32 0.0, %v1897
  %1899 = vdwg.mxu0
  %1900 = vmatpush.msra.mxu0 0.0
  %1901 = vmatpush.msra.mxu0 0.0
  %1902 = vmatpush.msra.mxu0 0.0
  %1903 = vmatpush.msra.mxu0 0.0
  %1904 = vmatpush.msra.mxu0 0.0
  %1905 = vmatpush.msra.mxu0 0.0
  %1906 = vmatpush.msra.mxu0 0.0
  %1907 = vmatpush.msra.mxu0 0.0
  %1908 = vmatpush.msra.mxu0 0.0
  %1909 = vmatpush.msra.mxu0 0.0
  %1910 = vmatpush.msra.mxu0 0.0
  %1911 = vmatpush.msra.mxu0 0.0
  %1912 = vmatpush.msra.mxu0 0.0
  %1913 = vmatpush.msra.mxu0 0.0
  %1914 = vmatpush.msra.mxu0 0.0
  %1915 = vmatpush.msra.mxu0 %v1798
  %1916 = vmatmul.f32.gmra.mxu0 %v1786
  %v1917 = vpop.f32.mrf.mxu0
  %v1918 = vadd.f32 0.0, %v1917
  %1919 = vdwg.mxu0
  %1920 = vst [vmem:[#allocation1] ss:$2 sm:$0xff] %v1748
  %s1921 = scalar_lea.vmem [#allocation1], 16
  %1922 = vst [vmem:[%s1921] ss:$2 sm:$0xff] %v1749
  %s1923 = scalar_lea.vmem [#allocation1], 32
  %1924 = vst [vmem:[%s1923] ss:$2 sm:$0xff] %v1750
  %v1925 = vld.sshfl [vmem:[#allocation1] sm:$0xff pattern:$0x75316420]
  %v1926 = vld.sshfl [vmem:[#allocation1 + $0x8] sm:$0xff pattern:$0x75316420]
  %v1927 = vld.sshfl [vmem:[#allocation1 + $0x10] sm:$0xff pattern:$0x75316420]
  %v1928 = vld.sshfl [vmem:[#allocation1 + $0x18] sm:$0xff pattern:$0x75316420]
  %v1929 = vld.sshfl [vmem:[#allocation1 + $0x20] sm:$0xff pattern:$0x75316420]
  %v1930 = vld.sshfl [vmem:[#allocation1 + $0x28] sm:$0xff pattern:$0x75316420]
  %1931 = vrot.lane.b32.xlu0 %v1925, 19
  %v1932 = vpop.permute.xlu0 %1931
  %1933 = vrot.lane.b32.xlu0 %v1926, 19
  %v1934 = vpop.permute.xlu0 %1933
  %1935 = vrot.lane.b32.xlu0 %v1927, 19
  %v1936 = vpop.permute.xlu0 %1935
  %1937 = vrot.lane.b32.xlu0 %v1928, 19
  %v1938 = vpop.permute.xlu0 %1937
  %1939 = vrot.lane.b32.xlu0 %v1929, 19
  %v1940 = vpop.permute.xlu0 %1939
  %1941 = vrot.lane.b32.xlu0 %v1930, 19
  %v1942 = vpop.permute.xlu0 %1941
  %v1943 = vsel %vm228, %v1932, %v1934
  %v1944 = vsel %vm228, %v1934, %v1936
  %v1945 = vsel %vm228, %v1936, %v1938
  %v1946 = vsel %vm228, %v1938, %v1940
  %v1947 = vsel %vm228, %v1940, %v1942
  %v1949 = vsel %vm68, %v1751, 0
  %v1951 = vsel %vm72, %v1943, 0
  %v1953 = vsel %vm72, %v1944, 0
  %v1955 = vsel %vm72, %v1945, 0
  %v1957 = vsel %vm72, %v1946, 0
  %v1959 = vsel %vm72, %v1947, 0
  %v1961 = vsel %vm72, %v1942, 0
  %1963 = vmatpush.msra.mxu0 0.0
  %1964 = vmatpush.msra.mxu0 0.0
  %1965 = vmatpush.msra.mxu0 0.0
  %1966 = vmatpush.msra.mxu0 0.0
  %1967 = vmatpush.msra.mxu0 0.0
  %1968 = vmatpush.msra.mxu0 0.0
  %1969 = vmatpush.msra.mxu0 0.0
  %1970 = vmatpush.msra.mxu0 0.0
  %1971 = vmatpush.msra.mxu0 0.0
  %1972 = vmatpush.msra.mxu0 0.0
  %1973 = vmatpush.msra.mxu0 0.0
  %1974 = vmatpush.msra.mxu0 0.0
  %1975 = vmatpush.msra.mxu0 0.0
  %1976 = vmatpush.msra.mxu0 0.0
  %1977 = vmatpush.msra.mxu0 0.0
  %1978 = vmatpush.msra.mxu0 %v1951
  %1979 = vmatmul.f32.gmra.mxu0 %v1949
  %v1980 = vpop.f32.mrf.mxu0
  %v1981 = vadd.f32 %v1818, %v1980
  %1982 = vdwg.mxu0
  %1983 = vmatpush.msra.mxu0 0.0
  %1984 = vmatpush.msra.mxu0 0.0
  %1985 = vmatpush.msra.mxu0 0.0
  %1986 = vmatpush.msra.mxu0 0.0
  %1987 = vmatpush.msra.mxu0 0.0
  %1988 = vmatpush.msra.mxu0 0.0
  %1989 = vmatpush.msra.mxu0 0.0
  %1990 = vmatpush.msra.mxu0 0.0
  %1991 = vmatpush.msra.mxu0 0.0
  %1992 = vmatpush.msra.mxu0 0.0
  %1993 = vmatpush.msra.mxu0 0.0
  %1994 = vmatpush.msra.mxu0 0.0
  %1995 = vmatpush.msra.mxu0 0.0
  %1996 = vmatpush.msra.mxu0 0.0
  %1997 = vmatpush.msra.mxu0 0.0
  %1998 = vmatpush.msra.mxu0 %v1953
  %1999 = vmatmul.f32.gmra.mxu0 %v1949
  %v2000 = vpop.f32.mrf.mxu0
  %v2001 = vadd.f32 %v1838, %v2000
  %2002 = vdwg.mxu0
  %2003 = vmatpush.msra.mxu0 0.0
  %2004 = vmatpush.msra.mxu0 0.0
  %2005 = vmatpush.msra.mxu0 0.0
  %2006 = vmatpush.msra.mxu0 0.0
  %2007 = vmatpush.msra.mxu0 0.0
  %2008 = vmatpush.msra.mxu0 0.0
  %2009 = vmatpush.msra.mxu0 0.0
  %2010 = vmatpush.msra.mxu0 0.0
  %2011 = vmatpush.msra.mxu0 0.0
  %2012 = vmatpush.msra.mxu0 0.0
  %2013 = vmatpush.msra.mxu0 0.0
  %2014 = vmatpush.msra.mxu0 0.0
  %2015 = vmatpush.msra.mxu0 0.0
  %2016 = vmatpush.msra.mxu0 0.0
  %2017 = vmatpush.msra.mxu0 0.0
  %2018 = vmatpush.msra.mxu0 %v1955
  %2019 = vmatmul.f32.gmra.mxu0 %v1949
  %v2020 = vpop.f32.mrf.mxu0
  %v2021 = vadd.f32 %v1858, %v2020
  %2022 = vdwg.mxu0
  %2023 = vmatpush.msra.mxu0 0.0
  %2024 = vmatpush.msra.mxu0 0.0
  %2025 = vmatpush.msra.mxu0 0.0
  %2026 = vmatpush.msra.mxu0 0.0
  %2027 = vmatpush.msra.mxu0 0.0
  %2028 = vmatpush.msra.mxu0 0.0
  %2029 = vmatpush.msra.mxu0 0.0
  %2030 = vmatpush.msra.mxu0 0.0
  %2031 = vmatpush.msra.mxu0 0.0
  %2032 = vmatpush.msra.mxu0 0.0
  %2033 = vmatpush.msra.mxu0 0.0
  %2034 = vmatpush.msra.mxu0 0.0
  %2035 = vmatpush.msra.mxu0 0.0
  %2036 = vmatpush.msra.mxu0 0.0
  %2037 = vmatpush.msra.mxu0 0.0
  %2038 = vmatpush.msra.mxu0 %v1957
  %2039 = vmatmul.f32.gmra.mxu0 %v1949
  %v2040 = vpop.f32.mrf.mxu0
  %v2041 = vadd.f32 %v1878, %v2040
  %2042 = vdwg.mxu0
  %2043 = vmatpush.msra.mxu0 0.0
  %2044 = vmatpush.msra.mxu0 0.0
  %2045 = vmatpush.msra.mxu0 0.0
  %2046 = vmatpush.msra.mxu0 0.0
  %2047 = vmatpush.msra.mxu0 0.0
  %2048 = vmatpush.msra.mxu0 0.0
  %2049 = vmatpush.msra.mxu0 0.0
  %2050 = vmatpush.msra.mxu0 0.0
  %2051 = vmatpush.msra.mxu0 0.0
  %2052 = vmatpush.msra.mxu0 0.0
  %2053 = vmatpush.msra.mxu0 0.0
  %2054 = vmatpush.msra.mxu0 0.0
  %2055 = vmatpush.msra.mxu0 0.0
  %2056 = vmatpush.msra.mxu0 0.0
  %2057 = vmatpush.msra.mxu0 0.0
  %2058 = vmatpush.msra.mxu0 %v1959
  %2059 = vmatmul.f32.gmra.mxu0 %v1949
  %v2060 = vpop.f32.mrf.mxu0
  %v2061 = vadd.f32 %v1898, %v2060
  %2062 = vdwg.mxu0
  %2063 = vmatpush.msra.mxu0 0.0
  %2064 = vmatpush.msra.mxu0 0.0
  %2065 = vmatpush.msra.mxu0 0.0
  %2066 = vmatpush.msra.mxu0 0.0
  %2067 = vmatpush.msra.mxu0 0.0
  %2068 = vmatpush.msra.mxu0 0.0
  %2069 = vmatpush.msra.mxu0 0.0
  %2070 = vmatpush.msra.mxu0 0.0
  %2071 = vmatpush.msra.mxu0 0.0
  %2072 = vmatpush.msra.mxu0 0.0
  %2073 = vmatpush.msra.mxu0 0.0
  %2074 = vmatpush.msra.mxu0 0.0
  %2075 = vmatpush.msra.mxu0 0.0
  %2076 = vmatpush.msra.mxu0 0.0
  %2077 = vmatpush.msra.mxu0 0.0
  %2078 = vmatpush.msra.mxu0 %v1961
  %2079 = vmatmul.f32.gmra.mxu0 %v1949
  %v2080 = vpop.f32.mrf.mxu0
  %v2081 = vadd.f32 %v1918, %v2080
  %2082 = vdwg.mxu0
  %v2083 = vld [vmem:[#allocation2] sm:$0xff]
  %v2084 = vld [vmem:[#allocation2 + $0x8] sm:$0xff]
  %v2085 = vld [vmem:[#allocation2 + $0x10] sm:$0xff]
  %s2086 = scalar_lea.vmem %s5, 8
  %v2087 = vld [vmem:[%s2086] sm:$0xf]
  %2091 = vst [vmem:[#allocation1] ss:$2 sm:$0xff] %v2083
  %s2092 = scalar_lea.vmem [#allocation1], 16
  %2093 = vst [vmem:[%s2092] ss:$2 sm:$0xff] %v2084
  %s2094 = scalar_lea.vmem [#allocation1], 32
  %2095 = vst [vmem:[%s2094] ss:$2 sm:$0xff] %v2085
  %v2096 = vld.sshfl [vmem:[#allocation1] sm:$0xff pattern:$0x75316420]
  %v2097 = vld.sshfl [vmem:[#allocation1 + $0x8] sm:$0xff pattern:$0x75316420]
  %v2098 = vld.sshfl [vmem:[#allocation1 + $0x10] sm:$0xff pattern:$0x75316420]
  %v2099 = vld.sshfl [vmem:[#allocation1 + $0x18] sm:$0xff pattern:$0x75316420]
  %v2100 = vld.sshfl [vmem:[#allocation1 + $0x20] sm:$0xff pattern:$0x75316420]
  %v2101 = vld.sshfl [vmem:[#allocation1 + $0x28] sm:$0xff pattern:$0x75316420]
  %2102 = vrot.lane.b32.xlu0 %v2096, 17
  %v2103 = vpop.permute.xlu0 %2102
  %2104 = vrot.lane.b32.xlu0 %v2097, 17
  %v2105 = vpop.permute.xlu0 %2104
  %2106 = vrot.lane.b32.xlu0 %v2098, 17
  %v2107 = vpop.permute.xlu0 %2106
  %2108 = vrot.lane.b32.xlu0 %v2099, 17
  %v2109 = vpop.permute.xlu0 %2108
  %2110 = vrot.lane.b32.xlu0 %v2100, 17
  %v2111 = vpop.permute.xlu0 %2110
  %2112 = vrot.lane.b32.xlu0 %v2101, 17
  %v2113 = vpop.permute.xlu0 %2112
  %v2114 = vsel %vm400, %v2103, %v2105
  %v2115 = vsel %vm400, %v2105, %v2107
  %v2116 = vsel %vm400, %v2107, %v2109
  %v2117 = vsel %vm400, %v2109, %v2111
  %v2118 = vsel %vm400, %v2111, %v2113
  %v2120 = vsel %vm68, %v2087, 0
  %v2122 = vsel %vm72, %v2114, 0
  %v2124 = vsel %vm72, %v2115, 0
  %v2126 = vsel %vm72, %v2116, 0
  %v2128 = vsel %vm72, %v2117, 0
  %v2130 = vsel %vm72, %v2118, 0
  %v2132 = vsel %vm72, %v2113, 0
  %2134 = vmatpush.msra.mxu0 0.0
  %2135 = vmatpush.msra.mxu0 0.0
  %2136 = vmatpush.msra.mxu0 0.0
  %2137 = vmatpush.msra.mxu0 0.0
  %2138 = vmatpush.msra.mxu0 0.0
  %2139 = vmatpush.msra.mxu0 0.0
  %2140 = vmatpush.msra.mxu0 0.0
  %2141 = vmatpush.msra.mxu0 0.0
  %2142 = vmatpush.msra.mxu0 0.0
  %2143 = vmatpush.msra.mxu0 0.0
  %2144 = vmatpush.msra.mxu0 0.0
  %2145 = vmatpush.msra.mxu0 0.0
  %2146 = vmatpush.msra.mxu0 0.0
  %2147 = vmatpush.msra.mxu0 0.0
  %2148 = vmatpush.msra.mxu0 0.0
  %2149 = vmatpush.msra.mxu0 %v2122
  %2150 = vmatmul.f32.gmra.mxu0 %v2120
  %v2151 = vpop.f32.mrf.mxu0
  %v2152 = vadd.f32 0.0, %v2151
  %2153 = vdwg.mxu0
  %2154 = vmatpush.msra.mxu0 0.0
  %2155 = vmatpush.msra.mxu0 0.0
  %2156 = vmatpush.msra.mxu0 0.0
  %2157 = vmatpush.msra.mxu0 0.0
  %2158 = vmatpush.msra.mxu0 0.0
  %2159 = vmatpush.msra.mxu0 0.0
  %2160 = vmatpush.msra.mxu0 0.0
  %2161 = vmatpush.msra.mxu0 0.0
  %2162 = vmatpush.msra.mxu0 0.0
  %2163 = vmatpush.msra.mxu0 0.0
  %2164 = vmatpush.msra.mxu0 0.0
  %2165 = vmatpush.msra.mxu0 0.0
  %2166 = vmatpush.msra.mxu0 0.0
  %2167 = vmatpush.msra.mxu0 0.0
  %2168 = vmatpush.msra.mxu0 0.0
  %2169 = vmatpush.msra.mxu0 %v2124
  %2170 = vmatmul.f32.gmra.mxu0 %v2120
  %v2171 = vpop.f32.mrf.mxu0
  %v2172 = vadd.f32 0.0, %v2171
  %2173 = vdwg.mxu0
  %2174 = vmatpush.msra.mxu0 0.0
  %2175 = vmatpush.msra.mxu0 0.0
  %2176 = vmatpush.msra.mxu0 0.0
  %2177 = vmatpush.msra.mxu0 0.0
  %2178 = vmatpush.msra.mxu0 0.0
  %2179 = vmatpush.msra.mxu0 0.0
  %2180 = vmatpush.msra.mxu0 0.0
  %2181 = vmatpush.msra.mxu0 0.0
  %2182 = vmatpush.msra.mxu0 0.0
  %2183 = vmatpush.msra.mxu0 0.0
  %2184 = vmatpush.msra.mxu0 0.0
  %2185 = vmatpush.msra.mxu0 0.0
  %2186 = vmatpush.msra.mxu0 0.0
  %2187 = vmatpush.msra.mxu0 0.0
  %2188 = vmatpush.msra.mxu0 0.0
  %2189 = vmatpush.msra.mxu0 %v2126
  %2190 = vmatmul.f32.gmra.mxu0 %v2120
  %v2191 = vpop.f32.mrf.mxu0
  %v2192 = vadd.f32 0.0, %v2191
  %2193 = vdwg.mxu0
  %2194 = vmatpush.msra.mxu0 0.0
  %2195 = vmatpush.msra.mxu0 0.0
  %2196 = vmatpush.msra.mxu0 0.0
  %2197 = vmatpush.msra.mxu0 0.0
  %2198 = vmatpush.msra.mxu0 0.0
  %2199 = vmatpush.msra.mxu0 0.0
  %2200 = vmatpush.msra.mxu0 0.0
  %2201 = vmatpush.msra.mxu0 0.0
  %2202 = vmatpush.msra.mxu0 0.0
  %2203 = vmatpush.msra.mxu0 0.0
  %2204 = vmatpush.msra.mxu0 0.0
  %2205 = vmatpush.msra.mxu0 0.0
  %2206 = vmatpush.msra.mxu0 0.0
  %2207 = vmatpush.msra.mxu0 0.0
  %2208 = vmatpush.msra.mxu0 0.0
  %2209 = vmatpush.msra.mxu0 %v2128
  %2210 = vmatmul.f32.gmra.mxu0 %v2120
  %v2211 = vpop.f32.mrf.mxu0
  %v2212 = vadd.f32 0.0, %v2211
  %2213 = vdwg.mxu0
  %2214 = vmatpush.msra.mxu0 0.0
  %2215 = vmatpush.msra.mxu0 0.0
  %2216 = vmatpush.msra.mxu0 0.0
  %2217 = vmatpush.msra.mxu0 0.0
  %2218 = vmatpush.msra.mxu0 0.0
  %2219 = vmatpush.msra.mxu0 0.0
  %2220 = vmatpush.msra.mxu0 0.0
  %2221 = vmatpush.msra.mxu0 0.0
  %2222 = vmatpush.msra.mxu0 0.0
  %2223 = vmatpush.msra.mxu0 0.0
  %2224 = vmatpush.msra.mxu0 0.0
  %2225 = vmatpush.msra.mxu0 0.0
  %2226 = vmatpush.msra.mxu0 0.0
  %2227 = vmatpush.msra.mxu0 0.0
  %2228 = vmatpush.msra.mxu0 0.0
  %2229 = vmatpush.msra.mxu0 %v2130
  %2230 = vmatmul.f32.gmra.mxu0 %v2120
  %v2231 = vpop.f32.mrf.mxu0
  %v2232 = vadd.f32 0.0, %v2231
  %2233 = vdwg.mxu0
  %2234 = vmatpush.msra.mxu0 0.0
  %2235 = vmatpush.msra.mxu0 0.0
  %2236 = vmatpush.msra.mxu0 0.0
  %2237 = vmatpush.msra.mxu0 0.0
  %2238 = vmatpush.msra.mxu0 0.0
  %2239 = vmatpush.msra.mxu0 0.0
  %2240 = vmatpush.msra.mxu0 0.0
  %2241 = vmatpush.msra.mxu0 0.0
  %2242 = vmatpush.msra.mxu0 0.0
  %2243 = vmatpush.msra.mxu0 0.0
  %2244 = vmatpush.msra.mxu0 0.0
  %2245 = vmatpush.msra.mxu0 0.0
  %2246 = vmatpush.msra.mxu0 0.0
  %2247 = vmatpush.msra.mxu0 0.0
  %2248 = vmatpush.msra.mxu0 0.0
  %2249 = vmatpush.msra.mxu0 %v2132
  %2250 = vmatmul.f32.gmra.mxu0 %v2120
  %v2251 = vpop.f32.mrf.mxu0
  %v2252 = vadd.f32 0.0, %v2251
  %2253 = vdwg.mxu0
  %v2254 = vadd.f32 %v1981, %v2152
  %v2255 = vadd.f32 %v2001, %v2172
  %v2256 = vadd.f32 %v2021, %v2192
  %v2257 = vadd.f32 %v2041, %v2212
  %v2258 = vadd.f32 %v2061, %v2232
  %v2259 = vadd.f32 %v2081, %v2252
  %v2260 = vld [vmem:[#allocation2] sm:$0xff]
  %v2261 = vld [vmem:[#allocation2 + $0x8] sm:$0xff]
  %v2262 = vld [vmem:[#allocation2 + $0x10] sm:$0xff]
  %v2263 = vld [vmem:[#allocation2 + $0x18] sm:$0xf]
  %s2264 = scalar_lea.vmem %s5, 12
  %v2265 = vld [vmem:[%s2264] sm:$0xf]
  %2270 = vst [vmem:[#allocation1] ss:$2 sm:$0xff] %v2260
  %s2271 = scalar_lea.vmem [#allocation1], 16
  %2272 = vst [vmem:[%s2271] ss:$2 sm:$0xff] %v2261
  %s2273 = scalar_lea.vmem [#allocation1], 32
  %2274 = vst [vmem:[%s2273] ss:$2 sm:$0xff] %v2262
  %s2275 = scalar_lea.vmem [#allocation1], 48
  %2276 = vst [vmem:[%s2275] ss:$2 sm:$0xff] %v2263
  %v2277 = vld.sshfl [vmem:[#allocation1] sm:$0xff pattern:$0x75316420]
  %v2278 = vld.sshfl [vmem:[#allocation1 + $0x8] sm:$0xff pattern:$0x75316420]
  %v2279 = vld.sshfl [vmem:[#allocation1 + $0x10] sm:$0xff pattern:$0x75316420]
  %v2280 = vld.sshfl [vmem:[#allocation1 + $0x18] sm:$0xff pattern:$0x75316420]
  %v2281 = vld.sshfl [vmem:[#allocation1 + $0x20] sm:$0xff pattern:$0x75316420]
  %v2282 = vld.sshfl [vmem:[#allocation1 + $0x28] sm:$0xff pattern:$0x75316420]
  %v2283 = vld.sshfl [vmem:[#allocation1 + $0x30] sm:$0xff pattern:$0x75316420]
  %2284 = vrot.lane.b32.xlu0 %v2277, 1
  %v2285 = vpop.permute.xlu0 %2284
  %2286 = vrot.lane.b32.xlu0 %v2278, 1
  %v2287 = vpop.permute.xlu0 %2286
  %2288 = vrot.lane.b32.xlu0 %v2279, 1
  %v2289 = vpop.permute.xlu0 %2288
  %2290 = vrot.lane.b32.xlu0 %v2280, 1
  %v2291 = vpop.permute.xlu0 %2290
  %2292 = vrot.lane.b32.xlu0 %v2281, 1
  %v2293 = vpop.permute.xlu0 %2292
  %2294 = vrot.lane.b32.xlu0 %v2282, 1
  %v2295 = vpop.permute.xlu0 %2294
  %2296 = vrot.lane.b32.xlu0 %v2283, 1
  %v2297 = vpop.permute.xlu0 %2296
  %v2298 = vsel %vm585, %v2285, %v2287
  %v2299 = vsel %vm585, %v2287, %v2289
  %v2300 = vsel %vm585, %v2289, %v2291
  %v2301 = vsel %vm585, %v2291, %v2293
  %v2302 = vsel %vm585, %v2293, %v2295
  %v2303 = vsel %vm585, %v2295, %v2297
  %v2305 = vsel %vm68, %v2265, 0
  %v2307 = vsel %vm72, %v2298, 0
  %v2309 = vsel %vm72, %v2299, 0
  %v2311 = vsel %vm72, %v2300, 0
  %v2313 = vsel %vm72, %v2301, 0
  %v2315 = vsel %vm72, %v2302, 0
  %v2317 = vsel %vm72, %v2303, 0
  %2319 = vmatpush.msra.mxu0 0.0
  %2320 = vmatpush.msra.mxu0 0.0
  %2321 = vmatpush.msra.mxu0 0.0
  %2322 = vmatpush.msra.mxu0 0.0
  %2323 = vmatpush.msra.mxu0 0.0
  %2324 = vmatpush.msra.mxu0 0.0
  %2325 = vmatpush.msra.mxu0 0.0
  %2326 = vmatpush.msra.mxu0 0.0
  %2327 = vmatpush.msra.mxu0 0.0
  %2328 = vmatpush.msra.mxu0 0.0
  %2329 = vmatpush.msra.mxu0 0.0
  %2330 = vmatpush.msra.mxu0 0.0
  %2331 = vmatpush.msra.mxu0 0.0
  %2332 = vmatpush.msra.mxu0 0.0
  %2333 = vmatpush.msra.mxu0 0.0
  %2334 = vmatpush.msra.mxu0 %v2307
  %2335 = vmatmul.f32.gmra.mxu0 %v2305
  %v2336 = vpop.f32.mrf.mxu0
  %v2337 = vadd.f32 0.0, %v2336
  %2338 = vdwg.mxu0
  %2339 = vmatpush.msra.mxu0 0.0
  %2340 = vmatpush.msra.mxu0 0.0
  %2341 = vmatpush.msra.mxu0 0.0
  %2342 = vmatpush.msra.mxu0 0.0
  %2343 = vmatpush.msra.mxu0 0.0
  %2344 = vmatpush.msra.mxu0 0.0
  %2345 = vmatpush.msra.mxu0 0.0
  %2346 = vmatpush.msra.mxu0 0.0
  %2347 = vmatpush.msra.mxu0 0.0
  %2348 = vmatpush.msra.mxu0 0.0
  %2349 = vmatpush.msra.mxu0 0.0
  %2350 = vmatpush.msra.mxu0 0.0
  %2351 = vmatpush.msra.mxu0 0.0
  %2352 = vmatpush.msra.mxu0 0.0
  %2353 = vmatpush.msra.mxu0 0.0
  %2354 = vmatpush.msra.mxu0 %v2309
  %2355 = vmatmul.f32.gmra.mxu0 %v2305
  %v2356 = vpop.f32.mrf.mxu0
  %v2357 = vadd.f32 0.0, %v2356
  %2358 = vdwg.mxu0
  %2359 = vmatpush.msra.mxu0 0.0
  %2360 = vmatpush.msra.mxu0 0.0
  %2361 = vmatpush.msra.mxu0 0.0
  %2362 = vmatpush.msra.mxu0 0.0
  %2363 = vmatpush.msra.mxu0 0.0
  %2364 = vmatpush.msra.mxu0 0.0
  %2365 = vmatpush.msra.mxu0 0.0
  %2366 = vmatpush.msra.mxu0 0.0
  %2367 = vmatpush.msra.mxu0 0.0
  %2368 = vmatpush.msra.mxu0 0.0
  %2369 = vmatpush.msra.mxu0 0.0
  %2370 = vmatpush.msra.mxu0 0.0
  %2371 = vmatpush.msra.mxu0 0.0
  %2372 = vmatpush.msra.mxu0 0.0
  %2373 = vmatpush.msra.mxu0 0.0
  %2374 = vmatpush.msra.mxu0 %v2311
  %2375 = vmatmul.f32.gmra.mxu0 %v2305
  %v2376 = vpop.f32.mrf.mxu0
  %v2377 = vadd.f32 0.0, %v2376
  %2378 = vdwg.mxu0
  %2379 = vmatpush.msra.mxu0 0.0
  %2380 = vmatpush.msra.mxu0 0.0
  %2381 = vmatpush.msra.mxu0 0.0
  %2382 = vmatpush.msra.mxu0 0.0
  %2383 = vmatpush.msra.mxu0 0.0
  %2384 = vmatpush.msra.mxu0 0.0
  %2385 = vmatpush.msra.mxu0 0.0
  %2386 = vmatpush.msra.mxu0 0.0
  %2387 = vmatpush.msra.mxu0 0.0
  %2388 = vmatpush.msra.mxu0 0.0
  %2389 = vmatpush.msra.mxu0 0.0
  %2390 = vmatpush.msra.mxu0 0.0
  %2391 = vmatpush.msra.mxu0 0.0
  %2392 = vmatpush.msra.mxu0 0.0
  %2393 = vmatpush.msra.mxu0 0.0
  %2394 = vmatpush.msra.mxu0 %v2313
  %2395 = vmatmul.f32.gmra.mxu0 %v2305
  %v2396 = vpop.f32.mrf.mxu0
  %v2397 = vadd.f32 0.0, %v2396
  %2398 = vdwg.mxu0
  %2399 = vmatpush.msra.mxu0 0.0
  %2400 = vmatpush.msra.mxu0 0.0
  %2401 = vmatpush.msra.mxu0 0.0
  %2402 = vmatpush.msra.mxu0 0.0
  %2403 = vmatpush.msra.mxu0 0.0
  %2404 = vmatpush.msra.mxu0 0.0
  %2405 = vmatpush.msra.mxu0 0.0
  %2406 = vmatpush.msra.mxu0 0.0
  %2407 = vmatpush.msra.mxu0 0.0
  %2408 = vmatpush.msra.mxu0 0.0
  %2409 = vmatpush.msra.mxu0 0.0
  %2410 = vmatpush.msra.mxu0 0.0
  %2411 = vmatpush.msra.mxu0 0.0
  %2412 = vmatpush.msra.mxu0 0.0
  %2413 = vmatpush.msra.mxu0 0.0
  %2414 = vmatpush.msra.mxu0 %v2315
  %2415 = vmatmul.f32.gmra.mxu0 %v2305
  %v2416 = vpop.f32.mrf.mxu0
  %v2417 = vadd.f32 0.0, %v2416
  %2418 = vdwg.mxu0
  %2419 = vmatpush.msra.mxu0 0.0
  %2420 = vmatpush.msra.mxu0 0.0
  %2421 = vmatpush.msra.mxu0 0.0
  %2422 = vmatpush.msra.mxu0 0.0
  %2423 = vmatpush.msra.mxu0 0.0
  %2424 = vmatpush.msra.mxu0 0.0
  %2425 = vmatpush.msra.mxu0 0.0
  %2426 = vmatpush.msra.mxu0 0.0
  %2427 = vmatpush.msra.mxu0 0.0
  %2428 = vmatpush.msra.mxu0 0.0
  %2429 = vmatpush.msra.mxu0 0.0
  %2430 = vmatpush.msra.mxu0 0.0
  %2431 = vmatpush.msra.mxu0 0.0
  %2432 = vmatpush.msra.mxu0 0.0
  %2433 = vmatpush.msra.mxu0 0.0
  %2434 = vmatpush.msra.mxu0 %v2317
  %2435 = vmatmul.f32.gmra.mxu0 %v2305
  %v2436 = vpop.f32.mrf.mxu0
  %v2437 = vadd.f32 0.0, %v2436
  %2438 = vdwg.mxu0
  %v2439 = vadd.f32 %v2254, %v2337
  %v2440 = vadd.f32 %v2255, %v2357
  %v2441 = vadd.f32 %v2256, %v2377
  %v2442 = vadd.f32 %v2257, %v2397
  %v2443 = vadd.f32 %v2258, %v2417
  %v2444 = vadd.f32 %v2259, %v2437
  %v2445 = vld [vmem:[#allocation2 + $0x4] sm:$0xff]
  %v2446 = vld [vmem:[#allocation2 + $0xc] sm:$0xff]
  %v2447 = vld [vmem:[#allocation2 + $0x14] sm:$0xff]
  %s2448 = scalar_lea.vmem %s5, 16
  %v2449 = vld [vmem:[%s2448] sm:$0xf]
  %2453 = vst [vmem:[#allocation1] ss:$2 sm:$0xff] %v2445
  %s2454 = scalar_lea.vmem [#allocation1], 16
  %2455 = vst [vmem:[%s2454] ss:$2 sm:$0xff] %v2446
  %s2456 = scalar_lea.vmem [#allocation1], 32
  %2457 = vst [vmem:[%s2456] ss:$2 sm:$0xff] %v2447
  %v2458 = vld.sshfl [vmem:[#allocation1] sm:$0xff pattern:$0x75316420]
  %v2459 = vld.sshfl [vmem:[#allocation1 + $0x8] sm:$0xff pattern:$0x75316420]
  %v2460 = vld.sshfl [vmem:[#allocation1 + $0x10] sm:$0xff pattern:$0x75316420]
  %v2461 = vld.sshfl [vmem:[#allocation1 + $0x18] sm:$0xff pattern:$0x75316420]
  %v2462 = vld.sshfl [vmem:[#allocation1 + $0x20] sm:$0xff pattern:$0x75316420]
  %v2463 = vld.sshfl [vmem:[#allocation1 + $0x28] sm:$0xff pattern:$0x75316420]
  %v2465 = vsel %vm68, %v2449, 0
  %v2467 = vsel %vm72, %v2458, 0
  %v2469 = vsel %vm72, %v2459, 0
  %v2471 = vsel %vm72, %v2460, 0
  %v2473 = vsel %vm72, %v2461, 0
  %v2475 = vsel %vm72, %v2462, 0
  %v2477 = vsel %vm72, %v2463, 0
  %2479 = vmatpush.msra.mxu0 0.0
  %2480 = vmatpush.msra.mxu0 0.0
  %2481 = vmatpush.msra.mxu0 0.0
  %2482 = vmatpush.msra.mxu0 0.0
  %2483 = vmatpush.msra.mxu0 0.0
  %2484 = vmatpush.msra.mxu0 0.0
  %2485 = vmatpush.msra.mxu0 0.0
  %2486 = vmatpush.msra.mxu0 0.0
  %2487 = vmatpush.msra.mxu0 0.0
  %2488 = vmatpush.msra.mxu0 0.0
  %2489 = vmatpush.msra.mxu0 0.0
  %2490 = vmatpush.msra.mxu0 0.0
  %2491 = vmatpush.msra.mxu0 0.0
  %2492 = vmatpush.msra.mxu0 0.0
  %2493 = vmatpush.msra.mxu0 0.0
  %2494 = vmatpush.msra.mxu0 %v2467
  %2495 = vmatmul.f32.gmra.mxu0 %v2465
  %v2496 = vpop.f32.mrf.mxu0
  %v2497 = vadd.f32 0.0, %v2496
  %2498 = vdwg.mxu0
  %2499 = vmatpush.msra.mxu0 0.0
  %2500 = vmatpush.msra.mxu0 0.0
  %2501 = vmatpush.msra.mxu0 0.0
  %2502 = vmatpush.msra.mxu0 0.0
  %2503 = vmatpush.msra.mxu0 0.0
  %2504 = vmatpush.msra.mxu0 0.0
  %2505 = vmatpush.msra.mxu0 0.0
  %2506 = vmatpush.msra.mxu0 0.0
  %2507 = vmatpush.msra.mxu0 0.0
  %2508 = vmatpush.msra.mxu0 0.0
  %2509 = vmatpush.msra.mxu0 0.0
  %2510 = vmatpush.msra.mxu0 0.0
  %2511 = vmatpush.msra.mxu0 0.0
  %2512 = vmatpush.msra.mxu0 0.0
  %2513 = vmatpush.msra.mxu0 0.0
  %2514 = vmatpush.msra.mxu0 %v2469
  %2515 = vmatmul.f32.gmra.mxu0 %v2465
  %v2516 = vpop.f32.mrf.mxu0
  %v2517 = vadd.f32 0.0, %v2516
  %2518 = vdwg.mxu0
  %2519 = vmatpush.msra.mxu0 0.0
  %2520 = vmatpush.msra.mxu0 0.0
  %2521 = vmatpush.msra.mxu0 0.0
  %2522 = vmatpush.msra.mxu0 0.0
  %2523 = vmatpush.msra.mxu0 0.0
  %2524 = vmatpush.msra.mxu0 0.0
  %2525 = vmatpush.msra.mxu0 0.0
  %2526 = vmatpush.msra.mxu0 0.0
  %2527 = vmatpush.msra.mxu0 0.0
  %2528 = vmatpush.msra.mxu0 0.0
  %2529 = vmatpush.msra.mxu0 0.0
  %2530 = vmatpush.msra.mxu0 0.0
  %2531 = vmatpush.msra.mxu0 0.0
  %2532 = vmatpush.msra.mxu0 0.0
  %2533 = vmatpush.msra.mxu0 0.0
  %2534 = vmatpush.msra.mxu0 %v2471
  %2535 = vmatmul.f32.gmra.mxu0 %v2465
  %v2536 = vpop.f32.mrf.mxu0
  %v2537 = vadd.f32 0.0, %v2536
  %2538 = vdwg.mxu0
  %2539 = vmatpush.msra.mxu0 0.0
  %2540 = vmatpush.msra.mxu0 0.0
  %2541 = vmatpush.msra.mxu0 0.0
  %2542 = vmatpush.msra.mxu0 0.0
  %2543 = vmatpush.msra.mxu0 0.0
  %2544 = vmatpush.msra.mxu0 0.0
  %2545 = vmatpush.msra.mxu0 0.0
  %2546 = vmatpush.msra.mxu0 0.0
  %2547 = vmatpush.msra.mxu0 0.0
  %2548 = vmatpush.msra.mxu0 0.0
  %2549 = vmatpush.msra.mxu0 0.0
  %2550 = vmatpush.msra.mxu0 0.0
  %2551 = vmatpush.msra.mxu0 0.0
  %2552 = vmatpush.msra.mxu0 0.0
  %2553 = vmatpush.msra.mxu0 0.0
  %2554 = vmatpush.msra.mxu0 %v2473
  %2555 = vmatmul.f32.gmra.mxu0 %v2465
  %v2556 = vpop.f32.mrf.mxu0
  %v2557 = vadd.f32 0.0, %v2556
  %2558 = vdwg.mxu0
  %2559 = vmatpush.msra.mxu0 0.0
  %2560 = vmatpush.msra.mxu0 0.0
  %2561 = vmatpush.msra.mxu0 0.0
  %2562 = vmatpush.msra.mxu0 0.0
  %2563 = vmatpush.msra.mxu0 0.0
  %2564 = vmatpush.msra.mxu0 0.0
  %2565 = vmatpush.msra.mxu0 0.0
  %2566 = vmatpush.msra.mxu0 0.0
  %2567 = vmatpush.msra.mxu0 0.0
  %2568 = vmatpush.msra.mxu0 0.0
  %2569 = vmatpush.msra.mxu0 0.0
  %2570 = vmatpush.msra.mxu0 0.0
  %2571 = vmatpush.msra.mxu0 0.0
  %2572 = vmatpush.msra.mxu0 0.0
  %2573 = vmatpush.msra.mxu0 0.0
  %2574 = vmatpush.msra.mxu0 %v2475
  %2575 = vmatmul.f32.gmra.mxu0 %v2465
  %v2576 = vpop.f32.mrf.mxu0
  %v2577 = vadd.f32 0.0, %v2576
  %2578 = vdwg.mxu0
  %2579 = vmatpush.msra.mxu0 0.0
  %2580 = vmatpush.msra.mxu0 0.0
  %2581 = vmatpush.msra.mxu0 0.0
  %2582 = vmatpush.msra.mxu0 0.0
  %2583 = vmatpush.msra.mxu0 0.0
  %2584 = vmatpush.msra.mxu0 0.0
  %2585 = vmatpush.msra.mxu0 0.0
  %2586 = vmatpush.msra.mxu0 0.0
  %2587 = vmatpush.msra.mxu0 0.0
  %2588 = vmatpush.msra.mxu0 0.0
  %2589 = vmatpush.msra.mxu0 0.0
  %2590 = vmatpush.msra.mxu0 0.0
  %2591 = vmatpush.msra.mxu0 0.0
  %2592 = vmatpush.msra.mxu0 0.0
  %2593 = vmatpush.msra.mxu0 0.0
  %2594 = vmatpush.msra.mxu0 %v2477
  %2595 = vmatmul.f32.gmra.mxu0 %v2465
  %v2596 = vpop.f32.mrf.mxu0
  %v2597 = vadd.f32 0.0, %v2596
  %2598 = vdwg.mxu0
  %v2599 = vadd.f32 %v2439, %v2497
  %v2600 = vadd.f32 %v2440, %v2517
  %v2601 = vadd.f32 %v2441, %v2537
  %v2602 = vadd.f32 %v2442, %v2557
  %v2603 = vadd.f32 %v2443, %v2577
  %v2604 = vadd.f32 %v2444, %v2597
  %v2605 = vld [vmem:[#allocation2 + $0x4] sm:$0xff]
  %v2606 = vld [vmem:[#allocation2 + $0xc] sm:$0xff]
  %v2607 = vld [vmem:[#allocation2 + $0x14] sm:$0xff]
  %s2608 = scalar_lea.vmem %s5, 20
  %v2609 = vld [vmem:[%s2608] sm:$0xf]
  %2613 = vst [vmem:[#allocation1] ss:$2 sm:$0xff] %v2605
  %s2614 = scalar_lea.vmem [#allocation1], 16
  %2615 = vst [vmem:[%s2614] ss:$2 sm:$0xff] %v2606
  %s2616 = scalar_lea.vmem [#allocation1], 32
  %2617 = vst [vmem:[%s2616] ss:$2 sm:$0xff] %v2607
  %v2618 = vld.sshfl [vmem:[#allocation1] sm:$0xff pattern:$0x75316420]
  %v2619 = vld.sshfl [vmem:[#allocation1 + $0x8] sm:$0xff pattern:$0x75316420]
  %v2620 = vld.sshfl [vmem:[#allocation1 + $0x10] sm:$0xff pattern:$0x75316420]
  %v2621 = vld.sshfl [vmem:[#allocation1 + $0x18] sm:$0xff pattern:$0x75316420]
  %v2622 = vld.sshfl [vmem:[#allocation1 + $0x20] sm:$0xff pattern:$0x75316420]
  %v2623 = vld.sshfl [vmem:[#allocation1 + $0x28] sm:$0xff pattern:$0x75316420]
  %2624 = vrot.lane.b32.xlu0 %v2618, 127
  %v2625 = vpop.permute.xlu0 %2624
  %2626 = vrot.lane.b32.xlu0 %v2619, 127
  %v2627 = vpop.permute.xlu0 %2626
  %2628 = vrot.lane.b32.xlu0 %v2620, 127
  %v2629 = vpop.permute.xlu0 %2628
  %2630 = vrot.lane.b32.xlu0 %v2621, 127
  %v2631 = vpop.permute.xlu0 %2630
  %2632 = vrot.lane.b32.xlu0 %v2622, 127
  %v2633 = vpop.permute.xlu0 %2632
  %2634 = vrot.lane.b32.xlu0 %v2623, 127
  %v2635 = vpop.permute.xlu0 %2634
  %v2636 = vsel %vm924, %v2625, %v2627
  %v2637 = vsel %vm924, %v2627, %v2629
  %v2638 = vsel %vm924, %v2629, %v2631
  %v2639 = vsel %vm924, %v2631, %v2633
  %v2640 = vsel %vm924, %v2633, %v2635
  %v2642 = vsel %vm68, %v2609, 0
  %v2644 = vsel %vm72, %v2636, 0
  %v2646 = vsel %vm72, %v2637, 0
  %v2648 = vsel %vm72, %v2638, 0
  %v2650 = vsel %vm72, %v2639, 0
  %v2652 = vsel %vm72, %v2640, 0
  %v2654 = vsel %vm72, %v2635, 0
  %2656 = vmatpush.msra.mxu0 0.0
  %2657 = vmatpush.msra.mxu0 0.0
  %2658 = vmatpush.msra.mxu0 0.0
  %2659 = vmatpush.msra.mxu0 0.0
  %2660 = vmatpush.msra.mxu0 0.0
  %2661 = vmatpush.msra.mxu0 0.0
  %2662 = vmatpush.msra.mxu0 0.0
  %2663 = vmatpush.msra.mxu0 0.0
  %2664 = vmatpush.msra.mxu0 0.0
  %2665 = vmatpush.msra.mxu0 0.0
  %2666 = vmatpush.msra.mxu0 0.0
  %2667 = vmatpush.msra.mxu0 0.0
  %2668 = vmatpush.msra.mxu0 0.0
  %2669 = vmatpush.msra.mxu0 0.0
  %2670 = vmatpush.msra.mxu0 0.0
  %2671 = vmatpush.msra.mxu0 %v2644
  %2672 = vmatmul.f32.gmra.mxu0 %v2642
  %v2673 = vpop.f32.mrf.mxu0
  %v2674 = vadd.f32 0.0, %v2673
  %2675 = vdwg.mxu0
  %2676 = vmatpush.msra.mxu0 0.0
  %2677 = vmatpush.msra.mxu0 0.0
  %2678 = vmatpush.msra.mxu0 0.0
  %2679 = vmatpush.msra.mxu0 0.0
  %2680 = vmatpush.msra.mxu0 0.0
  %2681 = vmatpush.msra.mxu0 0.0
  %2682 = vmatpush.msra.mxu0 0.0
  %2683 = vmatpush.msra.mxu0 0.0
  %2684 = vmatpush.msra.mxu0 0.0
  %2685 = vmatpush.msra.mxu0 0.0
  %2686 = vmatpush.msra.mxu0 0.0
  %2687 = vmatpush.msra.mxu0 0.0
  %2688 = vmatpush.msra.mxu0 0.0
  %2689 = vmatpush.msra.mxu0 0.0
  %2690 = vmatpush.msra.mxu0 0.0
  %2691 = vmatpush.msra.mxu0 %v2646
  %2692 = vmatmul.f32.gmra.mxu0 %v2642
  %v2693 = vpop.f32.mrf.mxu0
  %v2694 = vadd.f32 0.0, %v2693
  %2695 = vdwg.mxu0
  %2696 = vmatpush.msra.mxu0 0.0
  %2697 = vmatpush.msra.mxu0 0.0
  %2698 = vmatpush.msra.mxu0 0.0
  %2699 = vmatpush.msra.mxu0 0.0
  %2700 = vmatpush.msra.mxu0 0.0
  %2701 = vmatpush.msra.mxu0 0.0
  %2702 = vmatpush.msra.mxu0 0.0
  %2703 = vmatpush.msra.mxu0 0.0
  %2704 = vmatpush.msra.mxu0 0.0
  %2705 = vmatpush.msra.mxu0 0.0
  %2706 = vmatpush.msra.mxu0 0.0
  %2707 = vmatpush.msra.mxu0 0.0
  %2708 = vmatpush.msra.mxu0 0.0
  %2709 = vmatpush.msra.mxu0 0.0
  %2710 = vmatpush.msra.mxu0 0.0
  %2711 = vmatpush.msra.mxu0 %v2648
  %2712 = vmatmul.f32.gmra.mxu0 %v2642
  %v2713 = vpop.f32.mrf.mxu0
  %v2714 = vadd.f32 0.0, %v2713
  %2715 = vdwg.mxu0
  %2716 = vmatpush.msra.mxu0 0.0
  %2717 = vmatpush.msra.mxu0 0.0
  %2718 = vmatpush.msra.mxu0 0.0
  %2719 = vmatpush.msra.mxu0 0.0
  %2720 = vmatpush.msra.mxu0 0.0
  %2721 = vmatpush.msra.mxu0 0.0
  %2722 = vmatpush.msra.mxu0 0.0
  %2723 = vmatpush.msra.mxu0 0.0
  %2724 = vmatpush.msra.mxu0 0.0
  %2725 = vmatpush.msra.mxu0 0.0
  %2726 = vmatpush.msra.mxu0 0.0
  %2727 = vmatpush.msra.mxu0 0.0
  %2728 = vmatpush.msra.mxu0 0.0
  %2729 = vmatpush.msra.mxu0 0.0
  %2730 = vmatpush.msra.mxu0 0.0
  %2731 = vmatpush.msra.mxu0 %v2650
  %2732 = vmatmul.f32.gmra.mxu0 %v2642
  %v2733 = vpop.f32.mrf.mxu0
  %v2734 = vadd.f32 0.0, %v2733
  %2735 = vdwg.mxu0
  %2736 = vmatpush.msra.mxu0 0.0
  %2737 = vmatpush.msra.mxu0 0.0
  %2738 = vmatpush.msra.mxu0 0.0
  %2739 = vmatpush.msra.mxu0 0.0
  %2740 = vmatpush.msra.mxu0 0.0
  %2741 = vmatpush.msra.mxu0 0.0
  %2742 = vmatpush.msra.mxu0 0.0
  %2743 = vmatpush.msra.mxu0 0.0
  %2744 = vmatpush.msra.mxu0 0.0
  %2745 = vmatpush.msra.mxu0 0.0
  %2746 = vmatpush.msra.mxu0 0.0
  %2747 = vmatpush.msra.mxu0 0.0
  %2748 = vmatpush.msra.mxu0 0.0
  %2749 = vmatpush.msra.mxu0 0.0
  %2750 = vmatpush.msra.mxu0 0.0
  %2751 = vmatpush.msra.mxu0 %v2652
  %2752 = vmatmul.f32.gmra.mxu0 %v2642
  %v2753 = vpop.f32.mrf.mxu0
  %v2754 = vadd.f32 0.0, %v2753
  %2755 = vdwg.mxu0
  %2756 = vmatpush.msra.mxu0 0.0
  %2757 = vmatpush.msra.mxu0 0.0
  %2758 = vmatpush.msra.mxu0 0.0
  %2759 = vmatpush.msra.mxu0 0.0
  %2760 = vmatpush.msra.mxu0 0.0
  %2761 = vmatpush.msra.mxu0 0.0
  %2762 = vmatpush.msra.mxu0 0.0
  %2763 = vmatpush.msra.mxu0 0.0
  %2764 = vmatpush.msra.mxu0 0.0
  %2765 = vmatpush.msra.mxu0 0.0
  %2766 = vmatpush.msra.mxu0 0.0
  %2767 = vmatpush.msra.mxu0 0.0
  %2768 = vmatpush.msra.mxu0 0.0
  %2769 = vmatpush.msra.mxu0 0.0
  %2770 = vmatpush.msra.mxu0 0.0
  %2771 = vmatpush.msra.mxu0 %v2654
  %2772 = vmatmul.f32.gmra.mxu0 %v2642
  %v2773 = vpop.f32.mrf.mxu0
  %v2774 = vadd.f32 0.0, %v2773
  %2775 = vdwg.mxu0
  %v2776 = vadd.f32 %v2599, %v2674
  %v2777 = vadd.f32 %v2600, %v2694
  %v2778 = vadd.f32 %v2601, %v2714
  %v2779 = vadd.f32 %v2602, %v2734
  %v2780 = vadd.f32 %v2603, %v2754
  %v2781 = vadd.f32 %v2604, %v2774
  %v2782 = vld [vmem:[#allocation2 + $0x4] sm:$0xff]
  %v2783 = vld [vmem:[#allocation2 + $0xc] sm:$0xff]
  %v2784 = vld [vmem:[#allocation2 + $0x14] sm:$0xff]
  %s2785 = scalar_lea.vmem %s5, 24
  %v2786 = vld [vmem:[%s2785] sm:$0xf]
  %2790 = vst [vmem:[#allocation1] ss:$2 sm:$0xff] %v2782
  %s2791 = scalar_lea.vmem [#allocation1], 16
  %2792 = vst [vmem:[%s2791] ss:$2 sm:$0xff] %v2783
  %s2793 = scalar_lea.vmem [#allocation1], 32
  %2794 = vst [vmem:[%s2793] ss:$2 sm:$0xff] %v2784
  %v2795 = vld.sshfl [vmem:[#allocation1] sm:$0xff pattern:$0x75316420]
  %v2796 = vld.sshfl [vmem:[#allocation1 + $0x8] sm:$0xff pattern:$0x75316420]
  %v2797 = vld.sshfl [vmem:[#allocation1 + $0x10] sm:$0xff pattern:$0x75316420]
  %v2798 = vld.sshfl [vmem:[#allocation1 + $0x18] sm:$0xff pattern:$0x75316420]
  %v2799 = vld.sshfl [vmem:[#allocation1 + $0x20] sm:$0xff pattern:$0x75316420]
  %v2800 = vld.sshfl [vmem:[#allocation1 + $0x28] sm:$0xff pattern:$0x75316420]
  %2801 = vrot.lane.b32.xlu0 %v2795, 111
  %v2802 = vpop.permute.xlu0 %2801
  %2803 = vrot.lane.b32.xlu0 %v2796, 111
  %v2804 = vpop.permute.xlu0 %2803
  %2805 = vrot.lane.b32.xlu0 %v2797, 111
  %v2806 = vpop.permute.xlu0 %2805
  %2807 = vrot.lane.b32.xlu0 %v2798, 111
  %v2808 = vpop.permute.xlu0 %2807
  %2809 = vrot.lane.b32.xlu0 %v2799, 111
  %v2810 = vpop.permute.xlu0 %2809
  %2811 = vrot.lane.b32.xlu0 %v2800, 111
  %v2812 = vpop.permute.xlu0 %2811
  %v2813 = vsel %vm1102, %v2802, %v2804
  %v2814 = vsel %vm1102, %v2804, %v2806
  %v2815 = vsel %vm1102, %v2806, %v2808
  %v2816 = vsel %vm1102, %v2808, %v2810
  %v2817 = vsel %vm1102, %v2810, %v2812
  %v2819 = vsel %vm68, %v2786, 0
  %v2821 = vsel %vm72, %v2813, 0
  %v2823 = vsel %vm72, %v2814, 0
  %v2825 = vsel %vm72, %v2815, 0
  %v2827 = vsel %vm72, %v2816, 0
  %v2829 = vsel %vm72, %v2817, 0
  %v2831 = vsel %vm72, %v2812, 0
  %2833 = vmatpush.msra.mxu0 0.0
  %2834 = vmatpush.msra.mxu0 0.0
  %2835 = vmatpush.msra.mxu0 0.0
  %2836 = vmatpush.msra.mxu0 0.0
  %2837 = vmatpush.msra.mxu0 0.0
  %2838 = vmatpush.msra.mxu0 0.0
  %2839 = vmatpush.msra.mxu0 0.0
  %2840 = vmatpush.msra.mxu0 0.0
  %2841 = vmatpush.msra.mxu0 0.0
  %2842 = vmatpush.msra.mxu0 0.0
  %2843 = vmatpush.msra.mxu0 0.0
  %2844 = vmatpush.msra.mxu0 0.0
  %2845 = vmatpush.msra.mxu0 0.0
  %2846 = vmatpush.msra.mxu0 0.0
  %2847 = vmatpush.msra.mxu0 0.0
  %2848 = vmatpush.msra.mxu0 %v2821
  %2849 = vmatmul.f32.gmra.mxu0 %v2819
  %v2850 = vpop.f32.mrf.mxu0
  %v2851 = vadd.f32 0.0, %v2850
  %2852 = vdwg.mxu0
  %2853 = vmatpush.msra.mxu0 0.0
  %2854 = vmatpush.msra.mxu0 0.0
  %2855 = vmatpush.msra.mxu0 0.0
  %2856 = vmatpush.msra.mxu0 0.0
  %2857 = vmatpush.msra.mxu0 0.0
  %2858 = vmatpush.msra.mxu0 0.0
  %2859 = vmatpush.msra.mxu0 0.0
  %2860 = vmatpush.msra.mxu0 0.0
  %2861 = vmatpush.msra.mxu0 0.0
  %2862 = vmatpush.msra.mxu0 0.0
  %2863 = vmatpush.msra.mxu0 0.0
  %2864 = vmatpush.msra.mxu0 0.0
  %2865 = vmatpush.msra.mxu0 0.0
  %2866 = vmatpush.msra.mxu0 0.0
  %2867 = vmatpush.msra.mxu0 0.0
  %2868 = vmatpush.msra.mxu0 %v2823
  %2869 = vmatmul.f32.gmra.mxu0 %v2819
  %v2870 = vpop.f32.mrf.mxu0
  %v2871 = vadd.f32 0.0, %v2870
  %2872 = vdwg.mxu0
  %2873 = vmatpush.msra.mxu0 0.0
  %2874 = vmatpush.msra.mxu0 0.0
  %2875 = vmatpush.msra.mxu0 0.0
  %2876 = vmatpush.msra.mxu0 0.0
  %2877 = vmatpush.msra.mxu0 0.0
  %2878 = vmatpush.msra.mxu0 0.0
  %2879 = vmatpush.msra.mxu0 0.0
  %2880 = vmatpush.msra.mxu0 0.0
  %2881 = vmatpush.msra.mxu0 0.0
  %2882 = vmatpush.msra.mxu0 0.0
  %2883 = vmatpush.msra.mxu0 0.0
  %2884 = vmatpush.msra.mxu0 0.0
  %2885 = vmatpush.msra.mxu0 0.0
  %2886 = vmatpush.msra.mxu0 0.0
  %2887 = vmatpush.msra.mxu0 0.0
  %2888 = vmatpush.msra.mxu0 %v2825
  %2889 = vmatmul.f32.gmra.mxu0 %v2819
  %v2890 = vpop.f32.mrf.mxu0
  %v2891 = vadd.f32 0.0, %v2890
  %2892 = vdwg.mxu0
  %2893 = vmatpush.msra.mxu0 0.0
  %2894 = vmatpush.msra.mxu0 0.0
  %2895 = vmatpush.msra.mxu0 0.0
  %2896 = vmatpush.msra.mxu0 0.0
  %2897 = vmatpush.msra.mxu0 0.0
  %2898 = vmatpush.msra.mxu0 0.0
  %2899 = vmatpush.msra.mxu0 0.0
  %2900 = vmatpush.msra.mxu0 0.0
  %2901 = vmatpush.msra.mxu0 0.0
  %2902 = vmatpush.msra.mxu0 0.0
  %2903 = vmatpush.msra.mxu0 0.0
  %2904 = vmatpush.msra.mxu0 0.0
  %2905 = vmatpush.msra.mxu0 0.0
  %2906 = vmatpush.msra.mxu0 0.0
  %2907 = vmatpush.msra.mxu0 0.0
  %2908 = vmatpush.msra.mxu0 %v2827
  %2909 = vmatmul.f32.gmra.mxu0 %v2819
  %v2910 = vpop.f32.mrf.mxu0
  %v2911 = vadd.f32 0.0, %v2910
  %2912 = vdwg.mxu0
  %2913 = vmatpush.msra.mxu0 0.0
  %2914 = vmatpush.msra.mxu0 0.0
  %2915 = vmatpush.msra.mxu0 0.0
  %2916 = vmatpush.msra.mxu0 0.0
  %2917 = vmatpush.msra.mxu0 0.0
  %2918 = vmatpush.msra.mxu0 0.0
  %2919 = vmatpush.msra.mxu0 0.0
  %2920 = vmatpush.msra.mxu0 0.0
  %2921 = vmatpush.msra.mxu0 0.0
  %2922 = vmatpush.msra.mxu0 0.0
  %2923 = vmatpush.msra.mxu0 0.0
  %2924 = vmatpush.msra.mxu0 0.0
  %2925 = vmatpush.msra.mxu0 0.0
  %2926 = vmatpush.msra.mxu0 0.0
  %2927 = vmatpush.msra.mxu0 0.0
  %2928 = vmatpush.msra.mxu0 %v2829
  %2929 = vmatmul.f32.gmra.mxu0 %v2819
  %v2930 = vpop.f32.mrf.mxu0
  %v2931 = vadd.f32 0.0, %v2930
  %2932 = vdwg.mxu0
  %2933 = vmatpush.msra.mxu0 0.0
  %2934 = vmatpush.msra.mxu0 0.0
  %2935 = vmatpush.msra.mxu0 0.0
  %2936 = vmatpush.msra.mxu0 0.0
  %2937 = vmatpush.msra.mxu0 0.0
  %2938 = vmatpush.msra.mxu0 0.0
  %2939 = vmatpush.msra.mxu0 0.0
  %2940 = vmatpush.msra.mxu0 0.0
  %2941 = vmatpush.msra.mxu0 0.0
  %2942 = vmatpush.msra.mxu0 0.0
  %2943 = vmatpush.msra.mxu0 0.0
  %2944 = vmatpush.msra.mxu0 0.0
  %2945 = vmatpush.msra.mxu0 0.0
  %2946 = vmatpush.msra.mxu0 0.0
  %2947 = vmatpush.msra.mxu0 0.0
  %2948 = vmatpush.msra.mxu0 %v2831
  %2949 = vmatmul.f32.gmra.mxu0 %v2819
  %v2950 = vpop.f32.mrf.mxu0
  %v2951 = vadd.f32 0.0, %v2950
  %2952 = vdwg.mxu0
  %v2953 = vadd.f32 %v2776, %v2851
  %v2954 = vadd.f32 %v2777, %v2871
  %v2955 = vadd.f32 %v2778, %v2891
  %v2956 = vadd.f32 %v2779, %v2911
  %v2957 = vadd.f32 %v2780, %v2931
  %v2958 = vadd.f32 %v2781, %v2951
  %v2959 = vld [vmem:[#allocation2 + $0x4] sm:$0xff]
  %v2960 = vld [vmem:[#allocation2 + $0xc] sm:$0xff]
  %v2961 = vld [vmem:[#allocation2 + $0x14] sm:$0xff]
  %s2962 = scalar_lea.vmem %s5, 28
  %v2963 = vld [vmem:[%s2962] sm:$0xf]
  %2967 = vst [vmem:[#allocation1] ss:$2 sm:$0xff] %v2959
  %s2968 = scalar_lea.vmem [#allocation1], 16
  %2969 = vst [vmem:[%s2968] ss:$2 sm:$0xff] %v2960
  %s2970 = scalar_lea.vmem [#allocation1], 32
  %2971 = vst [vmem:[%s2970] ss:$2 sm:$0xff] %v2961
  %v2972 = vld.sshfl [vmem:[#allocation1] sm:$0xff pattern:$0x75316420]
  %v2973 = vld.sshfl [vmem:[#allocation1 + $0x8] sm:$0xff pattern:$0x75316420]
  %v2974 = vld.sshfl [vmem:[#allocation1 + $0x10] sm:$0xff pattern:$0x75316420]
  %v2975 = vld.sshfl [vmem:[#allocation1 + $0x18] sm:$0xff pattern:$0x75316420]
  %v2976 = vld.sshfl [vmem:[#allocation1 + $0x20] sm:$0xff pattern:$0x75316420]
  %v2977 = vld.sshfl [vmem:[#allocation1 + $0x28] sm:$0xff pattern:$0x75316420]
  %2978 = vrot.lane.b32.xlu0 %v2972, 110
  %v2979 = vpop.permute.xlu0 %2978
  %2980 = vrot.lane.b32.xlu0 %v2973, 110
  %v2981 = vpop.permute.xlu0 %2980
  %2982 = vrot.lane.b32.xlu0 %v2974, 110
  %v2983 = vpop.permute.xlu0 %2982
  %2984 = vrot.lane.b32.xlu0 %v2975, 110
  %v2985 = vpop.permute.xlu0 %2984
  %2986 = vrot.lane.b32.xlu0 %v2976, 110
  %v2987 = vpop.permute.xlu0 %2986
  %2988 = vrot.lane.b32.xlu0 %v2977, 110
  %v2989 = vpop.permute.xlu0 %2988
  %v2990 = vsel %vm1280, %v2979, %v2981
  %v2991 = vsel %vm1280, %v2981, %v2983
  %v2992 = vsel %vm1280, %v2983, %v2985
  %v2993 = vsel %vm1280, %v2985, %v2987
  %v2994 = vsel %vm1280, %v2987, %v2989
  %v2996 = vsel %vm68, %v2963, 0
  %v2998 = vsel %vm72, %v2990, 0
  %v3000 = vsel %vm72, %v2991, 0
  %v3002 = vsel %vm72, %v2992, 0
  %v3004 = vsel %vm72, %v2993, 0
  %v3006 = vsel %vm72, %v2994, 0
  %v3008 = vsel %vm72, %v2989, 0
  %3010 = vmatpush.msra.mxu0 0.0
  %3011 = vmatpush.msra.mxu0 0.0
  %3012 = vmatpush.msra.mxu0 0.0
  %3013 = vmatpush.msra.mxu0 0.0
  %3014 = vmatpush.msra.mxu0 0.0
  %3015 = vmatpush.msra.mxu0 0.0
  %3016 = vmatpush.msra.mxu0 0.0
  %3017 = vmatpush.msra.mxu0 0.0
  %3018 = vmatpush.msra.mxu0 0.0
  %3019 = vmatpush.msra.mxu0 0.0
  %3020 = vmatpush.msra.mxu0 0.0
  %3021 = vmatpush.msra.mxu0 0.0
  %3022 = vmatpush.msra.mxu0 0.0
  %3023 = vmatpush.msra.mxu0 0.0
  %3024 = vmatpush.msra.mxu0 0.0
  %3025 = vmatpush.msra.mxu0 %v2998
  %3026 = vmatmul.f32.gmra.mxu0 %v2996
  %v3027 = vpop.f32.mrf.mxu0
  %v3028 = vadd.f32 0.0, %v3027
  %3029 = vdwg.mxu0
  %3030 = vmatpush.msra.mxu0 0.0
  %3031 = vmatpush.msra.mxu0 0.0
  %3032 = vmatpush.msra.mxu0 0.0
  %3033 = vmatpush.msra.mxu0 0.0
  %3034 = vmatpush.msra.mxu0 0.0
  %3035 = vmatpush.msra.mxu0 0.0
  %3036 = vmatpush.msra.mxu0 0.0
  %3037 = vmatpush.msra.mxu0 0.0
  %3038 = vmatpush.msra.mxu0 0.0
  %3039 = vmatpush.msra.mxu0 0.0
  %3040 = vmatpush.msra.mxu0 0.0
  %3041 = vmatpush.msra.mxu0 0.0
  %3042 = vmatpush.msra.mxu0 0.0
  %3043 = vmatpush.msra.mxu0 0.0
  %3044 = vmatpush.msra.mxu0 0.0
  %3045 = vmatpush.msra.mxu0 %v3000
  %3046 = vmatmul.f32.gmra.mxu0 %v2996
  %v3047 = vpop.f32.mrf.mxu0
  %v3048 = vadd.f32 0.0, %v3047
  %3049 = vdwg.mxu0
  %3050 = vmatpush.msra.mxu0 0.0
  %3051 = vmatpush.msra.mxu0 0.0
  %3052 = vmatpush.msra.mxu0 0.0
  %3053 = vmatpush.msra.mxu0 0.0
  %3054 = vmatpush.msra.mxu0 0.0
  %3055 = vmatpush.msra.mxu0 0.0
  %3056 = vmatpush.msra.mxu0 0.0
  %3057 = vmatpush.msra.mxu0 0.0
  %3058 = vmatpush.msra.mxu0 0.0
  %3059 = vmatpush.msra.mxu0 0.0
  %3060 = vmatpush.msra.mxu0 0.0
  %3061 = vmatpush.msra.mxu0 0.0
  %3062 = vmatpush.msra.mxu0 0.0
  %3063 = vmatpush.msra.mxu0 0.0
  %3064 = vmatpush.msra.mxu0 0.0
  %3065 = vmatpush.msra.mxu0 %v3002
  %3066 = vmatmul.f32.gmra.mxu0 %v2996
  %v3067 = vpop.f32.mrf.mxu0
  %v3068 = vadd.f32 0.0, %v3067
  %3069 = vdwg.mxu0
  %3070 = vmatpush.msra.mxu0 0.0
  %3071 = vmatpush.msra.mxu0 0.0
  %3072 = vmatpush.msra.mxu0 0.0
  %3073 = vmatpush.msra.mxu0 0.0
  %3074 = vmatpush.msra.mxu0 0.0
  %3075 = vmatpush.msra.mxu0 0.0
  %3076 = vmatpush.msra.mxu0 0.0
  %3077 = vmatpush.msra.mxu0 0.0
  %3078 = vmatpush.msra.mxu0 0.0
  %3079 = vmatpush.msra.mxu0 0.0
  %3080 = vmatpush.msra.mxu0 0.0
  %3081 = vmatpush.msra.mxu0 0.0
  %3082 = vmatpush.msra.mxu0 0.0
  %3083 = vmatpush.msra.mxu0 0.0
  %3084 = vmatpush.msra.mxu0 0.0
  %3085 = vmatpush.msra.mxu0 %v3004
  %3086 = vmatmul.f32.gmra.mxu0 %v2996
  %v3087 = vpop.f32.mrf.mxu0
  %v3088 = vadd.f32 0.0, %v3087
  %3089 = vdwg.mxu0
  %3090 = vmatpush.msra.mxu0 0.0
  %3091 = vmatpush.msra.mxu0 0.0
  %3092 = vmatpush.msra.mxu0 0.0
  %3093 = vmatpush.msra.mxu0 0.0
  %3094 = vmatpush.msra.mxu0 0.0
  %3095 = vmatpush.msra.mxu0 0.0
  %3096 = vmatpush.msra.mxu0 0.0
  %3097 = vmatpush.msra.mxu0 0.0
  %3098 = vmatpush.msra.mxu0 0.0
  %3099 = vmatpush.msra.mxu0 0.0
  %3100 = vmatpush.msra.mxu0 0.0
  %3101 = vmatpush.msra.mxu0 0.0
  %3102 = vmatpush.msra.mxu0 0.0
  %3103 = vmatpush.msra.mxu0 0.0
  %3104 = vmatpush.msra.mxu0 0.0
  %3105 = vmatpush.msra.mxu0 %v3006
  %3106 = vmatmul.f32.gmra.mxu0 %v2996
  %v3107 = vpop.f32.mrf.mxu0
  %v3108 = vadd.f32 0.0, %v3107
  %3109 = vdwg.mxu0
  %3110 = vmatpush.msra.mxu0 0.0
  %3111 = vmatpush.msra.mxu0 0.0
  %3112 = vmatpush.msra.mxu0 0.0
  %3113 = vmatpush.msra.mxu0 0.0
  %3114 = vmatpush.msra.mxu0 0.0
  %3115 = vmatpush.msra.mxu0 0.0
  %3116 = vmatpush.msra.mxu0 0.0
  %3117 = vmatpush.msra.mxu0 0.0
  %3118 = vmatpush.msra.mxu0 0.0
  %3119 = vmatpush.msra.mxu0 0.0
  %3120 = vmatpush.msra.mxu0 0.0
  %3121 = vmatpush.msra.mxu0 0.0
  %3122 = vmatpush.msra.mxu0 0.0
  %3123 = vmatpush.msra.mxu0 0.0
  %3124 = vmatpush.msra.mxu0 0.0
  %3125 = vmatpush.msra.mxu0 %v3008
  %3126 = vmatmul.f32.gmra.mxu0 %v2996
  %v3127 = vpop.f32.mrf.mxu0
  %v3128 = vadd.f32 0.0, %v3127
  %3129 = vdwg.mxu0
  %v3130 = vadd.f32 %v2953, %v3028
  %v3131 = vadd.f32 %v2954, %v3048
  %v3132 = vadd.f32 %v2955, %v3068
  %v3133 = vadd.f32 %v2956, %v3088
  %v3134 = vadd.f32 %v2957, %v3108
  %v3135 = vadd.f32 %v2958, %v3128
  %v3136 = vld [vmem:[#allocation2 + $0x4] sm:$0xff]
  %v3137 = vld [vmem:[#allocation2 + $0xc] sm:$0xff]
  %v3138 = vld [vmem:[#allocation2 + $0x14] sm:$0xff]
  %s3139 = scalar_lea.vmem %s5, 32
  %v3140 = vld [vmem:[%s3139] sm:$0xf]
  %3144 = vst [vmem:[#allocation1] ss:$2 sm:$0xff] %v3136
  %s3145 = scalar_lea.vmem [#allocation1], 16
  %3146 = vst [vmem:[%s3145] ss:$2 sm:$0xff] %v3137
  %s3147 = scalar_lea.vmem [#allocation1], 32
  %3148 = vst [vmem:[%s3147] ss:$2 sm:$0xff] %v3138
  %v3149 = vld.sshfl [vmem:[#allocation1] sm:$0xff pattern:$0x75316420]
  %v3150 = vld.sshfl [vmem:[#allocation1 + $0x8] sm:$0xff pattern:$0x75316420]
  %v3151 = vld.sshfl [vmem:[#allocation1 + $0x10] sm:$0xff pattern:$0x75316420]
  %v3152 = vld.sshfl [vmem:[#allocation1 + $0x18] sm:$0xff pattern:$0x75316420]
  %v3153 = vld.sshfl [vmem:[#allocation1 + $0x20] sm:$0xff pattern:$0x75316420]
  %v3154 = vld.sshfl [vmem:[#allocation1 + $0x28] sm:$0xff pattern:$0x75316420]
  %3155 = vrot.lane.b32.xlu0 %v3149, 109
  %v3156 = vpop.permute.xlu0 %3155
  %3157 = vrot.lane.b32.xlu0 %v3150, 109
  %v3158 = vpop.permute.xlu0 %3157
  %3159 = vrot.lane.b32.xlu0 %v3151, 109
  %v3160 = vpop.permute.xlu0 %3159
  %3161 = vrot.lane.b32.xlu0 %v3152, 109
  %v3162 = vpop.permute.xlu0 %3161
  %3163 = vrot.lane.b32.xlu0 %v3153, 109
  %v3164 = vpop.permute.xlu0 %3163
  %3165 = vrot.lane.b32.xlu0 %v3154, 109
  %v3166 = vpop.permute.xlu0 %3165
  %v3167 = vsel %vm1458, %v3156, %v3158
  %v3168 = vsel %vm1458, %v3158, %v3160
  %v3169 = vsel %vm1458, %v3160, %v3162
  %v3170 = vsel %vm1458, %v3162, %v3164
  %v3171 = vsel %vm1458, %v3164, %v3166
  %v3173 = vsel %vm68, %v3140, 0
  %v3175 = vsel %vm72, %v3167, 0
  %v3177 = vsel %vm72, %v3168, 0
  %v3179 = vsel %vm72, %v3169, 0
  %v3181 = vsel %vm72, %v3170, 0
  %v3183 = vsel %vm72, %v3171, 0
  %v3185 = vsel %vm72, %v3166, 0
  %3187 = vmatpush.msra.mxu0 0.0
  %3188 = vmatpush.msra.mxu0 0.0
  %3189 = vmatpush.msra.mxu0 0.0
  %3190 = vmatpush.msra.mxu0 0.0
  %3191 = vmatpush.msra.mxu0 0.0
  %3192 = vmatpush.msra.mxu0 0.0
  %3193 = vmatpush.msra.mxu0 0.0
  %3194 = vmatpush.msra.mxu0 0.0
  %3195 = vmatpush.msra.mxu0 0.0
  %3196 = vmatpush.msra.mxu0 0.0
  %3197 = vmatpush.msra.mxu0 0.0
  %3198 = vmatpush.msra.mxu0 0.0
  %3199 = vmatpush.msra.mxu0 0.0
  %3200 = vmatpush.msra.mxu0 0.0
  %3201 = vmatpush.msra.mxu0 0.0
  %3202 = vmatpush.msra.mxu0 %v3175
  %3203 = vmatmul.f32.gmra.mxu0 %v3173
  %v3204 = vpop.f32.mrf.mxu0
  %v3205 = vadd.f32 0.0, %v3204
  %3206 = vdwg.mxu0
  %3207 = vmatpush.msra.mxu0 0.0
  %3208 = vmatpush.msra.mxu0 0.0
  %3209 = vmatpush.msra.mxu0 0.0
  %3210 = vmatpush.msra.mxu0 0.0
  %3211 = vmatpush.msra.mxu0 0.0
  %3212 = vmatpush.msra.mxu0 0.0
  %3213 = vmatpush.msra.mxu0 0.0
  %3214 = vmatpush.msra.mxu0 0.0
  %3215 = vmatpush.msra.mxu0 0.0
  %3216 = vmatpush.msra.mxu0 0.0
  %3217 = vmatpush.msra.mxu0 0.0
  %3218 = vmatpush.msra.mxu0 0.0
  %3219 = vmatpush.msra.mxu0 0.0
  %3220 = vmatpush.msra.mxu0 0.0
  %3221 = vmatpush.msra.mxu0 0.0
  %3222 = vmatpush.msra.mxu0 %v3177
  %3223 = vmatmul.f32.gmra.mxu0 %v3173
  %v3224 = vpop.f32.mrf.mxu0
  %v3225 = vadd.f32 0.0, %v3224
  %3226 = vdwg.mxu0
  %3227 = vmatpush.msra.mxu0 0.0
  %3228 = vmatpush.msra.mxu0 0.0
  %3229 = vmatpush.msra.mxu0 0.0
  %3230 = vmatpush.msra.mxu0 0.0
  %3231 = vmatpush.msra.mxu0 0.0
  %3232 = vmatpush.msra.mxu0 0.0
  %3233 = vmatpush.msra.mxu0 0.0
  %3234 = vmatpush.msra.mxu0 0.0
  %3235 = vmatpush.msra.mxu0 0.0
  %3236 = vmatpush.msra.mxu0 0.0
  %3237 = vmatpush.msra.mxu0 0.0
  %3238 = vmatpush.msra.mxu0 0.0
  %3239 = vmatpush.msra.mxu0 0.0
  %3240 = vmatpush.msra.mxu0 0.0
  %3241 = vmatpush.msra.mxu0 0.0
  %3242 = vmatpush.msra.mxu0 %v3179
  %3243 = vmatmul.f32.gmra.mxu0 %v3173
  %v3244 = vpop.f32.mrf.mxu0
  %v3245 = vadd.f32 0.0, %v3244
  %3246 = vdwg.mxu0
  %3247 = vmatpush.msra.mxu0 0.0
  %3248 = vmatpush.msra.mxu0 0.0
  %3249 = vmatpush.msra.mxu0 0.0
  %3250 = vmatpush.msra.mxu0 0.0
  %3251 = vmatpush.msra.mxu0 0.0
  %3252 = vmatpush.msra.mxu0 0.0
  %3253 = vmatpush.msra.mxu0 0.0
  %3254 = vmatpush.msra.mxu0 0.0
  %3255 = vmatpush.msra.mxu0 0.0
  %3256 = vmatpush.msra.mxu0 0.0
  %3257 = vmatpush.msra.mxu0 0.0
  %3258 = vmatpush.msra.mxu0 0.0
  %3259 = vmatpush.msra.mxu0 0.0
  %3260 = vmatpush.msra.mxu0 0.0
  %3261 = vmatpush.msra.mxu0 0.0
  %3262 = vmatpush.msra.mxu0 %v3181
  %3263 = vmatmul.f32.gmra.mxu0 %v3173
  %v3264 = vpop.f32.mrf.mxu0
  %v3265 = vadd.f32 0.0, %v3264
  %3266 = vdwg.mxu0
  %3267 = vmatpush.msra.mxu0 0.0
  %3268 = vmatpush.msra.mxu0 0.0
  %3269 = vmatpush.msra.mxu0 0.0
  %3270 = vmatpush.msra.mxu0 0.0
  %3271 = vmatpush.msra.mxu0 0.0
  %3272 = vmatpush.msra.mxu0 0.0
  %3273 = vmatpush.msra.mxu0 0.0
  %3274 = vmatpush.msra.mxu0 0.0
  %3275 = vmatpush.msra.mxu0 0.0
  %3276 = vmatpush.msra.mxu0 0.0
  %3277 = vmatpush.msra.mxu0 0.0
  %3278 = vmatpush.msra.mxu0 0.0
  %3279 = vmatpush.msra.mxu0 0.0
  %3280 = vmatpush.msra.mxu0 0.0
  %3281 = vmatpush.msra.mxu0 0.0
  %3282 = vmatpush.msra.mxu0 %v3183
  %3283 = vmatmul.f32.gmra.mxu0 %v3173
  %v3284 = vpop.f32.mrf.mxu0
  %v3285 = vadd.f32 0.0, %v3284
  %3286 = vdwg.mxu0
  %3287 = vmatpush.msra.mxu0 0.0
  %3288 = vmatpush.msra.mxu0 0.0
  %3289 = vmatpush.msra.mxu0 0.0
  %3290 = vmatpush.msra.mxu0 0.0
  %3291 = vmatpush.msra.mxu0 0.0
  %3292 = vmatpush.msra.mxu0 0.0
  %3293 = vmatpush.msra.mxu0 0.0
  %3294 = vmatpush.msra.mxu0 0.0
  %3295 = vmatpush.msra.mxu0 0.0
  %3296 = vmatpush.msra.mxu0 0.0
  %3297 = vmatpush.msra.mxu0 0.0
  %3298 = vmatpush.msra.mxu0 0.0
  %3299 = vmatpush.msra.mxu0 0.0
  %3300 = vmatpush.msra.mxu0 0.0
  %3301 = vmatpush.msra.mxu0 0.0
  %3302 = vmatpush.msra.mxu0 %v3185
  %3303 = vmatmul.f32.gmra.mxu0 %v3173
  %v3304 = vpop.f32.mrf.mxu0
  %v3305 = vadd.f32 0.0, %v3304
  %3306 = vdwg.mxu0
  %v3307 = vadd.f32 %v3130, %v3205
  %v3308 = vadd.f32 %v3131, %v3225
  %v3309 = vadd.f32 %v3132, %v3245
  %v3310 = vadd.f32 %v3133, %v3265
  %v3311 = vadd.f32 %v3134, %v3285
  %v3312 = vadd.f32 %v3135, %v3305
  %v3313 = vld [vmem:[%s0 + $0x4] sm:$0xff]
  %v3314 = vld [vmem:[%s0 + $0xc] sm:$0xff]
  %v3315 = vld [vmem:[%s0 + $0x14] sm:$0xff]
  %v3316 = vld [vmem:[%s6] sm:$0xf]
  %v3317 = vld [vmem:[%s7] sm:$0xf]
  %v3318 = vmul.f32 %v3307, %v1608
  %v3319 = vmul.f32 %v3308, %v1609
  %v3320 = vmul.f32 %v3309, %v1610
  %v3321 = vmul.f32 %v3310, %v1611
  %v3322 = vmul.f32 %v3311, %v1612
  %v3323 = vmul.f32 %v3312, %v1613
  %v3324 = vsel %vm72, %v3318, 0.0
  %v3325 = vsel %vm72, %v3319, 0.0
  %v3326 = vadd.f32 %v3324, %v3325
  %v3327 = vsel %vm72, %v3320, 0.0
  %v3328 = vadd.f32 %v3326, %v3327
  %v3329 = vsel %vm72, %v3321, 0.0
  %v3330 = vadd.f32 %v3328, %v3329
  %v3331 = vsel %vm72, %v3322, 0.0
  %v3332 = vadd.f32 %v3330, %v3331
  %v3333 = vsel %vm1635, %v3323, 0.0
  %v3334 = vadd.f32 %v3332, %v3333
  %3335 = vadd.xlane.f32.xlu0 %v3334
  %v3336 = vpop.xlane.xlu0 %3335
  %v3337 = vmul.f32 %v3336, 0.001953125
  %v3338 = vsub.f32 %v3307, %v3337
  %v3339 = vsub.f32 %v3308, %v3337
  %v3340 = vsub.f32 %v3309, %v3337
  %v3341 = vsub.f32 %v3310, %v3337
  %v3342 = vsub.f32 %v3311, %v3337
  %v3343 = vsub.f32 %v3312, %v3337
  %v3344 = vmul.f32 %v3338, %v3338
  %v3345 = vmul.f32 %v3339, %v3339
  %v3346 = vmul.f32 %v3340, %v3340
  %v3347 = vmul.f32 %v3341, %v3341
  %v3348 = vmul.f32 %v3342, %v3342
  %v3349 = vmul.f32 %v3343, %v3343
  %v3350 = vmul.f32 %v3344, %v1608
  %v3351 = vmul.f32 %v3345, %v1609
  %v3352 = vmul.f32 %v3346, %v1610
  %v3353 = vmul.f32 %v3347, %v1611
  %v3354 = vmul.f32 %v3348, %v1612
  %v3355 = vmul.f32 %v3349, %v1613
  %v3356 = vsel %vm72, %v3350, 0.0
  %v3357 = vsel %vm72, %v3351, 0.0
  %v3358 = vadd.f32 %v3356, %v3357
  %v3359 = vsel %vm72, %v3352, 0.0
  %v3360 = vadd.f32 %v3358, %v3359
  %v3361 = vsel %vm72, %v3353, 0.0
  %v3362 = vadd.f32 %v3360, %v3361
  %v3363 = vsel %vm72, %v3354, 0.0
  %v3364 = vadd.f32 %v3362, %v3363
  %v3365 = vsel %vm1635, %v3355, 0.0
  %v3366 = vadd.f32 %v3364, %v3365
  %3367 = vadd.xlane.f32.xlu0 %v3366
  %v3368 = vpop.xlane.xlu0 %3367
  %v3369 = vmul.f32 %v3368, 0.001953125
  %v3370 = vadd.f32 %v3369, 1e-05
  %v3371 = vrsqrt.pop %v3370
  %v3372 = vmul.f32 %v3371, %v3370
  %v3373 = vmul.f32 %v3372, %v3371
  %v3374 = vmul.f32 0.5, %v3373
  %v3375 = vsub.f32 1.5, %v3374
  %v3376 = vmul.f32 %v3371, %v3375
  %vm3377 = vweird.f32 %v3370
  %vm3378 = vweird.f32 %v3371
  %vm3379 = vmor %vm3377, %vm3378
  %v3380 = vsel %vm3379, %v3371, %v3376
  %v3381 = vmul.f32 %v3338, %v3380
  %v3382 = vmul.f32 %v3339, %v3380
  %v3383 = vmul.f32 %v3340, %v3380
  %v3384 = vmul.f32 %v3341, %v3380
  %v3385 = vmul.f32 %v3342, %v3380
  %v3386 = vmul.f32 %v3343, %v3380
  %3388 = vset.pattern.permute.xlu0 0
  %3389 = vperm.xlu0 %3388, %v3316
  %v3390 = vpop.permute.xlu0 %3389
  %v3392 = vmul.f32 %v3381, %v3390
  %v3393 = vmul.f32 %v3382, %v3390
  %v3394 = vmul.f32 %v3383, %v3390
  %v3395 = vmul.f32 %v3384, %v3390
  %v3396 = vmul.f32 %v3385, %v3390
  %v3397 = vmul.f32 %v3386, %v3390
  %3399 = vset.pattern.permute.xlu0 0
  %3400 = vperm.xlu0 %3399, %v3317
  %v3401 = vpop.permute.xlu0 %3400
  %v3403 = vadd.f32 %v3392, %v3401
  %v3404 = vadd.f32 %v3393, %v3401
  %v3405 = vadd.f32 %v3394, %v3401
  %v3406 = vadd.f32 %v3395, %v3401
  %v3407 = vadd.f32 %v3396, %v3401
  %v3408 = vadd.f32 %v3397, %v3401
  %3412 = vst [vmem:[#allocation1] ss:$2 sm:$0xff] %v3313
  %s3413 = scalar_lea.vmem [#allocation1], 16
  %3414 = vst [vmem:[%s3413] ss:$2 sm:$0xff] %v3314
  %s3415 = scalar_lea.vmem [#allocation1], 32
  %3416 = vst [vmem:[%s3415] ss:$2 sm:$0xff] %v3315
  %v3417 = vld.sshfl [vmem:[#allocation1] sm:$0xff pattern:$0x75316420]
  %v3418 = vld.sshfl [vmem:[#allocation1 + $0x8] sm:$0xff pattern:$0x75316420]
  %v3419 = vld.sshfl [vmem:[#allocation1 + $0x10] sm:$0xff pattern:$0x75316420]
  %v3420 = vld.sshfl [vmem:[#allocation1 + $0x18] sm:$0xff pattern:$0x75316420]
  %v3421 = vld.sshfl [vmem:[#allocation1 + $0x20] sm:$0xff pattern:$0x75316420]
  %v3422 = vld.sshfl [vmem:[#allocation1 + $0x28] sm:$0xff pattern:$0x75316420]
  %v3429 = vadd.f32 %v3403, %v3417
  %v3430 = vadd.f32 %v3404, %v3418
  %v3431 = vadd.f32 %v3405, %v3419
  %v3432 = vadd.f32 %v3406, %v3420
  %v3433 = vadd.f32 %v3407, %v3421
  %v3434 = vadd.f32 %v3408, %v3422
  %v3435 = vmax.f32 %v3429, 0.0
  %v3436 = vmax.f32 %v3430, 0.0
  %v3437 = vmax.f32 %v3431, 0.0
  %v3438 = vmax.f32 %v3432, 0.0
  %v3439 = vmax.f32 %v3433, 0.0
  %v3440 = vmax.f32 %v3434, 0.0
  %v3447 = vrot.slane %v3436, 4
  %v3448 = vrot.slane %v3438, 4
  %v3449 = vrot.slane %v3440, 4
  %v3450 = vsel %vm72, %v3435, %v3447
  %v3451 = vsel %vm72, %v3437, %v3448
  %v3452 = vsel %vm72, %v3439, %v3449
  %3456 = vst [vmem:[%s8] sm:$0xff] %v3450
  %3457 = vst [vmem:[%s8 + $0x8] sm:$0xff] %v3451
  %3458 = vst.msk [vmem:[%s8 + $0x10] sm:$0xff] %vm1746, %v3452
  // Predicated region
  $region34: #{block_forward.1} parent=0 // pred_check
    _
  $region35: #{block_forward.1} parent=0 // pred_check_branch
    %3460 = sbr.rel (0) target = $region37
  $region36: #{block_forward.1} parent=0 // pred_region
    _
  $region37: #{block_forward.1} parent=0 // pred_fallthru
    _
  // Predicated region
  $region38: #{block_forward.1} parent=0 // pred_check
    _
  $region39: #{block_forward.1} parent=0 // pred_check_branch
    %3462 = sbr.rel (0) target = $region41
  $region40: #{block_forward.1} parent=0 // pred_region
    _
  $region41: #{block_forward.1} parent=0 // pred_fallthru
    _

</llo_original>
